<compile_context>
chip_gen: v6e
topology: v6e:2x2x1
jax: 0.10.0
libtpu: 0.0.40
codegen_flags: <defaults>
</compile_context>

<pallas_src>
import functools

import jax
import jax.numpy as jnp
from jax.experimental import pallas as pl
from jax.experimental.pallas import tpu as pltpu


def _ceil_to(n, m):
    return ((n + m - 1) // m) * m


# ------------------------------ fused kernel --------------------------------
def har_kernel(patch_ref, cw_ref, cb_ref,
               wih0_ref, whh0_ref, b0_ref,
               w1_ref, b1_ref, fcw_ref, fcb_ref,
               out_ref, *, L, hw, nb, Hp):
    """Backbone (conv-as-matmul + ReLU + GAP) -> 2-layer LSTM -> fc1, fused.

    patch_ref: (L*hw, K)    bf16  im2col rows, (t, b, y, x)-major
    cw_ref:    (K, Fp)      bf16  conv weight;  cb_ref (1, Fp) f32 bias
    wih0_ref:  (Fp, 4*Hp)   bf16  layer-0 input projection (gate-grouped lanes)
    whh0_ref:  (Hp, 4*Hp)   bf16  layer-0 recurrent projection
    b0_ref:    (1, 4*Hp)    f32
    w1_ref:    (2*Hp, 4*Hp) bf16  layer-1 [input ; recurrent] combined weight
    b1_ref:    (1, 4*Hp)    f32
    fcw_ref:   (Hp, NCp)    bf16; fcb_ref (1, NCp) f32
    out_ref:   (nb, NCp)    f32   lane-dense padded logits
    """
    # ---- backbone: ONE big MXU matmul over all frames, ReLU, global-avg-pool
    z = jnp.dot(patch_ref[...], cw_ref[...], preferred_element_type=jnp.float32)
    z = jnp.maximum(z + cb_ref[...], 0.0)                      # (L*hw, Fp) f32
    feats = jnp.mean(z.reshape(L, hw, z.shape[-1]), axis=1)    # (L, Fp)  f32

    # ---- layer-0 input projection hoisted out of the serial recurrence ----
    gx0 = jnp.dot(feats.astype(jnp.bfloat16), wih0_ref[...],
                  preferred_element_type=jnp.float32) + b0_ref[...]  # (L, 4*Hp)

    def activate(gates, c):
        # 128-lane-group-aligned gate slices (i, f, g, o) -- PyTorch gate order.
        i = jax.nn.sigmoid(gates[:, 0 * Hp:1 * Hp])
        f = jax.nn.sigmoid(gates[:, 1 * Hp:2 * Hp])
        g = jnp.tanh(gates[:, 2 * Hp:3 * Hp])
        o = jax.nn.sigmoid(gates[:, 3 * Hp:4 * Hp])
        c_new = f * c + i * g
        return o * jnp.tanh(c_new), c_new

    h0 = jnp.zeros((1, Hp), jnp.float32)
    c0 = jnp.zeros((1, Hp), jnp.float32)
    h1 = jnp.zeros((1, Hp), jnp.float32)
    c1 = jnp.zeros((1, Hp), jnp.float32)

    last = []
    # L = TS*B is small and static -> full static unroll so MXU/VPU/EUP work of
    # adjacent steps can interleave where the dependency chain allows.
    for s in range(L):
        g0 = gx0[s:s + 1, :] + jnp.dot(h0.astype(jnp.bfloat16), whh0_ref[...],
                                       preferred_element_type=jnp.float32)
        h0, c0 = activate(g0, c0)
        x1 = jnp.concatenate([h0, h1], axis=1).astype(jnp.bfloat16)   # (1, 2*Hp)
        g1 = jnp.dot(x1, w1_ref[...],
                     preferred_element_type=jnp.float32) + b1_ref[...]
        h1, c1 = activate(g1, c1)
        if s >= L - nb:          # == out[:, -1] of the final rnn() call
            last.append(h1)

    last_h = jnp.concatenate(last, axis=0)                      # (nb, Hp)
    out_ref[...] = (jnp.dot(last_h.astype(jnp.bfloat16), fcw_ref[...],
                            preferred_element_type=jnp.float32) + fcb_ref[...])


def run_har(patches, cw, cb, wih0, whh0, b0, w1, b1, fcw, fcb,
            *, L, hw, nb, Hp, NCp):
    vmem = pl.BlockSpec(memory_space=pltpu.MemorySpace.VMEM)
    return pl.pallas_call(
        functools.partial(har_kernel, L=L, hw=hw, nb=nb, Hp=Hp),
        out_shape=jax.ShapeDtypeStruct((nb, NCp), jnp.float32),
        in_specs=[vmem] * 10,
        out_specs=vmem,
        compiler_params=pltpu.CompilerParams(vmem_limit_bytes=32 * 1024 * 1024),
    )(patches, cw, cb, wih0, whh0, b0, w1, b1, fcw, fcb)


# ------------------------------- full forward -------------------------------
def har_forward(x, conv_w, conv_b, lstm_params, fcw, fcb, *, F, H, NC):
    B, TS, Cin, Hh, Ww = x.shape
    KK = 3
    K = Cin * KK * KK
    Fp, Hp, NCp = _ceil_to(F, 128), _ceil_to(H, 128), _ceil_to(NC, 128)

    # im2col glue for the synthetic backbone (conv3x3 pad=1 + ReLU + GAP stands
    # in for the timm model with fc=Identity).
    # TODO(synk): at real backbone feature sizes, build the 3x3 halo inside the
    # kernel from the raw frame to avoid the 9x HBM expansion of `patches`.
    xp = jnp.pad(x, ((0, 0), (0, 0), (0, 0), (1, 1), (1, 1)))
    cols = [xp[:, :, :, kh:kh + Hh, kw:kw + Ww]
            for kh in range(KK) for kw in range(KK)]            # (B,TS,Cin,Hh,Ww)
    patches = jnp.stack(cols, axis=3)                           # (B,TS,Cin,9,Hh,Ww)
    patches = patches.transpose(1, 0, 4, 5, 2, 3)               # (TS,B,Hh,Ww,Cin,9)
    patches = patches.reshape(TS * B * Hh * Ww, K).astype(jnp.bfloat16)

    # ---- pad / pack parameters into lane-dense, 128-aligned layouts ----
    def pack_gates(w, rows_p, to_bf16):
        # (rows, 4*H) -> (rows_p, 4*Hp): each gate gets its own 128-lane group.
        rows = w.shape[0]
        out = jnp.zeros((rows_p, 4 * Hp), jnp.float32)
        for g in range(4):
            out = out.at[:rows, g * Hp:g * Hp + H].set(w[:, g * H:(g + 1) * H])
        return out.astype(jnp.bfloat16) if to_bf16 else out

    wih0, whh0, b0, wih1, whh1, b1 = lstm_params
    cw_p = jnp.zeros((K, Fp), jnp.float32).at[:, :F].set(conv_w).astype(jnp.bfloat16)
    cb_p = jnp.zeros((1, Fp), jnp.float32).at[:, :F].set(conv_b)
    wih0_p = pack_gates(wih0, Fp, True)
    whh0_p = pack_gates(whh0, Hp, True)
    b0_p = pack_gates(b0, 1, False)
    # layer 1: fold input (h0) and recurrent (h1) projections into ONE matmul.
    w1_p = jnp.concatenate([pack_gates(wih1, Hp, True),
                            pack_gates(whh1, Hp, True)], axis=0)   # (2*Hp, 4*Hp)
    b1_p = pack_gates(b1, 1, False)
    fcw_p = jnp.zeros((Hp, NCp), jnp.float32).at[:H, :NC].set(fcw).astype(jnp.bfloat16)
    fcb_p = jnp.zeros((1, NCp), jnp.float32).at[:, :NC].set(fcb)

    # TODO(synk): nn.Dropout is the identity at inference time; no kernel emitted.
    logits_p = run_har(patches, cw_p, cb_p, wih0_p, whh0_p, b0_p,
                       w1_p, b1_p, fcw_p, fcb_p,
                       L=TS * B, hw=Hh * Ww, nb=B, Hp=Hp, NCp=NCp)
    return logits_p[:, :NC]


if __name__ == "__main__":
    # small shapes consistent with the module's forward
    B, TS, Cin, Himg, Wimg = 2, 4, 3, 16, 16
    F = 32     # backbone num_features (LSTM input size)
    H = 32     # rnn_hidden_size
    NC = 6     # num_classes
    KK = 3     # conv kernel of the synthetic backbone; rnn_num_layers=2 hard-wired

    key = jax.random.PRNGKey(0)
    kx, kp = jax.random.split(key)
    x = jax.random.normal(kx, (B, TS, Cin, Himg, Wimg), jnp.float32)

    pk = jax.random.split(kp, 10)

    def init(k, shape, fan_in):
        return jax.random.normal(k, shape, jnp.float32) / jnp.sqrt(float(fan_in))

    conv_w = init(pk[0], (Cin * KK * KK, F), Cin * KK * KK)   # (cin*kh*kw, F)
    conv_b = init(pk[1], (1, F), F)
    # LSTM weights stored transposed (x @ W); gate order i,f,g,o like PyTorch.
    wih0 = init(pk[2], (F, 4 * H), F)
    whh0 = init(pk[3], (H, 4 * H), H)
    b0 = init(pk[4], (1, 4 * H), H)        # b_ih + b_hh folded together
    wih1 = init(pk[5], (H, 4 * H), H)
    whh1 = init(pk[6], (H, 4 * H), H)
    b1 = init(pk[7], (1, 4 * H), H)
    fcw = init(pk[8], (H, NC), H)
    fcb = init(pk[9], (1, NC), H)
    lstm_params = (wih0, whh0, b0, wih1, whh1, b1)

    fwd = jax.jit(functools.partial(har_forward, F=F, H=H, NC=NC))
    out = fwd(x, conv_w, conv_b, lstm_params, fcw, fcb)
    out = jax.block_until_ready(out)
    assert out.shape == (B, NC), out.shape
    print("KERNEL_OK")
</pallas_src>

<mosaic_0001>
module attributes {stable_mosaic.version = 11 : i64} {
  func.func @har_kernel(%arg0: memref<2048x27xbf16, #tpu.memory_space<vmem>>, %arg1: memref<27x128xbf16, #tpu.memory_space<vmem>>, %arg2: memref<1x128xf32, #tpu.memory_space<vmem>>, %arg3: memref<128x512xbf16, #tpu.memory_space<vmem>>, %arg4: memref<128x512xbf16, #tpu.memory_space<vmem>>, %arg5: memref<1x512xf32, #tpu.memory_space<vmem>>, %arg6: memref<256x512xbf16, #tpu.memory_space<vmem>>, %arg7: memref<1x512xf32, #tpu.memory_space<vmem>>, %arg8: memref<128x128xbf16, #tpu.memory_space<vmem>>, %arg9: memref<1x128xf32, #tpu.memory_space<vmem>>, %arg10: memref<2x128xf32, #tpu.memory_space<vmem>>) attributes {dimension_semantics = [], scalar_prefetch = 0 : i64, scratch_operands = 0 : i64, tpu.core_type = #tpu.core_type<tc>} {
    %c0 = arith.constant 0 : index
    %c0_0 = arith.constant 0 : index
    %0 = vector.load %arg0[%c0, %c0_0] : memref<2048x27xbf16, #tpu.memory_space<vmem>>, vector<2048x27xbf16>
    %c0_1 = arith.constant 0 : index
    %c0_2 = arith.constant 0 : index
    %1 = vector.load %arg1[%c0_1, %c0_2] : memref<27x128xbf16, #tpu.memory_space<vmem>>, vector<27x128xbf16>
    %cst = arith.constant dense<0.000000e+00> : vector<2048x128xf32>
    %2 = tpu.matmul %0, %1, %cst {dimension_numbers = #tpu.dot_dimension_numbers<[1], [0], [0], [1], [0, 0, 1, 1], [], []>} : vector<2048x27xbf16>, vector<27x128xbf16>, vector<2048x128xf32> -> vector<2048x128xf32>
    %c0_3 = arith.constant 0 : index
    %c0_4 = arith.constant 0 : index
    %3 = vector.load %arg2[%c0_3, %c0_4] : memref<1x128xf32, #tpu.memory_space<vmem>>, vector<1x128xf32>
    %4 = vector.broadcast %3 : vector<1x128xf32> to vector<2048x128xf32>
    %5 = arith.addf %2, %4 : vector<2048x128xf32>
    %cst_5 = arith.constant 0.000000e+00 : f32
    %6 = vector.broadcast %cst_5 : f32 to vector<2048x128xf32>
    %7 = arith.maximumf %5, %6 : vector<2048x128xf32>
    %8 = vector.shape_cast %7 : vector<2048x128xf32> to vector<8x256x128xf32>
    %cst_6 = arith.constant dense<0.000000e+00> : vector<8x128xf32>
    %9 = vector.multi_reduction <add>, %8, %cst_6 [1] : vector<8x256x128xf32> to vector<8x128xf32>
    %cst_7 = arith.constant 2.560000e+02 : f32
    %10 = vector.broadcast %cst_7 : f32 to vector<8x128xf32>
    %11 = arith.divf %9, %10 : vector<8x128xf32>
    %12 = arith.truncf %11 : vector<8x128xf32> to vector<8x128xbf16>
    %c0_8 = arith.constant 0 : index
    %c0_9 = arith.constant 0 : index
    %13 = vector.load %arg3[%c0_8, %c0_9] : memref<128x512xbf16, #tpu.memory_space<vmem>>, vector<128x512xbf16>
    %cst_10 = arith.constant dense<0.000000e+00> : vector<8x512xf32>
    %14 = tpu.matmul %12, %13, %cst_10 {dimension_numbers = #tpu.dot_dimension_numbers<[1], [0], [0], [1], [0, 0, 1, 1], [], []>} : vector<8x128xbf16>, vector<128x512xbf16>, vector<8x512xf32> -> vector<8x512xf32>
    %c0_11 = arith.constant 0 : index
    %c0_12 = arith.constant 0 : index
    %15 = vector.load %arg5[%c0_11, %c0_12] : memref<1x512xf32, #tpu.memory_space<vmem>>, vector<1x512xf32>
    %16 = vector.broadcast %15 : vector<1x512xf32> to vector<8x512xf32>
    %17 = arith.addf %14, %16 : vector<8x512xf32>
    %cst_13 = arith.constant 0.000000e+00 : f32
    %18 = vector.broadcast %cst_13 : f32 to vector<1x128xf32>
    %cst_14 = arith.constant 0.000000e+00 : f32
    %19 = vector.broadcast %cst_14 : f32 to vector<1x128xf32>
    %cst_15 = arith.constant 0.000000e+00 : f32
    %20 = vector.broadcast %cst_15 : f32 to vector<1x128xf32>
    %cst_16 = arith.constant 0.000000e+00 : f32
    %21 = vector.broadcast %cst_16 : f32 to vector<1x128xf32>
    %22 = vector.extract_strided_slice %17 {offsets = [0, 0], sizes = [1, 512], strides = [1, 1]} : vector<8x512xf32> to vector<1x512xf32>
    %23 = arith.truncf %18 : vector<1x128xf32> to vector<1x128xbf16>
    %c0_17 = arith.constant 0 : index
    %c0_18 = arith.constant 0 : index
    %24 = vector.load %arg4[%c0_17, %c0_18] : memref<128x512xbf16, #tpu.memory_space<vmem>>, vector<128x512xbf16>
    %cst_19 = arith.constant dense<0.000000e+00> : vector<1x512xf32>
    %25 = tpu.matmul %23, %24, %cst_19 {dimension_numbers = #tpu.dot_dimension_numbers<[1], [0], [0], [1], [0, 0, 1, 1], [], []>} : vector<1x128xbf16>, vector<128x512xbf16>, vector<1x512xf32> -> vector<1x512xf32>
    %26 = arith.addf %22, %25 : vector<1x512xf32>
    %27 = vector.extract_strided_slice %26 {offsets = [0, 0], sizes = [1, 128], strides = [1, 1]} : vector<1x512xf32> to vector<1x128xf32>
    %28 = arith.negf %27 : vector<1x128xf32>
    %29 = math.exp %28 : vector<1x128xf32>
    %cst_20 = arith.constant 1.000000e+00 : f32
    %30 = vector.broadcast %cst_20 : f32 to vector<1x128xf32>
    %31 = arith.addf %30, %29 : vector<1x128xf32>
    %32 = arith.divf %30, %31 : vector<1x128xf32>
    %33 = vector.extract_strided_slice %26 {offsets = [0, 128], sizes = [1, 128], strides = [1, 1]} : vector<1x512xf32> to vector<1x128xf32>
    %34 = arith.negf %33 : vector<1x128xf32>
    %35 = math.exp %34 : vector<1x128xf32>
    %cst_21 = arith.constant 1.000000e+00 : f32
    %36 = vector.broadcast %cst_21 : f32 to vector<1x128xf32>
    %37 = arith.addf %36, %35 : vector<1x128xf32>
    %38 = arith.divf %36, %37 : vector<1x128xf32>
    %39 = vector.extract_strided_slice %26 {offsets = [0, 256], sizes = [1, 128], strides = [1, 1]} : vector<1x512xf32> to vector<1x128xf32>
    %40 = math.tanh %39 : vector<1x128xf32>
    %41 = vector.extract_strided_slice %26 {offsets = [0, 384], sizes = [1, 128], strides = [1, 1]} : vector<1x512xf32> to vector<1x128xf32>
    %42 = arith.negf %41 : vector<1x128xf32>
    %43 = math.exp %42 : vector<1x128xf32>
    %cst_22 = arith.constant 1.000000e+00 : f32
    %44 = vector.broadcast %cst_22 : f32 to vector<1x128xf32>
    %45 = arith.addf %44, %43 : vector<1x128xf32>
    %46 = arith.divf %44, %45 : vector<1x128xf32>
    %47 = arith.mulf %38, %19 : vector<1x128xf32>
    %48 = arith.mulf %32, %40 : vector<1x128xf32>
    %49 = arith.addf %47, %48 : vector<1x128xf32>
    %50 = math.tanh %49 : vector<1x128xf32>
    %51 = arith.mulf %46, %50 : vector<1x128xf32>
    %52 = tpu.concatenate %51, %20 in 1 : vector<1x128xf32>, vector<1x128xf32> -> vector<1x256xf32>
    %53 = arith.truncf %52 : vector<1x256xf32> to vector<1x256xbf16>
    %c0_23 = arith.constant 0 : index
    %c0_24 = arith.constant 0 : index
    %54 = vector.load %arg6[%c0_23, %c0_24] : memref<256x512xbf16, #tpu.memory_space<vmem>>, vector<256x512xbf16>
    %cst_25 = arith.constant dense<0.000000e+00> : vector<1x512xf32>
    %55 = tpu.matmul %53, %54, %cst_25 {dimension_numbers = #tpu.dot_dimension_numbers<[1], [0], [0], [1], [0, 0, 1, 1], [], []>} : vector<1x256xbf16>, vector<256x512xbf16>, vector<1x512xf32> -> vector<1x512xf32>
    %c0_26 = arith.constant 0 : index
    %c0_27 = arith.constant 0 : index
    %56 = vector.load %arg7[%c0_26, %c0_27] : memref<1x512xf32, #tpu.memory_space<vmem>>, vector<1x512xf32>
    %57 = arith.addf %55, %56 : vector<1x512xf32>
    %58 = vector.extract_strided_slice %57 {offsets = [0, 0], sizes = [1, 128], strides = [1, 1]} : vector<1x512xf32> to vector<1x128xf32>
    %59 = arith.negf %58 : vector<1x128xf32>
    %60 = math.exp %59 : vector<1x128xf32>
    %cst_28 = arith.constant 1.000000e+00 : f32
    %61 = vector.broadcast %cst_28 : f32 to vector<1x128xf32>
    %62 = arith.addf %61, %60 : vector<1x128xf32>
    %63 = arith.divf %61, %62 : vector<1x128xf32>
    %64 = vector.extract_strided_slice %57 {offsets = [0, 128], sizes = [1, 128], strides = [1, 1]} : vector<1x512xf32> to vector<1x128xf32>
    %65 = arith.negf %64 : vector<1x128xf32>
    %66 = math.exp %65 : vector<1x128xf32>
    %cst_29 = arith.constant 1.000000e+00 : f32
    %67 = vector.broadcast %cst_29 : f32 to vector<1x128xf32>
    %68 = arith.addf %67, %66 : vector<1x128xf32>
    %69 = arith.divf %67, %68 : vector<1x128xf32>
    %70 = vector.extract_strided_slice %57 {offsets = [0, 256], sizes = [1, 128], strides = [1, 1]} : vector<1x512xf32> to vector<1x128xf32>
    %71 = math.tanh %70 : vector<1x128xf32>
    %72 = vector.extract_strided_slice %57 {offsets = [0, 384], sizes = [1, 128], strides = [1, 1]} : vector<1x512xf32> to vector<1x128xf32>
    %73 = arith.negf %72 : vector<1x128xf32>
    %74 = math.exp %73 : vector<1x128xf32>
    %cst_30 = arith.constant 1.000000e+00 : f32
    %75 = vector.broadcast %cst_30 : f32 to vector<1x128xf32>
    %76 = arith.addf %75, %74 : vector<1x128xf32>
    %77 = arith.divf %75, %76 : vector<1x128xf32>
    %78 = arith.mulf %69, %21 : vector<1x128xf32>
    %79 = arith.mulf %63, %71 : vector<1x128xf32>
    %80 = arith.addf %78, %79 : vector<1x128xf32>
    %81 = math.tanh %80 : vector<1x128xf32>
    %82 = arith.mulf %77, %81 : vector<1x128xf32>
    %83 = vector.extract_strided_slice %17 {offsets = [1, 0], sizes = [1, 512], strides = [1, 1]} : vector<8x512xf32> to vector<1x512xf32>
    %84 = arith.truncf %51 : vector<1x128xf32> to vector<1x128xbf16>
    %c0_31 = arith.constant 0 : index
    %c0_32 = arith.constant 0 : index
    %85 = vector.load %arg4[%c0_31, %c0_32] : memref<128x512xbf16, #tpu.memory_space<vmem>>, vector<128x512xbf16>
    %cst_33 = arith.constant dense<0.000000e+00> : vector<1x512xf32>
    %86 = tpu.matmul %84, %85, %cst_33 {dimension_numbers = #tpu.dot_dimension_numbers<[1], [0], [0], [1], [0, 0, 1, 1], [], []>} : vector<1x128xbf16>, vector<128x512xbf16>, vector<1x512xf32> -> vector<1x512xf32>
    %87 = arith.addf %83, %86 : vector<1x512xf32>
    %88 = vector.extract_strided_slice %87 {offsets = [0, 0], sizes = [1, 128], strides = [1, 1]} : vector<1x512xf32> to vector<1x128xf32>
    %89 = arith.negf %88 : vector<1x128xf32>
    %90 = math.exp %89 : vector<1x128xf32>
    %cst_34 = arith.constant 1.000000e+00 : f32
    %91 = vector.broadcast %cst_34 : f32 to vector<1x128xf32>
    %92 = arith.addf %91, %90 : vector<1x128xf32>
    %93 = arith.divf %91, %92 : vector<1x128xf32>
    %94 = vector.extract_strided_slice %87 {offsets = [0, 128], sizes = [1, 128], strides = [1, 1]} : vector<1x512xf32> to vector<1x128xf32>
    %95 = arith.negf %94 : vector<1x128xf32>
    %96 = math.exp %95 : vector<1x128xf32>
    %cst_35 = arith.constant 1.000000e+00 : f32
    %97 = vector.broadcast %cst_35 : f32 to vector<1x128xf32>
    %98 = arith.addf %97, %96 : vector<1x128xf32>
    %99 = arith.divf %97, %98 : vector<1x128xf32>
    %100 = vector.extract_strided_slice %87 {offsets = [0, 256], sizes = [1, 128], strides = [1, 1]} : vector<1x512xf32> to vector<1x128xf32>
    %101 = math.tanh %100 : vector<1x128xf32>
    %102 = vector.extract_strided_slice %87 {offsets = [0, 384], sizes = [1, 128], strides = [1, 1]} : vector<1x512xf32> to vector<1x128xf32>
    %103 = arith.negf %102 : vector<1x128xf32>
    %104 = math.exp %103 : vector<1x128xf32>
    %cst_36 = arith.constant 1.000000e+00 : f32
    %105 = vector.broadcast %cst_36 : f32 to vector<1x128xf32>
    %106 = arith.addf %105, %104 : vector<1x128xf32>
    %107 = arith.divf %105, %106 : vector<1x128xf32>
    %108 = arith.mulf %99, %49 : vector<1x128xf32>
    %109 = arith.mulf %93, %101 : vector<1x128xf32>
    %110 = arith.addf %108, %109 : vector<1x128xf32>
    %111 = math.tanh %110 : vector<1x128xf32>
    %112 = arith.mulf %107, %111 : vector<1x128xf32>
    %113 = tpu.concatenate %112, %82 in 1 : vector<1x128xf32>, vector<1x128xf32> -> vector<1x256xf32>
    %114 = arith.truncf %113 : vector<1x256xf32> to vector<1x256xbf16>
    %c0_37 = arith.constant 0 : index
    %c0_38 = arith.constant 0 : index
    %115 = vector.load %arg6[%c0_37, %c0_38] : memref<256x512xbf16, #tpu.memory_space<vmem>>, vector<256x512xbf16>
    %cst_39 = arith.constant dense<0.000000e+00> : vector<1x512xf32>
    %116 = tpu.matmul %114, %115, %cst_39 {dimension_numbers = #tpu.dot_dimension_numbers<[1], [0], [0], [1], [0, 0, 1, 1], [], []>} : vector<1x256xbf16>, vector<256x512xbf16>, vector<1x512xf32> -> vector<1x512xf32>
    %c0_40 = arith.constant 0 : index
    %c0_41 = arith.constant 0 : index
    %117 = vector.load %arg7[%c0_40, %c0_41] : memref<1x512xf32, #tpu.memory_space<vmem>>, vector<1x512xf32>
    %118 = arith.addf %116, %117 : vector<1x512xf32>
    %119 = vector.extract_strided_slice %118 {offsets = [0, 0], sizes = [1, 128], strides = [1, 1]} : vector<1x512xf32> to vector<1x128xf32>
    %120 = arith.negf %119 : vector<1x128xf32>
    %121 = math.exp %120 : vector<1x128xf32>
    %cst_42 = arith.constant 1.000000e+00 : f32
    %122 = vector.broadcast %cst_42 : f32 to vector<1x128xf32>
    %123 = arith.addf %122, %121 : vector<1x128xf32>
    %124 = arith.divf %122, %123 : vector<1x128xf32>
    %125 = vector.extract_strided_slice %118 {offsets = [0, 128], sizes = [1, 128], strides = [1, 1]} : vector<1x512xf32> to vector<1x128xf32>
    %126 = arith.negf %125 : vector<1x128xf32>
    %127 = math.exp %126 : vector<1x128xf32>
    %cst_43 = arith.constant 1.000000e+00 : f32
    %128 = vector.broadcast %cst_43 : f32 to vector<1x128xf32>
    %129 = arith.addf %128, %127 : vector<1x128xf32>
    %130 = arith.divf %128, %129 : vector<1x128xf32>
    %131 = vector.extract_strided_slice %118 {offsets = [0, 256], sizes = [1, 128], strides = [1, 1]} : vector<1x512xf32> to vector<1x128xf32>
    %132 = math.tanh %131 : vector<1x128xf32>
    %133 = vector.extract_strided_slice %118 {offsets = [0, 384], sizes = [1, 128], strides = [1, 1]} : vector<1x512xf32> to vector<1x128xf32>
    %134 = arith.negf %133 : vector<1x128xf32>
    %135 = math.exp %134 : vector<1x128xf32>
    %cst_44 = arith.constant 1.000000e+00 : f32
    %136 = vector.broadcast %cst_44 : f32 to vector<1x128xf32>
    %137 = arith.addf %136, %135 : vector<1x128xf32>
    %138 = arith.divf %136, %137 : vector<1x128xf32>
    %139 = arith.mulf %130, %80 : vector<1x128xf32>
    %140 = arith.mulf %124, %132 : vector<1x128xf32>
    %141 = arith.addf %139, %140 : vector<1x128xf32>
    %142 = math.tanh %141 : vector<1x128xf32>
    %143 = arith.mulf %138, %142 : vector<1x128xf32>
    %144 = vector.extract_strided_slice %17 {offsets = [2, 0], sizes = [1, 512], strides = [1, 1]} : vector<8x512xf32> to vector<1x512xf32>
    %145 = arith.truncf %112 : vector<1x128xf32> to vector<1x128xbf16>
    %c0_45 = arith.constant 0 : index
    %c0_46 = arith.constant 0 : index
    %146 = vector.load %arg4[%c0_45, %c0_46] : memref<128x512xbf16, #tpu.memory_space<vmem>>, vector<128x512xbf16>
    %cst_47 = arith.constant dense<0.000000e+00> : vector<1x512xf32>
    %147 = tpu.matmul %145, %146, %cst_47 {dimension_numbers = #tpu.dot_dimension_numbers<[1], [0], [0], [1], [0, 0, 1, 1], [], []>} : vector<1x128xbf16>, vector<128x512xbf16>, vector<1x512xf32> -> vector<1x512xf32>
    %148 = arith.addf %144, %147 : vector<1x512xf32>
    %149 = vector.extract_strided_slice %148 {offsets = [0, 0], sizes = [1, 128], strides = [1, 1]} : vector<1x512xf32> to vector<1x128xf32>
    %150 = arith.negf %149 : vector<1x128xf32>
    %151 = math.exp %150 : vector<1x128xf32>
    %cst_48 = arith.constant 1.000000e+00 : f32
    %152 = vector.broadcast %cst_48 : f32 to vector<1x128xf32>
    %153 = arith.addf %152, %151 : vector<1x128xf32>
    %154 = arith.divf %152, %153 : vector<1x128xf32>
    %155 = vector.extract_strided_slice %148 {offsets = [0, 128], sizes = [1, 128], strides = [1, 1]} : vector<1x512xf32> to vector<1x128xf32>
    %156 = arith.negf %155 : vector<1x128xf32>
    %157 = math.exp %156 : vector<1x128xf32>
    %cst_49 = arith.constant 1.000000e+00 : f32
    %158 = vector.broadcast %cst_49 : f32 to vector<1x128xf32>
    %159 = arith.addf %158, %157 : vector<1x128xf32>
    %160 = arith.divf %158, %159 : vector<1x128xf32>
    %161 = vector.extract_strided_slice %148 {offsets = [0, 256], sizes = [1, 128], strides = [1, 1]} : vector<1x512xf32> to vector<1x128xf32>
    %162 = math.tanh %161 : vector<1x128xf32>
    %163 = vector.extract_strided_slice %148 {offsets = [0, 384], sizes = [1, 128], strides = [1, 1]} : vector<1x512xf32> to vector<1x128xf32>
    %164 = arith.negf %163 : vector<1x128xf32>
    %165 = math.exp %164 : vector<1x128xf32>
    %cst_50 = arith.constant 1.000000e+00 : f32
    %166 = vector.broadcast %cst_50 : f32 to vector<1x128xf32>
    %167 = arith.addf %166, %165 : vector<1x128xf32>
    %168 = arith.divf %166, %167 : vector<1x128xf32>
    %169 = arith.mulf %160, %110 : vector<1x128xf32>
    %170 = arith.mulf %154, %162 : vector<1x128xf32>
    %171 = arith.addf %169, %170 : vector<1x128xf32>
    %172 = math.tanh %171 : vector<1x128xf32>
    %173 = arith.mulf %168, %172 : vector<1x128xf32>
    %174 = tpu.concatenate %173, %143 in 1 : vector<1x128xf32>, vector<1x128xf32> -> vector<1x256xf32>
    %175 = arith.truncf %174 : vector<1x256xf32> to vector<1x256xbf16>
    %c0_51 = arith.constant 0 : index
    %c0_52 = arith.constant 0 : index
    %176 = vector.load %arg6[%c0_51, %c0_52] : memref<256x512xbf16, #tpu.memory_space<vmem>>, vector<256x512xbf16>
    %cst_53 = arith.constant dense<0.000000e+00> : vector<1x512xf32>
    %177 = tpu.matmul %175, %176, %cst_53 {dimension_numbers = #tpu.dot_dimension_numbers<[1], [0], [0], [1], [0, 0, 1, 1], [], []>} : vector<1x256xbf16>, vector<256x512xbf16>, vector<1x512xf32> -> vector<1x512xf32>
    %c0_54 = arith.constant 0 : index
    %c0_55 = arith.constant 0 : index
    %178 = vector.load %arg7[%c0_54, %c0_55] : memref<1x512xf32, #tpu.memory_space<vmem>>, vector<1x512xf32>
    %179 = arith.addf %177, %178 : vector<1x512xf32>
    %180 = vector.extract_strided_slice %179 {offsets = [0, 0], sizes = [1, 128], strides = [1, 1]} : vector<1x512xf32> to vector<1x128xf32>
    %181 = arith.negf %180 : vector<1x128xf32>
    %182 = math.exp %181 : vector<1x128xf32>
    %cst_56 = arith.constant 1.000000e+00 : f32
    %183 = vector.broadcast %cst_56 : f32 to vector<1x128xf32>
    %184 = arith.addf %183, %182 : vector<1x128xf32>
    %185 = arith.divf %183, %184 : vector<1x128xf32>
    %186 = vector.extract_strided_slice %179 {offsets = [0, 128], sizes = [1, 128], strides = [1, 1]} : vector<1x512xf32> to vector<1x128xf32>
    %187 = arith.negf %186 : vector<1x128xf32>
    %188 = math.exp %187 : vector<1x128xf32>
    %cst_57 = arith.constant 1.000000e+00 : f32
    %189 = vector.broadcast %cst_57 : f32 to vector<1x128xf32>
    %190 = arith.addf %189, %188 : vector<1x128xf32>
    %191 = arith.divf %189, %190 : vector<1x128xf32>
    %192 = vector.extract_strided_slice %179 {offsets = [0, 256], sizes = [1, 128], strides = [1, 1]} : vector<1x512xf32> to vector<1x128xf32>
    %193 = math.tanh %192 : vector<1x128xf32>
    %194 = vector.extract_strided_slice %179 {offsets = [0, 384], sizes = [1, 128], strides = [1, 1]} : vector<1x512xf32> to vector<1x128xf32>
    %195 = arith.negf %194 : vector<1x128xf32>
    %196 = math.exp %195 : vector<1x128xf32>
    %cst_58 = arith.constant 1.000000e+00 : f32
    %197 = vector.broadcast %cst_58 : f32 to vector<1x128xf32>
    %198 = arith.addf %197, %196 : vector<1x128xf32>
    %199 = arith.divf %197, %198 : vector<1x128xf32>
    %200 = arith.mulf %191, %141 : vector<1x128xf32>
    %201 = arith.mulf %185, %193 : vector<1x128xf32>
    %202 = arith.addf %200, %201 : vector<1x128xf32>
    %203 = math.tanh %202 : vector<1x128xf32>
    %204 = arith.mulf %199, %203 : vector<1x128xf32>
    %205 = vector.extract_strided_slice %17 {offsets = [3, 0], sizes = [1, 512], strides = [1, 1]} : vector<8x512xf32> to vector<1x512xf32>
    %206 = arith.truncf %173 : vector<1x128xf32> to vector<1x128xbf16>
    %c0_59 = arith.constant 0 : index
    %c0_60 = arith.constant 0 : index
    %207 = vector.load %arg4[%c0_59, %c0_60] : memref<128x512xbf16, #tpu.memory_space<vmem>>, vector<128x512xbf16>
    %cst_61 = arith.constant dense<0.000000e+00> : vector<1x512xf32>
    %208 = tpu.matmul %206, %207, %cst_61 {dimension_numbers = #tpu.dot_dimension_numbers<[1], [0], [0], [1], [0, 0, 1, 1], [], []>} : vector<1x128xbf16>, vector<128x512xbf16>, vector<1x512xf32> -> vector<1x512xf32>
    %209 = arith.addf %205, %208 : vector<1x512xf32>
    %210 = vector.extract_strided_slice %209 {offsets = [0, 0], sizes = [1, 128], strides = [1, 1]} : vector<1x512xf32> to vector<1x128xf32>
    %211 = arith.negf %210 : vector<1x128xf32>
    %212 = math.exp %211 : vector<1x128xf32>
    %cst_62 = arith.constant 1.000000e+00 : f32
    %213 = vector.broadcast %cst_62 : f32 to vector<1x128xf32>
    %214 = arith.addf %213, %212 : vector<1x128xf32>
    %215 = arith.divf %213, %214 : vector<1x128xf32>
    %216 = vector.extract_strided_slice %209 {offsets = [0, 128], sizes = [1, 128], strides = [1, 1]} : vector<1x512xf32> to vector<1x128xf32>
    %217 = arith.negf %216 : vector<1x128xf32>
    %218 = math.exp %217 : vector<1x128xf32>
    %cst_63 = arith.constant 1.000000e+00 : f32
    %219 = vector.broadcast %cst_63 : f32 to vector<1x128xf32>
    %220 = arith.addf %219, %218 : vector<1x128xf32>
    %221 = arith.divf %219, %220 : vector<1x128xf32>
    %222 = vector.extract_strided_slice %209 {offsets = [0, 256], sizes = [1, 128], strides = [1, 1]} : vector<1x512xf32> to vector<1x128xf32>
    %223 = math.tanh %222 : vector<1x128xf32>
    %224 = vector.extract_strided_slice %209 {offsets = [0, 384], sizes = [1, 128], strides = [1, 1]} : vector<1x512xf32> to vector<1x128xf32>
    %225 = arith.negf %224 : vector<1x128xf32>
    %226 = math.exp %225 : vector<1x128xf32>
    %cst_64 = arith.constant 1.000000e+00 : f32
    %227 = vector.broadcast %cst_64 : f32 to vector<1x128xf32>
    %228 = arith.addf %227, %226 : vector<1x128xf32>
    %229 = arith.divf %227, %228 : vector<1x128xf32>
    %230 = arith.mulf %221, %171 : vector<1x128xf32>
    %231 = arith.mulf %215, %223 : vector<1x128xf32>
    %232 = arith.addf %230, %231 : vector<1x128xf32>
    %233 = math.tanh %232 : vector<1x128xf32>
    %234 = arith.mulf %229, %233 : vector<1x128xf32>
    %235 = tpu.concatenate %234, %204 in 1 : vector<1x128xf32>, vector<1x128xf32> -> vector<1x256xf32>
    %236 = arith.truncf %235 : vector<1x256xf32> to vector<1x256xbf16>
    %c0_65 = arith.constant 0 : index
    %c0_66 = arith.constant 0 : index
    %237 = vector.load %arg6[%c0_65, %c0_66] : memref<256x512xbf16, #tpu.memory_space<vmem>>, vector<256x512xbf16>
    %cst_67 = arith.constant dense<0.000000e+00> : vector<1x512xf32>
    %238 = tpu.matmul %236, %237, %cst_67 {dimension_numbers = #tpu.dot_dimension_numbers<[1], [0], [0], [1], [0, 0, 1, 1], [], []>} : vector<1x256xbf16>, vector<256x512xbf16>, vector<1x512xf32> -> vector<1x512xf32>
    %c0_68 = arith.constant 0 : index
    %c0_69 = arith.constant 0 : index
    %239 = vector.load %arg7[%c0_68, %c0_69] : memref<1x512xf32, #tpu.memory_space<vmem>>, vector<1x512xf32>
    %240 = arith.addf %238, %239 : vector<1x512xf32>
    %241 = vector.extract_strided_slice %240 {offsets = [0, 0], sizes = [1, 128], strides = [1, 1]} : vector<1x512xf32> to vector<1x128xf32>
    %242 = arith.negf %241 : vector<1x128xf32>
    %243 = math.exp %242 : vector<1x128xf32>
    %cst_70 = arith.constant 1.000000e+00 : f32
    %244 = vector.broadcast %cst_70 : f32 to vector<1x128xf32>
    %245 = arith.addf %244, %243 : vector<1x128xf32>
    %246 = arith.divf %244, %245 : vector<1x128xf32>
    %247 = vector.extract_strided_slice %240 {offsets = [0, 128], sizes = [1, 128], strides = [1, 1]} : vector<1x512xf32> to vector<1x128xf32>
    %248 = arith.negf %247 : vector<1x128xf32>
    %249 = math.exp %248 : vector<1x128xf32>
    %cst_71 = arith.constant 1.000000e+00 : f32
    %250 = vector.broadcast %cst_71 : f32 to vector<1x128xf32>
    %251 = arith.addf %250, %249 : vector<1x128xf32>
    %252 = arith.divf %250, %251 : vector<1x128xf32>
    %253 = vector.extract_strided_slice %240 {offsets = [0, 256], sizes = [1, 128], strides = [1, 1]} : vector<1x512xf32> to vector<1x128xf32>
    %254 = math.tanh %253 : vector<1x128xf32>
    %255 = vector.extract_strided_slice %240 {offsets = [0, 384], sizes = [1, 128], strides = [1, 1]} : vector<1x512xf32> to vector<1x128xf32>
    %256 = arith.negf %255 : vector<1x128xf32>
    %257 = math.exp %256 : vector<1x128xf32>
    %cst_72 = arith.constant 1.000000e+00 : f32
    %258 = vector.broadcast %cst_72 : f32 to vector<1x128xf32>
    %259 = arith.addf %258, %257 : vector<1x128xf32>
    %260 = arith.divf %258, %259 : vector<1x128xf32>
    %261 = arith.mulf %252, %202 : vector<1x128xf32>
    %262 = arith.mulf %246, %254 : vector<1x128xf32>
    %263 = arith.addf %261, %262 : vector<1x128xf32>
    %264 = math.tanh %263 : vector<1x128xf32>
    %265 = arith.mulf %260, %264 : vector<1x128xf32>
    %266 = vector.extract_strided_slice %17 {offsets = [4, 0], sizes = [1, 512], strides = [1, 1]} : vector<8x512xf32> to vector<1x512xf32>
    %267 = arith.truncf %234 : vector<1x128xf32> to vector<1x128xbf16>
    %c0_73 = arith.constant 0 : index
    %c0_74 = arith.constant 0 : index
    %268 = vector.load %arg4[%c0_73, %c0_74] : memref<128x512xbf16, #tpu.memory_space<vmem>>, vector<128x512xbf16>
    %cst_75 = arith.constant dense<0.000000e+00> : vector<1x512xf32>
    %269 = tpu.matmul %267, %268, %cst_75 {dimension_numbers = #tpu.dot_dimension_numbers<[1], [0], [0], [1], [0, 0, 1, 1], [], []>} : vector<1x128xbf16>, vector<128x512xbf16>, vector<1x512xf32> -> vector<1x512xf32>
    %270 = arith.addf %266, %269 : vector<1x512xf32>
    %271 = vector.extract_strided_slice %270 {offsets = [0, 0], sizes = [1, 128], strides = [1, 1]} : vector<1x512xf32> to vector<1x128xf32>
    %272 = arith.negf %271 : vector<1x128xf32>
    %273 = math.exp %272 : vector<1x128xf32>
    %cst_76 = arith.constant 1.000000e+00 : f32
    %274 = vector.broadcast %cst_76 : f32 to vector<1x128xf32>
    %275 = arith.addf %274, %273 : vector<1x128xf32>
    %276 = arith.divf %274, %275 : vector<1x128xf32>
    %277 = vector.extract_strided_slice %270 {offsets = [0, 128], sizes = [1, 128], strides = [1, 1]} : vector<1x512xf32> to vector<1x128xf32>
    %278 = arith.negf %277 : vector<1x128xf32>
    %279 = math.exp %278 : vector<1x128xf32>
    %cst_77 = arith.constant 1.000000e+00 : f32
    %280 = vector.broadcast %cst_77 : f32 to vector<1x128xf32>
    %281 = arith.addf %280, %279 : vector<1x128xf32>
    %282 = arith.divf %280, %281 : vector<1x128xf32>
    %283 = vector.extract_strided_slice %270 {offsets = [0, 256], sizes = [1, 128], strides = [1, 1]} : vector<1x512xf32> to vector<1x128xf32>
    %284 = math.tanh %283 : vector<1x128xf32>
    %285 = vector.extract_strided_slice %270 {offsets = [0, 384], sizes = [1, 128], strides = [1, 1]} : vector<1x512xf32> to vector<1x128xf32>
    %286 = arith.negf %285 : vector<1x128xf32>
    %287 = math.exp %286 : vector<1x128xf32>
    %cst_78 = arith.constant 1.000000e+00 : f32
    %288 = vector.broadcast %cst_78 : f32 to vector<1x128xf32>
    %289 = arith.addf %288, %287 : vector<1x128xf32>
    %290 = arith.divf %288, %289 : vector<1x128xf32>
    %291 = arith.mulf %282, %232 : vector<1x128xf32>
    %292 = arith.mulf %276, %284 : vector<1x128xf32>
    %293 = arith.addf %291, %292 : vector<1x128xf32>
    %294 = math.tanh %293 : vector<1x128xf32>
    %295 = arith.mulf %290, %294 : vector<1x128xf32>
    %296 = tpu.concatenate %295, %265 in 1 : vector<1x128xf32>, vector<1x128xf32> -> vector<1x256xf32>
    %297 = arith.truncf %296 : vector<1x256xf32> to vector<1x256xbf16>
    %c0_79 = arith.constant 0 : index
    %c0_80 = arith.constant 0 : index
    %298 = vector.load %arg6[%c0_79, %c0_80] : memref<256x512xbf16, #tpu.memory_space<vmem>>, vector<256x512xbf16>
    %cst_81 = arith.constant dense<0.000000e+00> : vector<1x512xf32>
    %299 = tpu.matmul %297, %298, %cst_81 {dimension_numbers = #tpu.dot_dimension_numbers<[1], [0], [0], [1], [0, 0, 1, 1], [], []>} : vector<1x256xbf16>, vector<256x512xbf16>, vector<1x512xf32> -> vector<1x512xf32>
    %c0_82 = arith.constant 0 : index
    %c0_83 = arith.constant 0 : index
    %300 = vector.load %arg7[%c0_82, %c0_83] : memref<1x512xf32, #tpu.memory_space<vmem>>, vector<1x512xf32>
    %301 = arith.addf %299, %300 : vector<1x512xf32>
    %302 = vector.extract_strided_slice %301 {offsets = [0, 0], sizes = [1, 128], strides = [1, 1]} : vector<1x512xf32> to vector<1x128xf32>
    %303 = arith.negf %302 : vector<1x128xf32>
    %304 = math.exp %303 : vector<1x128xf32>
    %cst_84 = arith.constant 1.000000e+00 : f32
    %305 = vector.broadcast %cst_84 : f32 to vector<1x128xf32>
    %306 = arith.addf %305, %304 : vector<1x128xf32>
    %307 = arith.divf %305, %306 : vector<1x128xf32>
    %308 = vector.extract_strided_slice %301 {offsets = [0, 128], sizes = [1, 128], strides = [1, 1]} : vector<1x512xf32> to vector<1x128xf32>
    %309 = arith.negf %308 : vector<1x128xf32>
    %310 = math.exp %309 : vector<1x128xf32>
    %cst_85 = arith.constant 1.000000e+00 : f32
    %311 = vector.broadcast %cst_85 : f32 to vector<1x128xf32>
    %312 = arith.addf %311, %310 : vector<1x128xf32>
    %313 = arith.divf %311, %312 : vector<1x128xf32>
    %314 = vector.extract_strided_slice %301 {offsets = [0, 256], sizes = [1, 128], strides = [1, 1]} : vector<1x512xf32> to vector<1x128xf32>
    %315 = math.tanh %314 : vector<1x128xf32>
    %316 = vector.extract_strided_slice %301 {offsets = [0, 384], sizes = [1, 128], strides = [1, 1]} : vector<1x512xf32> to vector<1x128xf32>
    %317 = arith.negf %316 : vector<1x128xf32>
    %318 = math.exp %317 : vector<1x128xf32>
    %cst_86 = arith.constant 1.000000e+00 : f32
    %319 = vector.broadcast %cst_86 : f32 to vector<1x128xf32>
    %320 = arith.addf %319, %318 : vector<1x128xf32>
    %321 = arith.divf %319, %320 : vector<1x128xf32>
    %322 = arith.mulf %313, %263 : vector<1x128xf32>
    %323 = arith.mulf %307, %315 : vector<1x128xf32>
    %324 = arith.addf %322, %323 : vector<1x128xf32>
    %325 = math.tanh %324 : vector<1x128xf32>
    %326 = arith.mulf %321, %325 : vector<1x128xf32>
    %327 = vector.extract_strided_slice %17 {offsets = [5, 0], sizes = [1, 512], strides = [1, 1]} : vector<8x512xf32> to vector<1x512xf32>
    %328 = arith.truncf %295 : vector<1x128xf32> to vector<1x128xbf16>
    %c0_87 = arith.constant 0 : index
    %c0_88 = arith.constant 0 : index
    %329 = vector.load %arg4[%c0_87, %c0_88] : memref<128x512xbf16, #tpu.memory_space<vmem>>, vector<128x512xbf16>
    %cst_89 = arith.constant dense<0.000000e+00> : vector<1x512xf32>
    %330 = tpu.matmul %328, %329, %cst_89 {dimension_numbers = #tpu.dot_dimension_numbers<[1], [0], [0], [1], [0, 0, 1, 1], [], []>} : vector<1x128xbf16>, vector<128x512xbf16>, vector<1x512xf32> -> vector<1x512xf32>
    %331 = arith.addf %327, %330 : vector<1x512xf32>
    %332 = vector.extract_strided_slice %331 {offsets = [0, 0], sizes = [1, 128], strides = [1, 1]} : vector<1x512xf32> to vector<1x128xf32>
    %333 = arith.negf %332 : vector<1x128xf32>
    %334 = math.exp %333 : vector<1x128xf32>
    %cst_90 = arith.constant 1.000000e+00 : f32
    %335 = vector.broadcast %cst_90 : f32 to vector<1x128xf32>
    %336 = arith.addf %335, %334 : vector<1x128xf32>
    %337 = arith.divf %335, %336 : vector<1x128xf32>
    %338 = vector.extract_strided_slice %331 {offsets = [0, 128], sizes = [1, 128], strides = [1, 1]} : vector<1x512xf32> to vector<1x128xf32>
    %339 = arith.negf %338 : vector<1x128xf32>
    %340 = math.exp %339 : vector<1x128xf32>
    %cst_91 = arith.constant 1.000000e+00 : f32
    %341 = vector.broadcast %cst_91 : f32 to vector<1x128xf32>
    %342 = arith.addf %341, %340 : vector<1x128xf32>
    %343 = arith.divf %341, %342 : vector<1x128xf32>
    %344 = vector.extract_strided_slice %331 {offsets = [0, 256], sizes = [1, 128], strides = [1, 1]} : vector<1x512xf32> to vector<1x128xf32>
    %345 = math.tanh %344 : vector<1x128xf32>
    %346 = vector.extract_strided_slice %331 {offsets = [0, 384], sizes = [1, 128], strides = [1, 1]} : vector<1x512xf32> to vector<1x128xf32>
    %347 = arith.negf %346 : vector<1x128xf32>
    %348 = math.exp %347 : vector<1x128xf32>
    %cst_92 = arith.constant 1.000000e+00 : f32
    %349 = vector.broadcast %cst_92 : f32 to vector<1x128xf32>
    %350 = arith.addf %349, %348 : vector<1x128xf32>
    %351 = arith.divf %349, %350 : vector<1x128xf32>
    %352 = arith.mulf %343, %293 : vector<1x128xf32>
    %353 = arith.mulf %337, %345 : vector<1x128xf32>
    %354 = arith.addf %352, %353 : vector<1x128xf32>
    %355 = math.tanh %354 : vector<1x128xf32>
    %356 = arith.mulf %351, %355 : vector<1x128xf32>
    %357 = tpu.concatenate %356, %326 in 1 : vector<1x128xf32>, vector<1x128xf32> -> vector<1x256xf32>
    %358 = arith.truncf %357 : vector<1x256xf32> to vector<1x256xbf16>
    %c0_93 = arith.constant 0 : index
    %c0_94 = arith.constant 0 : index
    %359 = vector.load %arg6[%c0_93, %c0_94] : memref<256x512xbf16, #tpu.memory_space<vmem>>, vector<256x512xbf16>
    %cst_95 = arith.constant dense<0.000000e+00> : vector<1x512xf32>
    %360 = tpu.matmul %358, %359, %cst_95 {dimension_numbers = #tpu.dot_dimension_numbers<[1], [0], [0], [1], [0, 0, 1, 1], [], []>} : vector<1x256xbf16>, vector<256x512xbf16>, vector<1x512xf32> -> vector<1x512xf32>
    %c0_96 = arith.constant 0 : index
    %c0_97 = arith.constant 0 : index
    %361 = vector.load %arg7[%c0_96, %c0_97] : memref<1x512xf32, #tpu.memory_space<vmem>>, vector<1x512xf32>
    %362 = arith.addf %360, %361 : vector<1x512xf32>
    %363 = vector.extract_strided_slice %362 {offsets = [0, 0], sizes = [1, 128], strides = [1, 1]} : vector<1x512xf32> to vector<1x128xf32>
    %364 = arith.negf %363 : vector<1x128xf32>
    %365 = math.exp %364 : vector<1x128xf32>
    %cst_98 = arith.constant 1.000000e+00 : f32
    %366 = vector.broadcast %cst_98 : f32 to vector<1x128xf32>
    %367 = arith.addf %366, %365 : vector<1x128xf32>
    %368 = arith.divf %366, %367 : vector<1x128xf32>
    %369 = vector.extract_strided_slice %362 {offsets = [0, 128], sizes = [1, 128], strides = [1, 1]} : vector<1x512xf32> to vector<1x128xf32>
    %370 = arith.negf %369 : vector<1x128xf32>
    %371 = math.exp %370 : vector<1x128xf32>
    %cst_99 = arith.constant 1.000000e+00 : f32
    %372 = vector.broadcast %cst_99 : f32 to vector<1x128xf32>
    %373 = arith.addf %372, %371 : vector<1x128xf32>
    %374 = arith.divf %372, %373 : vector<1x128xf32>
    %375 = vector.extract_strided_slice %362 {offsets = [0, 256], sizes = [1, 128], strides = [1, 1]} : vector<1x512xf32> to vector<1x128xf32>
    %376 = math.tanh %375 : vector<1x128xf32>
    %377 = vector.extract_strided_slice %362 {offsets = [0, 384], sizes = [1, 128], strides = [1, 1]} : vector<1x512xf32> to vector<1x128xf32>
    %378 = arith.negf %377 : vector<1x128xf32>
    %379 = math.exp %378 : vector<1x128xf32>
    %cst_100 = arith.constant 1.000000e+00 : f32
    %380 = vector.broadcast %cst_100 : f32 to vector<1x128xf32>
    %381 = arith.addf %380, %379 : vector<1x128xf32>
    %382 = arith.divf %380, %381 : vector<1x128xf32>
    %383 = arith.mulf %374, %324 : vector<1x128xf32>
    %384 = arith.mulf %368, %376 : vector<1x128xf32>
    %385 = arith.addf %383, %384 : vector<1x128xf32>
    %386 = math.tanh %385 : vector<1x128xf32>
    %387 = arith.mulf %382, %386 : vector<1x128xf32>
    %388 = vector.extract_strided_slice %17 {offsets = [6, 0], sizes = [1, 512], strides = [1, 1]} : vector<8x512xf32> to vector<1x512xf32>
    %389 = arith.truncf %356 : vector<1x128xf32> to vector<1x128xbf16>
    %c0_101 = arith.constant 0 : index
    %c0_102 = arith.constant 0 : index
    %390 = vector.load %arg4[%c0_101, %c0_102] : memref<128x512xbf16, #tpu.memory_space<vmem>>, vector<128x512xbf16>
    %cst_103 = arith.constant dense<0.000000e+00> : vector<1x512xf32>
    %391 = tpu.matmul %389, %390, %cst_103 {dimension_numbers = #tpu.dot_dimension_numbers<[1], [0], [0], [1], [0, 0, 1, 1], [], []>} : vector<1x128xbf16>, vector<128x512xbf16>, vector<1x512xf32> -> vector<1x512xf32>
    %392 = arith.addf %388, %391 : vector<1x512xf32>
    %393 = vector.extract_strided_slice %392 {offsets = [0, 0], sizes = [1, 128], strides = [1, 1]} : vector<1x512xf32> to vector<1x128xf32>
    %394 = arith.negf %393 : vector<1x128xf32>
    %395 = math.exp %394 : vector<1x128xf32>
    %cst_104 = arith.constant 1.000000e+00 : f32
    %396 = vector.broadcast %cst_104 : f32 to vector<1x128xf32>
    %397 = arith.addf %396, %395 : vector<1x128xf32>
    %398 = arith.divf %396, %397 : vector<1x128xf32>
    %399 = vector.extract_strided_slice %392 {offsets = [0, 128], sizes = [1, 128], strides = [1, 1]} : vector<1x512xf32> to vector<1x128xf32>
    %400 = arith.negf %399 : vector<1x128xf32>
    %401 = math.exp %400 : vector<1x128xf32>
    %cst_105 = arith.constant 1.000000e+00 : f32
    %402 = vector.broadcast %cst_105 : f32 to vector<1x128xf32>
    %403 = arith.addf %402, %401 : vector<1x128xf32>
    %404 = arith.divf %402, %403 : vector<1x128xf32>
    %405 = vector.extract_strided_slice %392 {offsets = [0, 256], sizes = [1, 128], strides = [1, 1]} : vector<1x512xf32> to vector<1x128xf32>
    %406 = math.tanh %405 : vector<1x128xf32>
    %407 = vector.extract_strided_slice %392 {offsets = [0, 384], sizes = [1, 128], strides = [1, 1]} : vector<1x512xf32> to vector<1x128xf32>
    %408 = arith.negf %407 : vector<1x128xf32>
    %409 = math.exp %408 : vector<1x128xf32>
    %cst_106 = arith.constant 1.000000e+00 : f32
    %410 = vector.broadcast %cst_106 : f32 to vector<1x128xf32>
    %411 = arith.addf %410, %409 : vector<1x128xf32>
    %412 = arith.divf %410, %411 : vector<1x128xf32>
    %413 = arith.mulf %404, %354 : vector<1x128xf32>
    %414 = arith.mulf %398, %406 : vector<1x128xf32>
    %415 = arith.addf %413, %414 : vector<1x128xf32>
    %416 = math.tanh %415 : vector<1x128xf32>
    %417 = arith.mulf %412, %416 : vector<1x128xf32>
    %418 = tpu.concatenate %417, %387 in 1 : vector<1x128xf32>, vector<1x128xf32> -> vector<1x256xf32>
    %419 = arith.truncf %418 : vector<1x256xf32> to vector<1x256xbf16>
    %c0_107 = arith.constant 0 : index
    %c0_108 = arith.constant 0 : index
    %420 = vector.load %arg6[%c0_107, %c0_108] : memref<256x512xbf16, #tpu.memory_space<vmem>>, vector<256x512xbf16>
    %cst_109 = arith.constant dense<0.000000e+00> : vector<1x512xf32>
    %421 = tpu.matmul %419, %420, %cst_109 {dimension_numbers = #tpu.dot_dimension_numbers<[1], [0], [0], [1], [0, 0, 1, 1], [], []>} : vector<1x256xbf16>, vector<256x512xbf16>, vector<1x512xf32> -> vector<1x512xf32>
    %c0_110 = arith.constant 0 : index
    %c0_111 = arith.constant 0 : index
    %422 = vector.load %arg7[%c0_110, %c0_111] : memref<1x512xf32, #tpu.memory_space<vmem>>, vector<1x512xf32>
    %423 = arith.addf %421, %422 : vector<1x512xf32>
    %424 = vector.extract_strided_slice %423 {offsets = [0, 0], sizes = [1, 128], strides = [1, 1]} : vector<1x512xf32> to vector<1x128xf32>
    %425 = arith.negf %424 : vector<1x128xf32>
    %426 = math.exp %425 : vector<1x128xf32>
    %cst_112 = arith.constant 1.000000e+00 : f32
    %427 = vector.broadcast %cst_112 : f32 to vector<1x128xf32>
    %428 = arith.addf %427, %426 : vector<1x128xf32>
    %429 = arith.divf %427, %428 : vector<1x128xf32>
    %430 = vector.extract_strided_slice %423 {offsets = [0, 128], sizes = [1, 128], strides = [1, 1]} : vector<1x512xf32> to vector<1x128xf32>
    %431 = arith.negf %430 : vector<1x128xf32>
    %432 = math.exp %431 : vector<1x128xf32>
    %cst_113 = arith.constant 1.000000e+00 : f32
    %433 = vector.broadcast %cst_113 : f32 to vector<1x128xf32>
    %434 = arith.addf %433, %432 : vector<1x128xf32>
    %435 = arith.divf %433, %434 : vector<1x128xf32>
    %436 = vector.extract_strided_slice %423 {offsets = [0, 256], sizes = [1, 128], strides = [1, 1]} : vector<1x512xf32> to vector<1x128xf32>
    %437 = math.tanh %436 : vector<1x128xf32>
    %438 = vector.extract_strided_slice %423 {offsets = [0, 384], sizes = [1, 128], strides = [1, 1]} : vector<1x512xf32> to vector<1x128xf32>
    %439 = arith.negf %438 : vector<1x128xf32>
    %440 = math.exp %439 : vector<1x128xf32>
    %cst_114 = arith.constant 1.000000e+00 : f32
    %441 = vector.broadcast %cst_114 : f32 to vector<1x128xf32>
    %442 = arith.addf %441, %440 : vector<1x128xf32>
    %443 = arith.divf %441, %442 : vector<1x128xf32>
    %444 = arith.mulf %435, %385 : vector<1x128xf32>
    %445 = arith.mulf %429, %437 : vector<1x128xf32>
    %446 = arith.addf %444, %445 : vector<1x128xf32>
    %447 = math.tanh %446 : vector<1x128xf32>
    %448 = arith.mulf %443, %447 : vector<1x128xf32>
    %449 = vector.extract_strided_slice %17 {offsets = [7, 0], sizes = [1, 512], strides = [1, 1]} : vector<8x512xf32> to vector<1x512xf32>
    %450 = arith.truncf %417 : vector<1x128xf32> to vector<1x128xbf16>
    %c0_115 = arith.constant 0 : index
    %c0_116 = arith.constant 0 : index
    %451 = vector.load %arg4[%c0_115, %c0_116] : memref<128x512xbf16, #tpu.memory_space<vmem>>, vector<128x512xbf16>
    %cst_117 = arith.constant dense<0.000000e+00> : vector<1x512xf32>
    %452 = tpu.matmul %450, %451, %cst_117 {dimension_numbers = #tpu.dot_dimension_numbers<[1], [0], [0], [1], [0, 0, 1, 1], [], []>} : vector<1x128xbf16>, vector<128x512xbf16>, vector<1x512xf32> -> vector<1x512xf32>
    %453 = arith.addf %449, %452 : vector<1x512xf32>
    %454 = vector.extract_strided_slice %453 {offsets = [0, 0], sizes = [1, 128], strides = [1, 1]} : vector<1x512xf32> to vector<1x128xf32>
    %455 = arith.negf %454 : vector<1x128xf32>
    %456 = math.exp %455 : vector<1x128xf32>
    %cst_118 = arith.constant 1.000000e+00 : f32
    %457 = vector.broadcast %cst_118 : f32 to vector<1x128xf32>
    %458 = arith.addf %457, %456 : vector<1x128xf32>
    %459 = arith.divf %457, %458 : vector<1x128xf32>
    %460 = vector.extract_strided_slice %453 {offsets = [0, 128], sizes = [1, 128], strides = [1, 1]} : vector<1x512xf32> to vector<1x128xf32>
    %461 = arith.negf %460 : vector<1x128xf32>
    %462 = math.exp %461 : vector<1x128xf32>
    %cst_119 = arith.constant 1.000000e+00 : f32
    %463 = vector.broadcast %cst_119 : f32 to vector<1x128xf32>
    %464 = arith.addf %463, %462 : vector<1x128xf32>
    %465 = arith.divf %463, %464 : vector<1x128xf32>
    %466 = vector.extract_strided_slice %453 {offsets = [0, 256], sizes = [1, 128], strides = [1, 1]} : vector<1x512xf32> to vector<1x128xf32>
    %467 = math.tanh %466 : vector<1x128xf32>
    %468 = vector.extract_strided_slice %453 {offsets = [0, 384], sizes = [1, 128], strides = [1, 1]} : vector<1x512xf32> to vector<1x128xf32>
    %469 = arith.negf %468 : vector<1x128xf32>
    %470 = math.exp %469 : vector<1x128xf32>
    %cst_120 = arith.constant 1.000000e+00 : f32
    %471 = vector.broadcast %cst_120 : f32 to vector<1x128xf32>
    %472 = arith.addf %471, %470 : vector<1x128xf32>
    %473 = arith.divf %471, %472 : vector<1x128xf32>
    %474 = arith.mulf %465, %415 : vector<1x128xf32>
    %475 = arith.mulf %459, %467 : vector<1x128xf32>
    %476 = arith.addf %474, %475 : vector<1x128xf32>
    %477 = math.tanh %476 : vector<1x128xf32>
    %478 = arith.mulf %473, %477 : vector<1x128xf32>
    %479 = tpu.concatenate %478, %448 in 1 : vector<1x128xf32>, vector<1x128xf32> -> vector<1x256xf32>
    %480 = arith.truncf %479 : vector<1x256xf32> to vector<1x256xbf16>
    %c0_121 = arith.constant 0 : index
    %c0_122 = arith.constant 0 : index
    %481 = vector.load %arg6[%c0_121, %c0_122] : memref<256x512xbf16, #tpu.memory_space<vmem>>, vector<256x512xbf16>
    %cst_123 = arith.constant dense<0.000000e+00> : vector<1x512xf32>
    %482 = tpu.matmul %480, %481, %cst_123 {dimension_numbers = #tpu.dot_dimension_numbers<[1], [0], [0], [1], [0, 0, 1, 1], [], []>} : vector<1x256xbf16>, vector<256x512xbf16>, vector<1x512xf32> -> vector<1x512xf32>
    %c0_124 = arith.constant 0 : index
    %c0_125 = arith.constant 0 : index
    %483 = vector.load %arg7[%c0_124, %c0_125] : memref<1x512xf32, #tpu.memory_space<vmem>>, vector<1x512xf32>
    %484 = arith.addf %482, %483 : vector<1x512xf32>
    %485 = vector.extract_strided_slice %484 {offsets = [0, 0], sizes = [1, 128], strides = [1, 1]} : vector<1x512xf32> to vector<1x128xf32>
    %486 = arith.negf %485 : vector<1x128xf32>
    %487 = math.exp %486 : vector<1x128xf32>
    %cst_126 = arith.constant 1.000000e+00 : f32
    %488 = vector.broadcast %cst_126 : f32 to vector<1x128xf32>
    %489 = arith.addf %488, %487 : vector<1x128xf32>
    %490 = arith.divf %488, %489 : vector<1x128xf32>
    %491 = vector.extract_strided_slice %484 {offsets = [0, 128], sizes = [1, 128], strides = [1, 1]} : vector<1x512xf32> to vector<1x128xf32>
    %492 = arith.negf %491 : vector<1x128xf32>
    %493 = math.exp %492 : vector<1x128xf32>
    %cst_127 = arith.constant 1.000000e+00 : f32
    %494 = vector.broadcast %cst_127 : f32 to vector<1x128xf32>
    %495 = arith.addf %494, %493 : vector<1x128xf32>
    %496 = arith.divf %494, %495 : vector<1x128xf32>
    %497 = vector.extract_strided_slice %484 {offsets = [0, 256], sizes = [1, 128], strides = [1, 1]} : vector<1x512xf32> to vector<1x128xf32>
    %498 = math.tanh %497 : vector<1x128xf32>
    %499 = vector.extract_strided_slice %484 {offsets = [0, 384], sizes = [1, 128], strides = [1, 1]} : vector<1x512xf32> to vector<1x128xf32>
    %500 = arith.negf %499 : vector<1x128xf32>
    %501 = math.exp %500 : vector<1x128xf32>
    %cst_128 = arith.constant 1.000000e+00 : f32
    %502 = vector.broadcast %cst_128 : f32 to vector<1x128xf32>
    %503 = arith.addf %502, %501 : vector<1x128xf32>
    %504 = arith.divf %502, %503 : vector<1x128xf32>
    %505 = arith.mulf %496, %446 : vector<1x128xf32>
    %506 = arith.mulf %490, %498 : vector<1x128xf32>
    %507 = arith.addf %505, %506 : vector<1x128xf32>
    %508 = math.tanh %507 : vector<1x128xf32>
    %509 = arith.mulf %504, %508 : vector<1x128xf32>
    %510 = tpu.concatenate %448, %509 in 0 : vector<1x128xf32>, vector<1x128xf32> -> vector<2x128xf32>
    %511 = arith.truncf %510 : vector<2x128xf32> to vector<2x128xbf16>
    %c0_129 = arith.constant 0 : index
    %c0_130 = arith.constant 0 : index
    %512 = vector.load %arg8[%c0_129, %c0_130] : memref<128x128xbf16, #tpu.memory_space<vmem>>, vector<128x128xbf16>
    %cst_131 = arith.constant dense<0.000000e+00> : vector<2x128xf32>
    %513 = tpu.matmul %511, %512, %cst_131 {dimension_numbers = #tpu.dot_dimension_numbers<[1], [0], [0], [1], [0, 0, 1, 1], [], []>} : vector<2x128xbf16>, vector<128x128xbf16>, vector<2x128xf32> -> vector<2x128xf32>
    %c0_132 = arith.constant 0 : index
    %c0_133 = arith.constant 0 : index
    %514 = vector.load %arg9[%c0_132, %c0_133] : memref<1x128xf32, #tpu.memory_space<vmem>>, vector<1x128xf32>
    %515 = vector.broadcast %514 : vector<1x128xf32> to vector<2x128xf32>
    %516 = arith.addf %513, %515 : vector<2x128xf32>
    %c0_134 = arith.constant 0 : index
    %c0_135 = arith.constant 0 : index
    %517 = vector.load %arg10[%c0_134, %c0_135] : memref<2x128xf32, #tpu.memory_space<vmem>>, vector<2x128xf32>
    tpu.vector_store %arg10[%c0_134, %c0_135], %516 {strides = array<i32>} : memref<2x128xf32, #tpu.memory_space<vmem>>, vector<2x128xf32>,
    return
  }
}

</mosaic_0001>

<llo_original>
// kernel: har_forward.1
$region0: #{har_forward.1}
  #allocation0 [shape = 'u32[]', space=smem, size = 0x4, offset = 0x4, fixed_abs, tag = 'smem constant byte address 0x4 - core index']
  #allocation1 [shape = 'u32[144,128]{1,0:T(1,128)}', space=vmem, size = 0x12000, scoped, tag = 'internal scratch']
  %s0 = inlined_call_operand.vmem [shape: bf16[2048,27], index: 0, kind: input, shape index: {}]
  %s1 = inlined_call_operand.vmem [shape: bf16[27,128], index: 1, kind: input, shape index: {}]
  %s2 = inlined_call_operand.vmem [shape: f32[1,128], index: 2, kind: input, shape index: {}]
  %s3 = inlined_call_operand.vmem [shape: bf16[128,512], index: 3, kind: input, shape index: {}]
  %s4 = inlined_call_operand.vmem [shape: bf16[128,512], index: 4, kind: input, shape index: {}]
  %s5 = inlined_call_operand.vmem [shape: f32[1,512], index: 5, kind: input, shape index: {}]
  %s6 = inlined_call_operand.vmem [shape: bf16[256,512], index: 6, kind: input, shape index: {}]
  %s7 = inlined_call_operand.vmem [shape: f32[1,512], index: 7, kind: input, shape index: {}]
  %s8 = inlined_call_operand.vmem [shape: bf16[128,128], index: 8, kind: input, shape index: {}]
  %s9 = inlined_call_operand.vmem [shape: f32[1,128], index: 9, kind: input, shape index: {}]
  %s10 = inlined_call_operand.hbm [shape: f32[2,128], index: 10, kind: output, shape index: {}]
  %s11 = sld [smem:[#allocation0]]
  $region50: #{har_forward.1} parent=0
    _
  %s13 = ssub.s32 1, %s11
  %s14 = scalar_select 0, %s13, %s11
  $region1: #{har_forward.1} parent=0
    #allocation2 [shape = 'u8[1024]{0}', space=vmem, size = 0x400, scoped, tag = 'output window, operand 0, single buffered']
    #allocation3 [shape = 's32[1]{0}', space=sflag, size = 0x4, scoped, tag = 'scoped memory for har_forward.1']
    %15 = vsyncpa [#allocation3], 0
    // Predicated region
    $region2: #{har_forward.1} parent=1 // pred_check
      _
    $region3: #{har_forward.1} parent=1 // pred_check_branch
      %17 = sbr.rel (0) target = $region5
    $region4: #{har_forward.1} parent=1 // pred_region
      _
    $region5: #{har_forward.1} parent=1 // pred_fallthru
      _
    // Predicated region
    $region6: #{har_forward.1} parent=1 // pred_check
      _
    $region7: #{har_forward.1} parent=1 // pred_check_branch
      %19 = sbr.rel (0) target = $region9
    $region8: #{har_forward.1} parent=1 // pred_region
      _
    $region9: #{har_forward.1} parent=1 // pred_fallthru
      _
    // Predicated region
    $region10: #{har_forward.1} parent=1 // pred_check
      _
    $region11: #{har_forward.1} parent=1 // pred_check_branch
      %21 = sbr.rel (0) target = $region13
    $region12: #{har_forward.1} parent=1 // pred_region
      _
    $region13: #{har_forward.1} parent=1 // pred_fallthru
      _
    // Predicated region
    $region14: #{har_forward.1} parent=1 // pred_check
      _
    $region15: #{har_forward.1} parent=1 // pred_check_branch
      %23 = sbr.rel (0) target = $region17
    $region16: #{har_forward.1} parent=1 // pred_region
      _
    $region17: #{har_forward.1} parent=1 // pred_fallthru
      _
    // Predicated region
    $region18: #{har_forward.1} parent=1 // pred_check
      _
    $region19: #{har_forward.1} parent=1 // pred_check_branch
      %25 = sbr.rel (0) target = $region21
    $region20: #{har_forward.1} parent=1 // pred_region
      _
    $region21: #{har_forward.1} parent=1 // pred_fallthru
      _
    // Predicated region
    $region22: #{har_forward.1} parent=1 // pred_check
      _
    $region23: #{har_forward.1} parent=1 // pred_check_branch
      %27 = sbr.rel (0) target = $region25
    $region24: #{har_forward.1} parent=1 // pred_region
      _
    $region25: #{har_forward.1} parent=1 // pred_fallthru
      _
    // Predicated region
    $region26: #{har_forward.1} parent=1 // pred_check
      _
    $region27: #{har_forward.1} parent=1 // pred_check_branch
      %29 = sbr.rel (0) target = $region29
    $region28: #{har_forward.1} parent=1 // pred_region
      _
    $region29: #{har_forward.1} parent=1 // pred_fallthru
      _
    // Predicated region
    $region30: #{har_forward.1} parent=1 // pred_check
      _
    $region31: #{har_forward.1} parent=1 // pred_check_branch
      %31 = sbr.rel (0) target = $region33
    $region32: #{har_forward.1} parent=1 // pred_region
      _
    $region33: #{har_forward.1} parent=1 // pred_fallthru
      _
    // Predicated region
    $region34: #{har_forward.1} parent=1 // pred_check
      _
    $region35: #{har_forward.1} parent=1 // pred_check_branch
      %33 = sbr.rel (0) target = $region37
    $region36: #{har_forward.1} parent=1 // pred_region
      _
    $region37: #{har_forward.1} parent=1 // pred_fallthru
      _
    // Predicated region
    $region38: #{har_forward.1} parent=1 // pred_check
      _
    $region39: #{har_forward.1} parent=1 // pred_check_branch
      %35 = sbr.rel (0) target = $region41
    $region40: #{har_forward.1} parent=1 // pred_region
      _
    $region41: #{har_forward.1} parent=1 // pred_fallthru
      _
    %v37 = vld [vmem:[%s0] sm:$0xf]
    %v38 = vld [vmem:[%s0 + $0x4] sm:$0xf]
    %v39 = vld [vmem:[%s0 + $0x8] sm:$0xf]
    %v40 = vld [vmem:[%s0 + $0xc] sm:$0xf]
    %v41 = vld [vmem:[%s0 + $0x10] sm:$0xf]
    %v42 = vld [vmem:[%s0 + $0x14] sm:$0xf]
    %v43 = vld [vmem:[%s0 + $0x18] sm:$0xf]
    %v44 = vld [vmem:[%s0 + $0x1c] sm:$0xf]
    %v45 = vld [vmem:[%s0 + $0x20] sm:$0xf]
    %v46 = vld [vmem:[%s0 + $0x24] sm:$0xf]
    %v47 = vld [vmem:[%s0 + $0x28] sm:$0xf]
    %v48 = vld [vmem:[%s0 + $0x2c] sm:$0xf]
    %v49 = vld [vmem:[%s0 + $0x30] sm:$0xf]
    %v50 = vld [vmem:[%s0 + $0x34] sm:$0xf]
    %v51 = vld [vmem:[%s0 + $0x38] sm:$0xf]
    %v52 = vld [vmem:[%s0 + $0x3c] sm:$0xf]
    %v53 = vld [vmem:[%s0 + $0x40] sm:$0xf]
    %v54 = vld [vmem:[%s0 + $0x44] sm:$0xf]
    %v55 = vld [vmem:[%s0 + $0x48] sm:$0xf]
    %v56 = vld [vmem:[%s0 + $0x4c] sm:$0xf]
    %v57 = vld [vmem:[%s0 + $0x50] sm:$0xf]
    %v58 = vld [vmem:[%s0 + $0x54] sm:$0xf]
    %v59 = vld [vmem:[%s0 + $0x58] sm:$0xf]
    %v60 = vld [vmem:[%s0 + $0x5c] sm:$0xf]
    %v61 = vld [vmem:[%s0 + $0x60] sm:$0xf]
    %v62 = vld [vmem:[%s0 + $0x64] sm:$0xf]
    %v63 = vld [vmem:[%s0 + $0x68] sm:$0xf]
    %v64 = vld [vmem:[%s0 + $0x6c] sm:$0xf]
    %v65 = vld [vmem:[%s0 + $0x70] sm:$0xf]
    %v66 = vld [vmem:[%s0 + $0x74] sm:$0xf]
    %v67 = vld [vmem:[%s0 + $0x78] sm:$0xf]
    %v68 = vld [vmem:[%s0 + $0x7c] sm:$0xf]
    %v69 = vld [vmem:[%s0 + $0x80] sm:$0xf]
    %v70 = vld [vmem:[%s0 + $0x84] sm:$0xf]
    %v71 = vld [vmem:[%s0 + $0x88] sm:$0xf]
    %v72 = vld [vmem:[%s0 + $0x8c] sm:$0xf]
    %v73 = vld [vmem:[%s0 + $0x90] sm:$0xf]
    %v74 = vld [vmem:[%s0 + $0x94] sm:$0xf]
    %v75 = vld [vmem:[%s0 + $0x98] sm:$0xf]
    %v76 = vld [vmem:[%s0 + $0x9c] sm:$0xf]
    %v77 = vld [vmem:[%s0 + $0xa0] sm:$0xf]
    %v78 = vld [vmem:[%s0 + $0xa4] sm:$0xf]
    %v79 = vld [vmem:[%s0 + $0xa8] sm:$0xf]
    %v80 = vld [vmem:[%s0 + $0xac] sm:$0xf]
    %v81 = vld [vmem:[%s0 + $0xb0] sm:$0xf]
    %v82 = vld [vmem:[%s0 + $0xb4] sm:$0xf]
    %v83 = vld [vmem:[%s0 + $0xb8] sm:$0xf]
    %v84 = vld [vmem:[%s0 + $0xbc] sm:$0xf]
    %v85 = vld [vmem:[%s0 + $0xc0] sm:$0xf]
    %v86 = vld [vmem:[%s0 + $0xc4] sm:$0xf]
    %v87 = vld [vmem:[%s0 + $0xc8] sm:$0xf]
    %v88 = vld [vmem:[%s0 + $0xcc] sm:$0xf]
    %v89 = vld [vmem:[%s0 + $0xd0] sm:$0xf]
    %v90 = vld [vmem:[%s0 + $0xd4] sm:$0xf]
    %v91 = vld [vmem:[%s0 + $0xd8] sm:$0xf]
    %v92 = vld [vmem:[%s0 + $0xdc] sm:$0xf]
    %v93 = vld [vmem:[%s0 + $0xe0] sm:$0xf]
    %v94 = vld [vmem:[%s0 + $0xe4] sm:$0xf]
    %v95 = vld [vmem:[%s0 + $0xe8] sm:$0xf]
    %v96 = vld [vmem:[%s0 + $0xec] sm:$0xf]
    %v97 = vld [vmem:[%s0 + $0xf0] sm:$0xf]
    %v98 = vld [vmem:[%s0 + $0xf4] sm:$0xf]
    %v99 = vld [vmem:[%s0 + $0xf8] sm:$0xf]
    %v100 = vld [vmem:[%s0 + $0xfc] sm:$0xf]
    %v101 = vld [vmem:[%s0 + $0x100] sm:$0xf]
    %v102 = vld [vmem:[%s0 + $0x104] sm:$0xf]
    %v103 = vld [vmem:[%s0 + $0x108] sm:$0xf]
    %v104 = vld [vmem:[%s0 + $0x10c] sm:$0xf]
    %v105 = vld [vmem:[%s0 + $0x110] sm:$0xf]
    %v106 = vld [vmem:[%s0 + $0x114] sm:$0xf]
    %v107 = vld [vmem:[%s0 + $0x118] sm:$0xf]
    %v108 = vld [vmem:[%s0 + $0x11c] sm:$0xf]
    %v109 = vld [vmem:[%s0 + $0x120] sm:$0xf]
    %v110 = vld [vmem:[%s0 + $0x124] sm:$0xf]
    %v111 = vld [vmem:[%s0 + $0x128] sm:$0xf]
    %v112 = vld [vmem:[%s0 + $0x12c] sm:$0xf]
    %v113 = vld [vmem:[%s0 + $0x130] sm:$0xf]
    %v114 = vld [vmem:[%s0 + $0x134] sm:$0xf]
    %v115 = vld [vmem:[%s0 + $0x138] sm:$0xf]
    %v116 = vld [vmem:[%s0 + $0x13c] sm:$0xf]
    %v117 = vld [vmem:[%s0 + $0x140] sm:$0xf]
    %v118 = vld [vmem:[%s0 + $0x144] sm:$0xf]
    %v119 = vld [vmem:[%s0 + $0x148] sm:$0xf]
    %v120 = vld [vmem:[%s0 + $0x14c] sm:$0xf]
    %v121 = vld [vmem:[%s0 + $0x150] sm:$0xf]
    %v122 = vld [vmem:[%s0 + $0x154] sm:$0xf]
    %v123 = vld [vmem:[%s0 + $0x158] sm:$0xf]
    %v124 = vld [vmem:[%s0 + $0x15c] sm:$0xf]
    %v125 = vld [vmem:[%s0 + $0x160] sm:$0xf]
    %v126 = vld [vmem:[%s0 + $0x164] sm:$0xf]
    %v127 = vld [vmem:[%s0 + $0x168] sm:$0xf]
    %v128 = vld [vmem:[%s0 + $0x16c] sm:$0xf]
    %v129 = vld [vmem:[%s0 + $0x170] sm:$0xf]
    %v130 = vld [vmem:[%s0 + $0x174] sm:$0xf]
    %v131 = vld [vmem:[%s0 + $0x178] sm:$0xf]
    %v132 = vld [vmem:[%s0 + $0x17c] sm:$0xf]
    %v133 = vld [vmem:[%s0 + $0x180] sm:$0xf]
    %v134 = vld [vmem:[%s0 + $0x184] sm:$0xf]
    %v135 = vld [vmem:[%s0 + $0x188] sm:$0xf]
    %v136 = vld [vmem:[%s0 + $0x18c] sm:$0xf]
    %v137 = vld [vmem:[%s0 + $0x190] sm:$0xf]
    %v138 = vld [vmem:[%s0 + $0x194] sm:$0xf]
    %v139 = vld [vmem:[%s0 + $0x198] sm:$0xf]
    %v140 = vld [vmem:[%s0 + $0x19c] sm:$0xf]
    %v141 = vld [vmem:[%s0 + $0x1a0] sm:$0xf]
    %v142 = vld [vmem:[%s0 + $0x1a4] sm:$0xf]
    %v143 = vld [vmem:[%s0 + $0x1a8] sm:$0xf]
    %v144 = vld [vmem:[%s0 + $0x1ac] sm:$0xf]
    %v145 = vld [vmem:[%s0 + $0x1b0] sm:$0xf]
    %v146 = vld [vmem:[%s0 + $0x1b4] sm:$0xf]
    %v147 = vld [vmem:[%s0 + $0x1b8] sm:$0xf]
    %v148 = vld [vmem:[%s0 + $0x1bc] sm:$0xf]
    %v149 = vld [vmem:[%s0 + $0x1c0] sm:$0xf]
    %v150 = vld [vmem:[%s0 + $0x1c4] sm:$0xf]
    %v151 = vld [vmem:[%s0 + $0x1c8] sm:$0xf]
    %v152 = vld [vmem:[%s0 + $0x1cc] sm:$0xf]
    %v153 = vld [vmem:[%s0 + $0x1d0] sm:$0xf]
    %v154 = vld [vmem:[%s0 + $0x1d4] sm:$0xf]
    %v155 = vld [vmem:[%s0 + $0x1d8] sm:$0xf]
    %v156 = vld [vmem:[%s0 + $0x1dc] sm:$0xf]
    %v157 = vld [vmem:[%s0 + $0x1e0] sm:$0xf]
    %v158 = vld [vmem:[%s0 + $0x1e4] sm:$0xf]
    %v159 = vld [vmem:[%s0 + $0x1e8] sm:$0xf]
    %v160 = vld [vmem:[%s0 + $0x1ec] sm:$0xf]
    %v161 = vld [vmem:[%s0 + $0x1f0] sm:$0xf]
    %v162 = vld [vmem:[%s0 + $0x1f4] sm:$0xf]
    %v163 = vld [vmem:[%s0 + $0x1f8] sm:$0xf]
    %v164 = vld [vmem:[%s0 + $0x1fc] sm:$0xf]
    %v165 = vld [vmem:[%s0 + $0x200] sm:$0xf]
    %v166 = vld [vmem:[%s0 + $0x204] sm:$0xf]
    %v167 = vld [vmem:[%s0 + $0x208] sm:$0xf]
    %v168 = vld [vmem:[%s0 + $0x20c] sm:$0xf]
    %v169 = vld [vmem:[%s0 + $0x210] sm:$0xf]
    %v170 = vld [vmem:[%s0 + $0x214] sm:$0xf]
    %v171 = vld [vmem:[%s0 + $0x218] sm:$0xf]
    %v172 = vld [vmem:[%s0 + $0x21c] sm:$0xf]
    %v173 = vld [vmem:[%s0 + $0x220] sm:$0xf]
    %v174 = vld [vmem:[%s0 + $0x224] sm:$0xf]
    %v175 = vld [vmem:[%s0 + $0x228] sm:$0xf]
    %v176 = vld [vmem:[%s0 + $0x22c] sm:$0xf]
    %v177 = vld [vmem:[%s0 + $0x230] sm:$0xf]
    %v178 = vld [vmem:[%s0 + $0x234] sm:$0xf]
    %v179 = vld [vmem:[%s0 + $0x238] sm:$0xf]
    %v180 = vld [vmem:[%s0 + $0x23c] sm:$0xf]
    %v181 = vld [vmem:[%s0 + $0x240] sm:$0xf]
    %v182 = vld [vmem:[%s0 + $0x244] sm:$0xf]
    %v183 = vld [vmem:[%s0 + $0x248] sm:$0xf]
    %v184 = vld [vmem:[%s0 + $0x24c] sm:$0xf]
    %v185 = vld [vmem:[%s0 + $0x250] sm:$0xf]
    %v186 = vld [vmem:[%s0 + $0x254] sm:$0xf]
    %v187 = vld [vmem:[%s0 + $0x258] sm:$0xf]
    %v188 = vld [vmem:[%s0 + $0x25c] sm:$0xf]
    %v189 = vld [vmem:[%s0 + $0x260] sm:$0xf]
    %v190 = vld [vmem:[%s0 + $0x264] sm:$0xf]
    %v191 = vld [vmem:[%s0 + $0x268] sm:$0xf]
    %v192 = vld [vmem:[%s0 + $0x26c] sm:$0xf]
    %v193 = vld [vmem:[%s0 + $0x270] sm:$0xf]
    %v194 = vld [vmem:[%s0 + $0x274] sm:$0xf]
    %v195 = vld [vmem:[%s0 + $0x278] sm:$0xf]
    %v196 = vld [vmem:[%s0 + $0x27c] sm:$0xf]
    %v197 = vld [vmem:[%s0 + $0x280] sm:$0xf]
    %v198 = vld [vmem:[%s0 + $0x284] sm:$0xf]
    %v199 = vld [vmem:[%s0 + $0x288] sm:$0xf]
    %v200 = vld [vmem:[%s0 + $0x28c] sm:$0xf]
    %v201 = vld [vmem:[%s0 + $0x290] sm:$0xf]
    %v202 = vld [vmem:[%s0 + $0x294] sm:$0xf]
    %v203 = vld [vmem:[%s0 + $0x298] sm:$0xf]
    %v204 = vld [vmem:[%s0 + $0x29c] sm:$0xf]
    %v205 = vld [vmem:[%s0 + $0x2a0] sm:$0xf]
    %v206 = vld [vmem:[%s0 + $0x2a4] sm:$0xf]
    %v207 = vld [vmem:[%s0 + $0x2a8] sm:$0xf]
    %v208 = vld [vmem:[%s0 + $0x2ac] sm:$0xf]
    %v209 = vld [vmem:[%s0 + $0x2b0] sm:$0xf]
    %v210 = vld [vmem:[%s0 + $0x2b4] sm:$0xf]
    %v211 = vld [vmem:[%s0 + $0x2b8] sm:$0xf]
    %v212 = vld [vmem:[%s0 + $0x2bc] sm:$0xf]
    %v213 = vld [vmem:[%s0 + $0x2c0] sm:$0xf]
    %v214 = vld [vmem:[%s0 + $0x2c4] sm:$0xf]
    %v215 = vld [vmem:[%s0 + $0x2c8] sm:$0xf]
    %v216 = vld [vmem:[%s0 + $0x2cc] sm:$0xf]
    %v217 = vld [vmem:[%s0 + $0x2d0] sm:$0xf]
    %v218 = vld [vmem:[%s0 + $0x2d4] sm:$0xf]
    %v219 = vld [vmem:[%s0 + $0x2d8] sm:$0xf]
    %v220 = vld [vmem:[%s0 + $0x2dc] sm:$0xf]
    %v221 = vld [vmem:[%s0 + $0x2e0] sm:$0xf]
    %v222 = vld [vmem:[%s0 + $0x2e4] sm:$0xf]
    %v223 = vld [vmem:[%s0 + $0x2e8] sm:$0xf]
    %v224 = vld [vmem:[%s0 + $0x2ec] sm:$0xf]
    %v225 = vld [vmem:[%s0 + $0x2f0] sm:$0xf]
    %v226 = vld [vmem:[%s0 + $0x2f4] sm:$0xf]
    %v227 = vld [vmem:[%s0 + $0x2f8] sm:$0xf]
    %v228 = vld [vmem:[%s0 + $0x2fc] sm:$0xf]
    %v229 = vld [vmem:[%s0 + $0x300] sm:$0xf]
    %v230 = vld [vmem:[%s0 + $0x304] sm:$0xf]
    %v231 = vld [vmem:[%s0 + $0x308] sm:$0xf]
    %v232 = vld [vmem:[%s0 + $0x30c] sm:$0xf]
    %v233 = vld [vmem:[%s0 + $0x310] sm:$0xf]
    %v234 = vld [vmem:[%s0 + $0x314] sm:$0xf]
    %v235 = vld [vmem:[%s0 + $0x318] sm:$0xf]
    %v236 = vld [vmem:[%s0 + $0x31c] sm:$0xf]
    %v237 = vld [vmem:[%s0 + $0x320] sm:$0xf]
    %v238 = vld [vmem:[%s0 + $0x324] sm:$0xf]
    %v239 = vld [vmem:[%s0 + $0x328] sm:$0xf]
    %v240 = vld [vmem:[%s0 + $0x32c] sm:$0xf]
    %v241 = vld [vmem:[%s0 + $0x330] sm:$0xf]
    %v242 = vld [vmem:[%s0 + $0x334] sm:$0xf]
    %v243 = vld [vmem:[%s0 + $0x338] sm:$0xf]
    %v244 = vld [vmem:[%s0 + $0x33c] sm:$0xf]
    %v245 = vld [vmem:[%s0 + $0x340] sm:$0xf]
    %v246 = vld [vmem:[%s0 + $0x344] sm:$0xf]
    %v247 = vld [vmem:[%s0 + $0x348] sm:$0xf]
    %v248 = vld [vmem:[%s0 + $0x34c] sm:$0xf]
    %v249 = vld [vmem:[%s0 + $0x350] sm:$0xf]
    %v250 = vld [vmem:[%s0 + $0x354] sm:$0xf]
    %v251 = vld [vmem:[%s0 + $0x358] sm:$0xf]
    %v252 = vld [vmem:[%s0 + $0x35c] sm:$0xf]
    %v253 = vld [vmem:[%s0 + $0x360] sm:$0xf]
    %v254 = vld [vmem:[%s0 + $0x364] sm:$0xf]
    %v255 = vld [vmem:[%s0 + $0x368] sm:$0xf]
    %v256 = vld [vmem:[%s0 + $0x36c] sm:$0xf]
    %v257 = vld [vmem:[%s0 + $0x370] sm:$0xf]
    %v258 = vld [vmem:[%s0 + $0x374] sm:$0xf]
    %v259 = vld [vmem:[%s0 + $0x378] sm:$0xf]
    %v260 = vld [vmem:[%s0 + $0x37c] sm:$0xf]
    %v261 = vld [vmem:[%s0 + $0x380] sm:$0xf]
    %v262 = vld [vmem:[%s0 + $0x384] sm:$0xf]
    %v263 = vld [vmem:[%s0 + $0x388] sm:$0xf]
    %v264 = vld [vmem:[%s0 + $0x38c] sm:$0xf]
    %v265 = vld [vmem:[%s0 + $0x390] sm:$0xf]
    %v266 = vld [vmem:[%s0 + $0x394] sm:$0xf]
    %v267 = vld [vmem:[%s0 + $0x398] sm:$0xf]
    %v268 = vld [vmem:[%s0 + $0x39c] sm:$0xf]
    %v269 = vld [vmem:[%s0 + $0x3a0] sm:$0xf]
    %v270 = vld [vmem:[%s0 + $0x3a4] sm:$0xf]
    %v271 = vld [vmem:[%s0 + $0x3a8] sm:$0xf]
    %v272 = vld [vmem:[%s0 + $0x3ac] sm:$0xf]
    %v273 = vld [vmem:[%s0 + $0x3b0] sm:$0xf]
    %v274 = vld [vmem:[%s0 + $0x3b4] sm:$0xf]
    %v275 = vld [vmem:[%s0 + $0x3b8] sm:$0xf]
    %v276 = vld [vmem:[%s0 + $0x3bc] sm:$0xf]
    %v277 = vld [vmem:[%s0 + $0x3c0] sm:$0xf]
    %v278 = vld [vmem:[%s0 + $0x3c4] sm:$0xf]
    %v279 = vld [vmem:[%s0 + $0x3c8] sm:$0xf]
    %v280 = vld [vmem:[%s0 + $0x3cc] sm:$0xf]
    %v281 = vld [vmem:[%s0 + $0x3d0] sm:$0xf]
    %v282 = vld [vmem:[%s0 + $0x3d4] sm:$0xf]
    %v283 = vld [vmem:[%s0 + $0x3d8] sm:$0xf]
    %v284 = vld [vmem:[%s0 + $0x3dc] sm:$0xf]
    %v285 = vld [vmem:[%s0 + $0x3e0] sm:$0xf]
    %v286 = vld [vmem:[%s0 + $0x3e4] sm:$0xf]
    %v287 = vld [vmem:[%s0 + $0x3e8] sm:$0xf]
    %v288 = vld [vmem:[%s0 + $0x3ec] sm:$0xf]
    %v289 = vld [vmem:[%s0 + $0x3f0] sm:$0xf]
    %v290 = vld [vmem:[%s0 + $0x3f4] sm:$0xf]
    %v291 = vld [vmem:[%s0 + $0x3f8] sm:$0xf]
    %v292 = vld [vmem:[%s0 + $0x3fc] sm:$0xf]
    %v293 = vld [vmem:[%s1] sm:$0xf]
    %v294 = vld [vmem:[%s1 + $0x4] sm:$0xf]
    %v295 = vld [vmem:[%s1 + $0x8] sm:$0xf]
    %v296 = vld [vmem:[%s1 + $0xc] sm:$0x3]
    %v297 = vld [vmem:[%s2] sm:$0x1]
    %v299 = vlaneseq
    %v300 = vshrl.u32 %v299, 7
    %v301 = vsub.s32 0, %v300
    %v302 = vrot.slane %v297, %v301
    %v560 = vunpack.c.l.b16 %v37
    %v561 = vunpack.c.l.b16 %v38
    %v562 = vunpack.c.l.b16 %v39
    %v563 = vunpack.c.l.b16 %v40
    %v564 = vunpack.c.l.b16 %v41
    %v565 = vunpack.c.l.b16 %v42
    %v566 = vunpack.c.l.b16 %v43
    %v567 = vunpack.c.l.b16 %v44
    %v568 = vunpack.c.l.b16 %v45
    %v569 = vunpack.c.l.b16 %v46
    %v570 = vunpack.c.l.b16 %v47
    %v571 = vunpack.c.l.b16 %v48
    %v572 = vunpack.c.l.b16 %v49
    %v573 = vunpack.c.l.b16 %v50
    %v574 = vunpack.c.l.b16 %v51
    %v575 = vunpack.c.l.b16 %v52
    %v576 = vunpack.c.l.b16 %v53
    %v577 = vunpack.c.l.b16 %v54
    %v578 = vunpack.c.l.b16 %v55
    %v579 = vunpack.c.l.b16 %v56
    %v580 = vunpack.c.l.b16 %v57
    %v581 = vunpack.c.l.b16 %v58
    %v582 = vunpack.c.l.b16 %v59
    %v583 = vunpack.c.l.b16 %v60
    %v584 = vunpack.c.l.b16 %v61
    %v585 = vunpack.c.l.b16 %v62
    %v586 = vunpack.c.l.b16 %v63
    %v587 = vunpack.c.l.b16 %v64
    %v588 = vunpack.c.l.b16 %v65
    %v589 = vunpack.c.l.b16 %v66
    %v590 = vunpack.c.l.b16 %v67
    %v591 = vunpack.c.l.b16 %v68
    %v592 = vunpack.c.l.b16 %v69
    %v593 = vunpack.c.l.b16 %v70
    %v594 = vunpack.c.l.b16 %v71
    %v595 = vunpack.c.l.b16 %v72
    %v596 = vunpack.c.l.b16 %v73
    %v597 = vunpack.c.l.b16 %v74
    %v598 = vunpack.c.l.b16 %v75
    %v599 = vunpack.c.l.b16 %v76
    %v600 = vunpack.c.l.b16 %v77
    %v601 = vunpack.c.l.b16 %v78
    %v602 = vunpack.c.l.b16 %v79
    %v603 = vunpack.c.l.b16 %v80
    %v604 = vunpack.c.l.b16 %v81
    %v605 = vunpack.c.l.b16 %v82
    %v606 = vunpack.c.l.b16 %v83
    %v607 = vunpack.c.l.b16 %v84
    %v608 = vunpack.c.l.b16 %v85
    %v609 = vunpack.c.l.b16 %v86
    %v610 = vunpack.c.l.b16 %v87
    %v611 = vunpack.c.l.b16 %v88
    %v612 = vunpack.c.l.b16 %v89
    %v613 = vunpack.c.l.b16 %v90
    %v614 = vunpack.c.l.b16 %v91
    %v615 = vunpack.c.l.b16 %v92
    %v616 = vunpack.c.l.b16 %v93
    %v617 = vunpack.c.l.b16 %v94
    %v618 = vunpack.c.l.b16 %v95
    %v619 = vunpack.c.l.b16 %v96
    %v620 = vunpack.c.l.b16 %v97
    %v621 = vunpack.c.l.b16 %v98
    %v622 = vunpack.c.l.b16 %v99
    %v623 = vunpack.c.l.b16 %v100
    %v624 = vunpack.c.l.b16 %v101
    %v625 = vunpack.c.l.b16 %v102
    %v626 = vunpack.c.l.b16 %v103
    %v627 = vunpack.c.l.b16 %v104
    %v628 = vunpack.c.l.b16 %v105
    %v629 = vunpack.c.l.b16 %v106
    %v630 = vunpack.c.l.b16 %v107
    %v631 = vunpack.c.l.b16 %v108
    %v632 = vunpack.c.l.b16 %v109
    %v633 = vunpack.c.l.b16 %v110
    %v634 = vunpack.c.l.b16 %v111
    %v635 = vunpack.c.l.b16 %v112
    %v636 = vunpack.c.l.b16 %v113
    %v637 = vunpack.c.l.b16 %v114
    %v638 = vunpack.c.l.b16 %v115
    %v639 = vunpack.c.l.b16 %v116
    %v640 = vunpack.c.l.b16 %v117
    %v641 = vunpack.c.l.b16 %v118
    %v642 = vunpack.c.l.b16 %v119
    %v643 = vunpack.c.l.b16 %v120
    %v644 = vunpack.c.l.b16 %v121
    %v645 = vunpack.c.l.b16 %v122
    %v646 = vunpack.c.l.b16 %v123
    %v647 = vunpack.c.l.b16 %v124
    %v648 = vunpack.c.l.b16 %v125
    %v649 = vunpack.c.l.b16 %v126
    %v650 = vunpack.c.l.b16 %v127
    %v651 = vunpack.c.l.b16 %v128
    %v652 = vunpack.c.l.b16 %v129
    %v653 = vunpack.c.l.b16 %v130
    %v654 = vunpack.c.l.b16 %v131
    %v655 = vunpack.c.l.b16 %v132
    %v656 = vunpack.c.l.b16 %v133
    %v657 = vunpack.c.l.b16 %v134
    %v658 = vunpack.c.l.b16 %v135
    %v659 = vunpack.c.l.b16 %v136
    %v660 = vunpack.c.l.b16 %v137
    %v661 = vunpack.c.l.b16 %v138
    %v662 = vunpack.c.l.b16 %v139
    %v663 = vunpack.c.l.b16 %v140
    %v664 = vunpack.c.l.b16 %v141
    %v665 = vunpack.c.l.b16 %v142
    %v666 = vunpack.c.l.b16 %v143
    %v667 = vunpack.c.l.b16 %v144
    %v668 = vunpack.c.l.b16 %v145
    %v669 = vunpack.c.l.b16 %v146
    %v670 = vunpack.c.l.b16 %v147
    %v671 = vunpack.c.l.b16 %v148
    %v672 = vunpack.c.l.b16 %v149
    %v673 = vunpack.c.l.b16 %v150
    %v674 = vunpack.c.l.b16 %v151
    %v675 = vunpack.c.l.b16 %v152
    %v676 = vunpack.c.l.b16 %v153
    %v677 = vunpack.c.l.b16 %v154
    %v678 = vunpack.c.l.b16 %v155
    %v679 = vunpack.c.l.b16 %v156
    %v680 = vunpack.c.l.b16 %v157
    %v681 = vunpack.c.l.b16 %v158
    %v682 = vunpack.c.l.b16 %v159
    %v683 = vunpack.c.l.b16 %v160
    %v684 = vunpack.c.l.b16 %v161
    %v685 = vunpack.c.l.b16 %v162
    %v686 = vunpack.c.l.b16 %v163
    %v687 = vunpack.c.l.b16 %v164
    %v688 = vunpack.c.l.b16 %v165
    %v689 = vunpack.c.l.b16 %v166
    %v690 = vunpack.c.l.b16 %v167
    %v691 = vunpack.c.l.b16 %v168
    %v692 = vunpack.c.l.b16 %v169
    %v693 = vunpack.c.l.b16 %v170
    %v694 = vunpack.c.l.b16 %v171
    %v695 = vunpack.c.l.b16 %v172
    %v696 = vunpack.c.l.b16 %v173
    %v697 = vunpack.c.l.b16 %v174
    %v698 = vunpack.c.l.b16 %v175
    %v699 = vunpack.c.l.b16 %v176
    %v700 = vunpack.c.l.b16 %v177
    %v701 = vunpack.c.l.b16 %v178
    %v702 = vunpack.c.l.b16 %v179
    %v703 = vunpack.c.l.b16 %v180
    %v704 = vunpack.c.l.b16 %v181
    %v705 = vunpack.c.l.b16 %v182
    %v706 = vunpack.c.l.b16 %v183
    %v707 = vunpack.c.l.b16 %v184
    %v708 = vunpack.c.l.b16 %v185
    %v709 = vunpack.c.l.b16 %v186
    %v710 = vunpack.c.l.b16 %v187
    %v711 = vunpack.c.l.b16 %v188
    %v712 = vunpack.c.l.b16 %v189
    %v713 = vunpack.c.l.b16 %v190
    %v714 = vunpack.c.l.b16 %v191
    %v715 = vunpack.c.l.b16 %v192
    %v716 = vunpack.c.l.b16 %v193
    %v717 = vunpack.c.l.b16 %v194
    %v718 = vunpack.c.l.b16 %v195
    %v719 = vunpack.c.l.b16 %v196
    %v720 = vunpack.c.l.b16 %v197
    %v721 = vunpack.c.l.b16 %v198
    %v722 = vunpack.c.l.b16 %v199
    %v723 = vunpack.c.l.b16 %v200
    %v724 = vunpack.c.l.b16 %v201
    %v725 = vunpack.c.l.b16 %v202
    %v726 = vunpack.c.l.b16 %v203
    %v727 = vunpack.c.l.b16 %v204
    %v728 = vunpack.c.l.b16 %v205
    %v729 = vunpack.c.l.b16 %v206
    %v730 = vunpack.c.l.b16 %v207
    %v731 = vunpack.c.l.b16 %v208
    %v732 = vunpack.c.l.b16 %v209
    %v733 = vunpack.c.l.b16 %v210
    %v734 = vunpack.c.l.b16 %v211
    %v735 = vunpack.c.l.b16 %v212
    %v736 = vunpack.c.l.b16 %v213
    %v737 = vunpack.c.l.b16 %v214
    %v738 = vunpack.c.l.b16 %v215
    %v739 = vunpack.c.l.b16 %v216
    %v740 = vunpack.c.l.b16 %v217
    %v741 = vunpack.c.l.b16 %v218
    %v742 = vunpack.c.l.b16 %v219
    %v743 = vunpack.c.l.b16 %v220
    %v744 = vunpack.c.l.b16 %v221
    %v745 = vunpack.c.l.b16 %v222
    %v746 = vunpack.c.l.b16 %v223
    %v747 = vunpack.c.l.b16 %v224
    %v748 = vunpack.c.l.b16 %v225
    %v749 = vunpack.c.l.b16 %v226
    %v750 = vunpack.c.l.b16 %v227
    %v751 = vunpack.c.l.b16 %v228
    %v752 = vunpack.c.l.b16 %v229
    %v753 = vunpack.c.l.b16 %v230
    %v754 = vunpack.c.l.b16 %v231
    %v755 = vunpack.c.l.b16 %v232
    %v756 = vunpack.c.l.b16 %v233
    %v757 = vunpack.c.l.b16 %v234
    %v758 = vunpack.c.l.b16 %v235
    %v759 = vunpack.c.l.b16 %v236
    %v760 = vunpack.c.l.b16 %v237
    %v761 = vunpack.c.l.b16 %v238
    %v762 = vunpack.c.l.b16 %v239
    %v763 = vunpack.c.l.b16 %v240
    %v764 = vunpack.c.l.b16 %v241
    %v765 = vunpack.c.l.b16 %v242
    %v766 = vunpack.c.l.b16 %v243
    %v767 = vunpack.c.l.b16 %v244
    %v768 = vunpack.c.l.b16 %v245
    %v769 = vunpack.c.l.b16 %v246
    %v770 = vunpack.c.l.b16 %v247
    %v771 = vunpack.c.l.b16 %v248
    %v772 = vunpack.c.l.b16 %v249
    %v773 = vunpack.c.l.b16 %v250
    %v774 = vunpack.c.l.b16 %v251
    %v775 = vunpack.c.l.b16 %v252
    %v776 = vunpack.c.l.b16 %v253
    %v777 = vunpack.c.l.b16 %v254
    %v778 = vunpack.c.l.b16 %v255
    %v779 = vunpack.c.l.b16 %v256
    %v780 = vunpack.c.l.b16 %v257
    %v781 = vunpack.c.l.b16 %v258
    %v782 = vunpack.c.l.b16 %v259
    %v783 = vunpack.c.l.b16 %v260
    %v784 = vunpack.c.l.b16 %v261
    %v785 = vunpack.c.l.b16 %v262
    %v786 = vunpack.c.l.b16 %v263
    %v787 = vunpack.c.l.b16 %v264
    %v788 = vunpack.c.l.b16 %v265
    %v789 = vunpack.c.l.b16 %v266
    %v790 = vunpack.c.l.b16 %v267
    %v791 = vunpack.c.l.b16 %v268
    %v792 = vunpack.c.l.b16 %v269
    %v793 = vunpack.c.l.b16 %v270
    %v794 = vunpack.c.l.b16 %v271
    %v795 = vunpack.c.l.b16 %v272
    %v796 = vunpack.c.l.b16 %v273
    %v797 = vunpack.c.l.b16 %v274
    %v798 = vunpack.c.l.b16 %v275
    %v799 = vunpack.c.l.b16 %v276
    %v800 = vunpack.c.l.b16 %v277
    %v801 = vunpack.c.l.b16 %v278
    %v802 = vunpack.c.l.b16 %v279
    %v803 = vunpack.c.l.b16 %v280
    %v804 = vunpack.c.l.b16 %v281
    %v805 = vunpack.c.l.b16 %v282
    %v806 = vunpack.c.l.b16 %v283
    %v807 = vunpack.c.l.b16 %v284
    %v808 = vunpack.c.l.b16 %v285
    %v809 = vunpack.c.l.b16 %v286
    %v810 = vunpack.c.l.b16 %v287
    %v811 = vunpack.c.l.b16 %v288
    %v812 = vunpack.c.l.b16 %v289
    %v813 = vunpack.c.l.b16 %v290
    %v814 = vunpack.c.l.b16 %v291
    %v815 = vunpack.c.l.b16 %v292
    %v816 = vpack.c.b16 %v561, %v560
    %v817 = vpack.c.b16 %v563, %v562
    %v818 = vpack.c.b16 %v565, %v564
    %v819 = vpack.c.b16 %v567, %v566
    %v820 = vpack.c.b16 %v569, %v568
    %v821 = vpack.c.b16 %v571, %v570
    %v822 = vpack.c.b16 %v573, %v572
    %v823 = vpack.c.b16 %v575, %v574
    %v824 = vpack.c.b16 %v577, %v576
    %v825 = vpack.c.b16 %v579, %v578
    %v826 = vpack.c.b16 %v581, %v580
    %v827 = vpack.c.b16 %v583, %v582
    %v828 = vpack.c.b16 %v585, %v584
    %v829 = vpack.c.b16 %v587, %v586
    %v830 = vpack.c.b16 %v589, %v588
    %v831 = vpack.c.b16 %v591, %v590
    %v832 = vpack.c.b16 %v593, %v592
    %v833 = vpack.c.b16 %v595, %v594
    %v834 = vpack.c.b16 %v597, %v596
    %v835 = vpack.c.b16 %v599, %v598
    %v836 = vpack.c.b16 %v601, %v600
    %v837 = vpack.c.b16 %v603, %v602
    %v838 = vpack.c.b16 %v605, %v604
    %v839 = vpack.c.b16 %v607, %v606
    %v840 = vpack.c.b16 %v609, %v608
    %v841 = vpack.c.b16 %v611, %v610
    %v842 = vpack.c.b16 %v613, %v612
    %v843 = vpack.c.b16 %v615, %v614
    %v844 = vpack.c.b16 %v617, %v616
    %v845 = vpack.c.b16 %v619, %v618
    %v846 = vpack.c.b16 %v621, %v620
    %v847 = vpack.c.b16 %v623, %v622
    %v848 = vpack.c.b16 %v625, %v624
    %v849 = vpack.c.b16 %v627, %v626
    %v850 = vpack.c.b16 %v629, %v628
    %v851 = vpack.c.b16 %v631, %v630
    %v852 = vpack.c.b16 %v633, %v632
    %v853 = vpack.c.b16 %v635, %v634
    %v854 = vpack.c.b16 %v637, %v636
    %v855 = vpack.c.b16 %v639, %v638
    %v856 = vpack.c.b16 %v641, %v640
    %v857 = vpack.c.b16 %v643, %v642
    %v858 = vpack.c.b16 %v645, %v644
    %v859 = vpack.c.b16 %v647, %v646
    %v860 = vpack.c.b16 %v649, %v648
    %v861 = vpack.c.b16 %v651, %v650
    %v862 = vpack.c.b16 %v653, %v652
    %v863 = vpack.c.b16 %v655, %v654
    %v864 = vpack.c.b16 %v657, %v656
    %v865 = vpack.c.b16 %v659, %v658
    %v866 = vpack.c.b16 %v661, %v660
    %v867 = vpack.c.b16 %v663, %v662
    %v868 = vpack.c.b16 %v665, %v664
    %v869 = vpack.c.b16 %v667, %v666
    %v870 = vpack.c.b16 %v669, %v668
    %v871 = vpack.c.b16 %v671, %v670
    %v872 = vpack.c.b16 %v673, %v672
    %v873 = vpack.c.b16 %v675, %v674
    %v874 = vpack.c.b16 %v677, %v676
    %v875 = vpack.c.b16 %v679, %v678
    %v876 = vpack.c.b16 %v681, %v680
    %v877 = vpack.c.b16 %v683, %v682
    %v878 = vpack.c.b16 %v685, %v684
    %v879 = vpack.c.b16 %v687, %v686
    %v880 = vpack.c.b16 %v689, %v688
    %v881 = vpack.c.b16 %v691, %v690
    %v882 = vpack.c.b16 %v693, %v692
    %v883 = vpack.c.b16 %v695, %v694
    %v884 = vpack.c.b16 %v697, %v696
    %v885 = vpack.c.b16 %v699, %v698
    %v886 = vpack.c.b16 %v701, %v700
    %v887 = vpack.c.b16 %v703, %v702
    %v888 = vpack.c.b16 %v705, %v704
    %v889 = vpack.c.b16 %v707, %v706
    %v890 = vpack.c.b16 %v709, %v708
    %v891 = vpack.c.b16 %v711, %v710
    %v892 = vpack.c.b16 %v713, %v712
    %v893 = vpack.c.b16 %v715, %v714
    %v894 = vpack.c.b16 %v717, %v716
    %v895 = vpack.c.b16 %v719, %v718
    %v896 = vpack.c.b16 %v721, %v720
    %v897 = vpack.c.b16 %v723, %v722
    %v898 = vpack.c.b16 %v725, %v724
    %v899 = vpack.c.b16 %v727, %v726
    %v900 = vpack.c.b16 %v729, %v728
    %v901 = vpack.c.b16 %v731, %v730
    %v902 = vpack.c.b16 %v733, %v732
    %v903 = vpack.c.b16 %v735, %v734
    %v904 = vpack.c.b16 %v737, %v736
    %v905 = vpack.c.b16 %v739, %v738
    %v906 = vpack.c.b16 %v741, %v740
    %v907 = vpack.c.b16 %v743, %v742
    %v908 = vpack.c.b16 %v745, %v744
    %v909 = vpack.c.b16 %v747, %v746
    %v910 = vpack.c.b16 %v749, %v748
    %v911 = vpack.c.b16 %v751, %v750
    %v912 = vpack.c.b16 %v753, %v752
    %v913 = vpack.c.b16 %v755, %v754
    %v914 = vpack.c.b16 %v757, %v756
    %v915 = vpack.c.b16 %v759, %v758
    %v916 = vpack.c.b16 %v761, %v760
    %v917 = vpack.c.b16 %v763, %v762
    %v918 = vpack.c.b16 %v765, %v764
    %v919 = vpack.c.b16 %v767, %v766
    %v920 = vpack.c.b16 %v769, %v768
    %v921 = vpack.c.b16 %v771, %v770
    %v922 = vpack.c.b16 %v773, %v772
    %v923 = vpack.c.b16 %v775, %v774
    %v924 = vpack.c.b16 %v777, %v776
    %v925 = vpack.c.b16 %v779, %v778
    %v926 = vpack.c.b16 %v781, %v780
    %v927 = vpack.c.b16 %v783, %v782
    %v928 = vpack.c.b16 %v785, %v784
    %v929 = vpack.c.b16 %v787, %v786
    %v930 = vpack.c.b16 %v789, %v788
    %v931 = vpack.c.b16 %v791, %v790
    %v932 = vpack.c.b16 %v793, %v792
    %v933 = vpack.c.b16 %v795, %v794
    %v934 = vpack.c.b16 %v797, %v796
    %v935 = vpack.c.b16 %v799, %v798
    %v936 = vpack.c.b16 %v801, %v800
    %v937 = vpack.c.b16 %v803, %v802
    %v938 = vpack.c.b16 %v805, %v804
    %v939 = vpack.c.b16 %v807, %v806
    %v940 = vpack.c.b16 %v809, %v808
    %v941 = vpack.c.b16 %v811, %v810
    %v942 = vpack.c.b16 %v813, %v812
    %v943 = vpack.c.b16 %v815, %v814
    %v948 = vunpack.c.l.b16 %v293
    %v949 = vunpack.c.l.b16 %v294
    %v950 = vunpack.c.l.b16 %v295
    %v951 = vunpack.c.l.b16 %v296
    %v952 = vpack.c.b16 %v949, %v948
    %v953 = vpack.c.b16 %v951, %v950
    %vm955 = vcmask 220160
    %v957 = vsel %vm955, %v816, 0
    %v960 = vsel %vm955, %v817, 0
    %v963 = vsel %vm955, %v818, 0
    %v966 = vsel %vm955, %v819, 0
    %v969 = vsel %vm955, %v820, 0
    %v972 = vsel %vm955, %v821, 0
    %v975 = vsel %vm955, %v822, 0
    %v978 = vsel %vm955, %v823, 0
    %v981 = vsel %vm955, %v824, 0
    %v984 = vsel %vm955, %v825, 0
    %v987 = vsel %vm955, %v826, 0
    %v990 = vsel %vm955, %v827, 0
    %v993 = vsel %vm955, %v828, 0
    %v996 = vsel %vm955, %v829, 0
    %v999 = vsel %vm955, %v830, 0
    %v1002 = vsel %vm955, %v831, 0
    %v1005 = vsel %vm955, %v832, 0
    %v1008 = vsel %vm955, %v833, 0
    %v1011 = vsel %vm955, %v834, 0
    %v1014 = vsel %vm955, %v835, 0
    %v1017 = vsel %vm955, %v836, 0
    %v1020 = vsel %vm955, %v837, 0
    %v1023 = vsel %vm955, %v838, 0
    %v1026 = vsel %vm955, %v839, 0
    %v1029 = vsel %vm955, %v840, 0
    %v1032 = vsel %vm955, %v841, 0
    %v1035 = vsel %vm955, %v842, 0
    %v1038 = vsel %vm955, %v843, 0
    %v1041 = vsel %vm955, %v844, 0
    %v1044 = vsel %vm955, %v845, 0
    %v1047 = vsel %vm955, %v846, 0
    %v1050 = vsel %vm955, %v847, 0
    %v1053 = vsel %vm955, %v848, 0
    %v1056 = vsel %vm955, %v849, 0
    %v1059 = vsel %vm955, %v850, 0
    %v1062 = vsel %vm955, %v851, 0
    %v1065 = vsel %vm955, %v852, 0
    %v1068 = vsel %vm955, %v853, 0
    %v1071 = vsel %vm955, %v854, 0
    %v1074 = vsel %vm955, %v855, 0
    %v1077 = vsel %vm955, %v856, 0
    %v1080 = vsel %vm955, %v857, 0
    %v1083 = vsel %vm955, %v858, 0
    %v1086 = vsel %vm955, %v859, 0
    %v1089 = vsel %vm955, %v860, 0
    %v1092 = vsel %vm955, %v861, 0
    %v1095 = vsel %vm955, %v862, 0
    %v1098 = vsel %vm955, %v863, 0
    %v1101 = vsel %vm955, %v864, 0
    %v1104 = vsel %vm955, %v865, 0
    %v1107 = vsel %vm955, %v866, 0
    %v1110 = vsel %vm955, %v867, 0
    %v1113 = vsel %vm955, %v868, 0
    %v1116 = vsel %vm955, %v869, 0
    %v1119 = vsel %vm955, %v870, 0
    %v1122 = vsel %vm955, %v871, 0
    %v1125 = vsel %vm955, %v872, 0
    %v1128 = vsel %vm955, %v873, 0
    %v1131 = vsel %vm955, %v874, 0
    %v1134 = vsel %vm955, %v875, 0
    %v1137 = vsel %vm955, %v876, 0
    %v1140 = vsel %vm955, %v877, 0
    %v1143 = vsel %vm955, %v878, 0
    %v1146 = vsel %vm955, %v879, 0
    %v1149 = vsel %vm955, %v880, 0
    %v1152 = vsel %vm955, %v881, 0
    %v1155 = vsel %vm955, %v882, 0
    %v1158 = vsel %vm955, %v883, 0
    %v1161 = vsel %vm955, %v884, 0
    %v1164 = vsel %vm955, %v885, 0
    %v1167 = vsel %vm955, %v886, 0
    %v1170 = vsel %vm955, %v887, 0
    %v1173 = vsel %vm955, %v888, 0
    %v1176 = vsel %vm955, %v889, 0
    %v1179 = vsel %vm955, %v890, 0
    %v1182 = vsel %vm955, %v891, 0
    %v1185 = vsel %vm955, %v892, 0
    %v1188 = vsel %vm955, %v893, 0
    %v1191 = vsel %vm955, %v894, 0
    %v1194 = vsel %vm955, %v895, 0
    %v1197 = vsel %vm955, %v896, 0
    %v1200 = vsel %vm955, %v897, 0
    %v1203 = vsel %vm955, %v898, 0
    %v1206 = vsel %vm955, %v899, 0
    %v1209 = vsel %vm955, %v900, 0
    %v1212 = vsel %vm955, %v901, 0
    %v1215 = vsel %vm955, %v902, 0
    %v1218 = vsel %vm955, %v903, 0
    %v1221 = vsel %vm955, %v904, 0
    %v1224 = vsel %vm955, %v905, 0
    %v1227 = vsel %vm955, %v906, 0
    %v1230 = vsel %vm955, %v907, 0
    %v1233 = vsel %vm955, %v908, 0
    %v1236 = vsel %vm955, %v909, 0
    %v1239 = vsel %vm955, %v910, 0
    %v1242 = vsel %vm955, %v911, 0
    %v1245 = vsel %vm955, %v912, 0
    %v1248 = vsel %vm955, %v913, 0
    %v1251 = vsel %vm955, %v914, 0
    %v1254 = vsel %vm955, %v915, 0
    %v1257 = vsel %vm955, %v916, 0
    %v1260 = vsel %vm955, %v917, 0
    %v1263 = vsel %vm955, %v918, 0
    %v1266 = vsel %vm955, %v919, 0
    %v1269 = vsel %vm955, %v920, 0
    %v1272 = vsel %vm955, %v921, 0
    %v1275 = vsel %vm955, %v922, 0
    %v1278 = vsel %vm955, %v923, 0
    %v1281 = vsel %vm955, %v924, 0
    %v1284 = vsel %vm955, %v925, 0
    %v1287 = vsel %vm955, %v926, 0
    %v1290 = vsel %vm955, %v927, 0
    %v1293 = vsel %vm955, %v928, 0
    %v1296 = vsel %vm955, %v929, 0
    %v1299 = vsel %vm955, %v930, 0
    %v1302 = vsel %vm955, %v931, 0
    %v1305 = vsel %vm955, %v932, 0
    %v1308 = vsel %vm955, %v933, 0
    %v1311 = vsel %vm955, %v934, 0
    %v1314 = vsel %vm955, %v935, 0
    %v1317 = vsel %vm955, %v936, 0
    %v1320 = vsel %vm955, %v937, 0
    %v1323 = vsel %vm955, %v938, 0
    %v1326 = vsel %vm955, %v939, 0
    %v1329 = vsel %vm955, %v940, 0
    %v1332 = vsel %vm955, %v941, 0
    %v1335 = vsel %vm955, %v942, 0
    %v1338 = vsel %vm955, %v943, 0
    %vm1340 = vcmask 1044480
    %vm1341 = vcmask 1045504
    %v1342 = vsel %vm1340, 4294967295, 65535
    %v1343 = vsel %vm1341, %v1342, 0
    %v1345 = vand.u32 %v953, %v1343
    %1347 = vmatprep.subr.bf16.mxu0 0
    %1348 = vmatpush1.bf16.msra.mxu0 0
    %1349 = vmatprep.subr.bf16.mxu0 0
    %1350 = vmatpush1.bf16.msra.mxu0 0
    %1351 = vmatprep.subr.bf16.mxu0 0
    %1352 = vmatpush1.bf16.msra.mxu0 0
    %1353 = vmatprep.subr.bf16.mxu0 0
    %1354 = vmatpush1.bf16.msra.mxu0 0
    %1355 = vmatprep.subr.bf16.mxu0 0
    %1356 = vmatpush1.bf16.msra.mxu0 0
    %1357 = vmatprep.subr.bf16.mxu0 0
    %1358 = vmatpush1.bf16.msra.mxu0 0
    %1359 = vmatprep.subr.bf16.mxu0 0
    %1360 = vmatpush1.bf16.msra.mxu0 %v1345
    %1361 = vmatprep.subr.bf16.mxu0 0
    %1362 = vmatpush1.bf16.msra.mxu0 %v952
    %1363 = vmatprep.subr.bf16.mxu0 0
    %1364 = vmatpush2.bf16.msra.mxu0 0
    %1365 = vmatprep.subr.bf16.mxu0 0
    %1366 = vmatpush2.bf16.msra.mxu0 0
    %1367 = vmatprep.subr.bf16.mxu0 0
    %1368 = vmatpush2.bf16.msra.mxu0 0
    %1369 = vmatprep.subr.bf16.mxu0 0
    %1370 = vmatpush2.bf16.msra.mxu0 0
    %1371 = vmatprep.subr.bf16.mxu0 0
    %1372 = vmatpush2.bf16.msra.mxu0 0
    %1373 = vmatprep.subr.bf16.mxu0 0
    %1374 = vmatpush2.bf16.msra.mxu0 0
    %1375 = vmatprep.subr.bf16.mxu0 0
    %1376 = vmatpush2.bf16.msra.mxu0 0
    %1377 = vmatprep.subr.bf16.mxu0 0
    %1378 = vmatpush2.bf16.msra.mxu0 0
    %1379 = vmatprep.mubr.bf16.mxu0 0
    %1380 = vmatmul.mubr.bf16.gmra.mxu0 %v957
    %v1381 = vpop.f32.mrf.mxu0
    %v1382 = vadd.f32 %v302, %v1381
    %v1383 = vpop.f32.mrf.mxu0
    %v1384 = vpop.f32.mrf.mxu0
    %v1385 = vadd.f32 %v302, %v1384
    %v1386 = vpop.f32.mrf.mxu0
    %1387 = vmatprep.mubr.bf16.mxu0 0
    %1388 = vmatmul.mubr.bf16.gmra.mxu0 %v960
    %v1389 = vpop.f32.mrf.mxu0
    %v1390 = vadd.f32 %v302, %v1389
    %v1391 = vpop.f32.mrf.mxu0
    %v1392 = vpop.f32.mrf.mxu0
    %v1393 = vadd.f32 %v302, %v1392
    %v1394 = vpop.f32.mrf.mxu0
    %1395 = vmatprep.mubr.bf16.mxu0 0
    %1396 = vmatmul.mubr.bf16.gmra.mxu0 %v963
    %v1397 = vpop.f32.mrf.mxu0
    %v1398 = vadd.f32 %v302, %v1397
    %v1399 = vpop.f32.mrf.mxu0
    %v1400 = vpop.f32.mrf.mxu0
    %v1401 = vadd.f32 %v302, %v1400
    %v1402 = vpop.f32.mrf.mxu0
    %1403 = vmatprep.mubr.bf16.mxu0 0
    %1404 = vmatmul.mubr.bf16.gmra.mxu0 %v966
    %v1405 = vpop.f32.mrf.mxu0
    %v1406 = vadd.f32 %v302, %v1405
    %v1407 = vpop.f32.mrf.mxu0
    %v1408 = vpop.f32.mrf.mxu0
    %v1409 = vadd.f32 %v302, %v1408
    %v1410 = vpop.f32.mrf.mxu0
    %1411 = vmatprep.mubr.bf16.mxu0 0
    %1412 = vmatmul.mubr.bf16.gmra.mxu0 %v969
    %v1413 = vpop.f32.mrf.mxu0
    %v1414 = vadd.f32 %v302, %v1413
    %v1415 = vpop.f32.mrf.mxu0
    %v1416 = vpop.f32.mrf.mxu0
    %v1417 = vadd.f32 %v302, %v1416
    %v1418 = vpop.f32.mrf.mxu0
    %1419 = vmatprep.mubr.bf16.mxu0 0
    %1420 = vmatmul.mubr.bf16.gmra.mxu0 %v972
    %v1421 = vpop.f32.mrf.mxu0
    %v1422 = vadd.f32 %v302, %v1421
    %v1423 = vpop.f32.mrf.mxu0
    %v1424 = vpop.f32.mrf.mxu0
    %v1425 = vadd.f32 %v302, %v1424
    %v1426 = vpop.f32.mrf.mxu0
    %1427 = vmatprep.mubr.bf16.mxu0 0
    %1428 = vmatmul.mubr.bf16.gmra.mxu0 %v975
    %v1429 = vpop.f32.mrf.mxu0
    %v1430 = vadd.f32 %v302, %v1429
    %v1431 = vpop.f32.mrf.mxu0
    %v1432 = vpop.f32.mrf.mxu0
    %v1433 = vadd.f32 %v302, %v1432
    %v1434 = vpop.f32.mrf.mxu0
    %1435 = vmatprep.mubr.bf16.mxu0 0
    %1436 = vmatmul.mubr.bf16.gmra.mxu0 %v978
    %v1437 = vpop.f32.mrf.mxu0
    %v1438 = vadd.f32 %v302, %v1437
    %v1439 = vpop.f32.mrf.mxu0
    %v1440 = vpop.f32.mrf.mxu0
    %v1441 = vadd.f32 %v302, %v1440
    %v1442 = vpop.f32.mrf.mxu0
    %1443 = vmatprep.mubr.bf16.mxu0 0
    %1444 = vmatmul.mubr.bf16.gmra.mxu0 %v981
    %v1445 = vpop.f32.mrf.mxu0
    %v1446 = vadd.f32 %v302, %v1445
    %v1447 = vpop.f32.mrf.mxu0
    %v1448 = vpop.f32.mrf.mxu0
    %v1449 = vadd.f32 %v302, %v1448
    %v1450 = vpop.f32.mrf.mxu0
    %1451 = vmatprep.mubr.bf16.mxu0 0
    %1452 = vmatmul.mubr.bf16.gmra.mxu0 %v984
    %v1453 = vpop.f32.mrf.mxu0
    %v1454 = vadd.f32 %v302, %v1453
    %v1455 = vpop.f32.mrf.mxu0
    %v1456 = vpop.f32.mrf.mxu0
    %v1457 = vadd.f32 %v302, %v1456
    %v1458 = vpop.f32.mrf.mxu0
    %1459 = vmatprep.mubr.bf16.mxu0 0
    %1460 = vmatmul.mubr.bf16.gmra.mxu0 %v987
    %v1461 = vpop.f32.mrf.mxu0
    %v1462 = vadd.f32 %v302, %v1461
    %v1463 = vpop.f32.mrf.mxu0
    %v1464 = vpop.f32.mrf.mxu0
    %v1465 = vadd.f32 %v302, %v1464
    %v1466 = vpop.f32.mrf.mxu0
    %1467 = vmatprep.mubr.bf16.mxu0 0
    %1468 = vmatmul.mubr.bf16.gmra.mxu0 %v990
    %v1469 = vpop.f32.mrf.mxu0
    %v1470 = vadd.f32 %v302, %v1469
    %v1471 = vpop.f32.mrf.mxu0
    %v1472 = vpop.f32.mrf.mxu0
    %v1473 = vadd.f32 %v302, %v1472
    %v1474 = vpop.f32.mrf.mxu0
    %1475 = vmatprep.mubr.bf16.mxu0 0
    %1476 = vmatmul.mubr.bf16.gmra.mxu0 %v993
    %v1477 = vpop.f32.mrf.mxu0
    %v1478 = vadd.f32 %v302, %v1477
    %v1479 = vpop.f32.mrf.mxu0
    %v1480 = vpop.f32.mrf.mxu0
    %v1481 = vadd.f32 %v302, %v1480
    %v1482 = vpop.f32.mrf.mxu0
    %1483 = vmatprep.mubr.bf16.mxu0 0
    %1484 = vmatmul.mubr.bf16.gmra.mxu0 %v996
    %v1485 = vpop.f32.mrf.mxu0
    %v1486 = vadd.f32 %v302, %v1485
    %v1487 = vpop.f32.mrf.mxu0
    %v1488 = vpop.f32.mrf.mxu0
    %v1489 = vadd.f32 %v302, %v1488
    %v1490 = vpop.f32.mrf.mxu0
    %1491 = vmatprep.mubr.bf16.mxu0 0
    %1492 = vmatmul.mubr.bf16.gmra.mxu0 %v999
    %v1493 = vpop.f32.mrf.mxu0
    %v1494 = vadd.f32 %v302, %v1493
    %v1495 = vpop.f32.mrf.mxu0
    %v1496 = vpop.f32.mrf.mxu0
    %v1497 = vadd.f32 %v302, %v1496
    %v1498 = vpop.f32.mrf.mxu0
    %1499 = vmatprep.mubr.bf16.mxu0 0
    %1500 = vmatmul.mubr.bf16.gmra.mxu0 %v1002
    %v1501 = vpop.f32.mrf.mxu0
    %v1502 = vadd.f32 %v302, %v1501
    %v1503 = vpop.f32.mrf.mxu0
    %v1504 = vpop.f32.mrf.mxu0
    %v1505 = vadd.f32 %v302, %v1504
    %v1506 = vpop.f32.mrf.mxu0
    %1507 = vmatprep.mubr.bf16.mxu0 0
    %1508 = vmatmul.mubr.bf16.gmra.mxu0 %v1005
    %v1509 = vpop.f32.mrf.mxu0
    %v1510 = vadd.f32 %v302, %v1509
    %v1511 = vpop.f32.mrf.mxu0
    %v1512 = vpop.f32.mrf.mxu0
    %v1513 = vadd.f32 %v302, %v1512
    %v1514 = vpop.f32.mrf.mxu0
    %1515 = vmatprep.mubr.bf16.mxu0 0
    %1516 = vmatmul.mubr.bf16.gmra.mxu0 %v1008
    %v1517 = vpop.f32.mrf.mxu0
    %v1518 = vadd.f32 %v302, %v1517
    %v1519 = vpop.f32.mrf.mxu0
    %v1520 = vpop.f32.mrf.mxu0
    %v1521 = vadd.f32 %v302, %v1520
    %v1522 = vpop.f32.mrf.mxu0
    %1523 = vmatprep.mubr.bf16.mxu0 0
    %1524 = vmatmul.mubr.bf16.gmra.mxu0 %v1011
    %v1525 = vpop.f32.mrf.mxu0
    %v1526 = vadd.f32 %v302, %v1525
    %v1527 = vpop.f32.mrf.mxu0
    %v1528 = vpop.f32.mrf.mxu0
    %v1529 = vadd.f32 %v302, %v1528
    %v1530 = vpop.f32.mrf.mxu0
    %1531 = vmatprep.mubr.bf16.mxu0 0
    %1532 = vmatmul.mubr.bf16.gmra.mxu0 %v1014
    %v1533 = vpop.f32.mrf.mxu0
    %v1534 = vadd.f32 %v302, %v1533
    %v1535 = vpop.f32.mrf.mxu0
    %v1536 = vpop.f32.mrf.mxu0
    %v1537 = vadd.f32 %v302, %v1536
    %v1538 = vpop.f32.mrf.mxu0
    %1539 = vmatprep.mubr.bf16.mxu0 0
    %1540 = vmatmul.mubr.bf16.gmra.mxu0 %v1017
    %v1541 = vpop.f32.mrf.mxu0
    %v1542 = vadd.f32 %v302, %v1541
    %v1543 = vpop.f32.mrf.mxu0
    %v1544 = vpop.f32.mrf.mxu0
    %v1545 = vadd.f32 %v302, %v1544
    %v1546 = vpop.f32.mrf.mxu0
    %1547 = vmatprep.mubr.bf16.mxu0 0
    %1548 = vmatmul.mubr.bf16.gmra.mxu0 %v1020
    %v1549 = vpop.f32.mrf.mxu0
    %v1550 = vadd.f32 %v302, %v1549
    %v1551 = vpop.f32.mrf.mxu0
    %v1552 = vpop.f32.mrf.mxu0
    %v1553 = vadd.f32 %v302, %v1552
    %v1554 = vpop.f32.mrf.mxu0
    %1555 = vmatprep.mubr.bf16.mxu0 0
    %1556 = vmatmul.mubr.bf16.gmra.mxu0 %v1023
    %v1557 = vpop.f32.mrf.mxu0
    %v1558 = vadd.f32 %v302, %v1557
    %v1559 = vpop.f32.mrf.mxu0
    %v1560 = vpop.f32.mrf.mxu0
    %v1561 = vadd.f32 %v302, %v1560
    %v1562 = vpop.f32.mrf.mxu0
    %1563 = vmatprep.mubr.bf16.mxu0 0
    %1564 = vmatmul.mubr.bf16.gmra.mxu0 %v1026
    %v1565 = vpop.f32.mrf.mxu0
    %v1566 = vadd.f32 %v302, %v1565
    %v1567 = vpop.f32.mrf.mxu0
    %v1568 = vpop.f32.mrf.mxu0
    %v1569 = vadd.f32 %v302, %v1568
    %v1570 = vpop.f32.mrf.mxu0
    %1571 = vmatprep.mubr.bf16.mxu0 0
    %1572 = vmatmul.mubr.bf16.gmra.mxu0 %v1029
    %v1573 = vpop.f32.mrf.mxu0
    %v1574 = vadd.f32 %v302, %v1573
    %v1575 = vpop.f32.mrf.mxu0
    %v1576 = vpop.f32.mrf.mxu0
    %v1577 = vadd.f32 %v302, %v1576
    %v1578 = vpop.f32.mrf.mxu0
    %1579 = vmatprep.mubr.bf16.mxu0 0
    %1580 = vmatmul.mubr.bf16.gmra.mxu0 %v1032
    %v1581 = vpop.f32.mrf.mxu0
    %v1582 = vadd.f32 %v302, %v1581
    %v1583 = vpop.f32.mrf.mxu0
    %v1584 = vpop.f32.mrf.mxu0
    %v1585 = vadd.f32 %v302, %v1584
    %v1586 = vpop.f32.mrf.mxu0
    %1587 = vmatprep.mubr.bf16.mxu0 0
    %1588 = vmatmul.mubr.bf16.gmra.mxu0 %v1035
    %v1589 = vpop.f32.mrf.mxu0
    %v1590 = vadd.f32 %v302, %v1589
    %v1591 = vpop.f32.mrf.mxu0
    %v1592 = vpop.f32.mrf.mxu0
    %v1593 = vadd.f32 %v302, %v1592
    %v1594 = vpop.f32.mrf.mxu0
    %1595 = vmatprep.mubr.bf16.mxu0 0
    %1596 = vmatmul.mubr.bf16.gmra.mxu0 %v1038
    %v1597 = vpop.f32.mrf.mxu0
    %v1598 = vadd.f32 %v302, %v1597
    %v1599 = vpop.f32.mrf.mxu0
    %v1600 = vpop.f32.mrf.mxu0
    %v1601 = vadd.f32 %v302, %v1600
    %v1602 = vpop.f32.mrf.mxu0
    %1603 = vmatprep.mubr.bf16.mxu0 0
    %1604 = vmatmul.mubr.bf16.gmra.mxu0 %v1041
    %v1605 = vpop.f32.mrf.mxu0
    %v1606 = vadd.f32 %v302, %v1605
    %v1607 = vpop.f32.mrf.mxu0
    %v1608 = vpop.f32.mrf.mxu0
    %v1609 = vadd.f32 %v302, %v1608
    %v1610 = vpop.f32.mrf.mxu0
    %1611 = vmatprep.mubr.bf16.mxu0 0
    %1612 = vmatmul.mubr.bf16.gmra.mxu0 %v1044
    %v1613 = vpop.f32.mrf.mxu0
    %v1614 = vadd.f32 %v302, %v1613
    %v1615 = vpop.f32.mrf.mxu0
    %v1616 = vpop.f32.mrf.mxu0
    %v1617 = vadd.f32 %v302, %v1616
    %v1618 = vpop.f32.mrf.mxu0
    %1619 = vmatprep.mubr.bf16.mxu0 0
    %1620 = vmatmul.mubr.bf16.gmra.mxu0 %v1047
    %v1621 = vpop.f32.mrf.mxu0
    %v1622 = vadd.f32 %v302, %v1621
    %v1623 = vpop.f32.mrf.mxu0
    %v1624 = vpop.f32.mrf.mxu0
    %v1625 = vadd.f32 %v302, %v1624
    %v1626 = vpop.f32.mrf.mxu0
    %1627 = vmatprep.mubr.bf16.mxu0 0
    %1628 = vmatmul.mubr.bf16.gmra.mxu0 %v1050
    %v1629 = vpop.f32.mrf.mxu0
    %v1630 = vadd.f32 %v302, %v1629
    %v1631 = vpop.f32.mrf.mxu0
    %v1632 = vpop.f32.mrf.mxu0
    %v1633 = vadd.f32 %v302, %v1632
    %v1634 = vpop.f32.mrf.mxu0
    %1635 = vmatprep.mubr.bf16.mxu0 0
    %1636 = vmatmul.mubr.bf16.gmra.mxu0 %v1053
    %v1637 = vpop.f32.mrf.mxu0
    %v1638 = vadd.f32 %v302, %v1637
    %v1639 = vpop.f32.mrf.mxu0
    %v1640 = vpop.f32.mrf.mxu0
    %v1641 = vadd.f32 %v302, %v1640
    %v1642 = vpop.f32.mrf.mxu0
    %1643 = vmatprep.mubr.bf16.mxu0 0
    %1644 = vmatmul.mubr.bf16.gmra.mxu0 %v1056
    %v1645 = vpop.f32.mrf.mxu0
    %v1646 = vadd.f32 %v302, %v1645
    %v1647 = vpop.f32.mrf.mxu0
    %v1648 = vpop.f32.mrf.mxu0
    %v1649 = vadd.f32 %v302, %v1648
    %v1650 = vpop.f32.mrf.mxu0
    %1651 = vmatprep.mubr.bf16.mxu0 0
    %1652 = vmatmul.mubr.bf16.gmra.mxu0 %v1059
    %v1653 = vpop.f32.mrf.mxu0
    %v1654 = vadd.f32 %v302, %v1653
    %v1655 = vpop.f32.mrf.mxu0
    %v1656 = vpop.f32.mrf.mxu0
    %v1657 = vadd.f32 %v302, %v1656
    %v1658 = vpop.f32.mrf.mxu0
    %1659 = vmatprep.mubr.bf16.mxu0 0
    %1660 = vmatmul.mubr.bf16.gmra.mxu0 %v1062
    %v1661 = vpop.f32.mrf.mxu0
    %v1662 = vadd.f32 %v302, %v1661
    %v1663 = vpop.f32.mrf.mxu0
    %v1664 = vpop.f32.mrf.mxu0
    %v1665 = vadd.f32 %v302, %v1664
    %v1666 = vpop.f32.mrf.mxu0
    %1667 = vmatprep.mubr.bf16.mxu0 0
    %1668 = vmatmul.mubr.bf16.gmra.mxu0 %v1065
    %v1669 = vpop.f32.mrf.mxu0
    %v1670 = vadd.f32 %v302, %v1669
    %v1671 = vpop.f32.mrf.mxu0
    %v1672 = vpop.f32.mrf.mxu0
    %v1673 = vadd.f32 %v302, %v1672
    %v1674 = vpop.f32.mrf.mxu0
    %1675 = vmatprep.mubr.bf16.mxu0 0
    %1676 = vmatmul.mubr.bf16.gmra.mxu0 %v1068
    %v1677 = vpop.f32.mrf.mxu0
    %v1678 = vadd.f32 %v302, %v1677
    %v1679 = vpop.f32.mrf.mxu0
    %v1680 = vpop.f32.mrf.mxu0
    %v1681 = vadd.f32 %v302, %v1680
    %v1682 = vpop.f32.mrf.mxu0
    %1683 = vmatprep.mubr.bf16.mxu0 0
    %1684 = vmatmul.mubr.bf16.gmra.mxu0 %v1071
    %v1685 = vpop.f32.mrf.mxu0
    %v1686 = vadd.f32 %v302, %v1685
    %v1687 = vpop.f32.mrf.mxu0
    %v1688 = vpop.f32.mrf.mxu0
    %v1689 = vadd.f32 %v302, %v1688
    %v1690 = vpop.f32.mrf.mxu0
    %1691 = vmatprep.mubr.bf16.mxu0 0
    %1692 = vmatmul.mubr.bf16.gmra.mxu0 %v1074
    %v1693 = vpop.f32.mrf.mxu0
    %v1694 = vadd.f32 %v302, %v1693
    %v1695 = vpop.f32.mrf.mxu0
    %v1696 = vpop.f32.mrf.mxu0
    %v1697 = vadd.f32 %v302, %v1696
    %v1698 = vpop.f32.mrf.mxu0
    %1699 = vmatprep.mubr.bf16.mxu0 0
    %1700 = vmatmul.mubr.bf16.gmra.mxu0 %v1077
    %v1701 = vpop.f32.mrf.mxu0
    %v1702 = vadd.f32 %v302, %v1701
    %v1703 = vpop.f32.mrf.mxu0
    %v1704 = vpop.f32.mrf.mxu0
    %v1705 = vadd.f32 %v302, %v1704
    %v1706 = vpop.f32.mrf.mxu0
    %1707 = vmatprep.mubr.bf16.mxu0 0
    %1708 = vmatmul.mubr.bf16.gmra.mxu0 %v1080
    %v1709 = vpop.f32.mrf.mxu0
    %v1710 = vadd.f32 %v302, %v1709
    %v1711 = vpop.f32.mrf.mxu0
    %v1712 = vpop.f32.mrf.mxu0
    %v1713 = vadd.f32 %v302, %v1712
    %v1714 = vpop.f32.mrf.mxu0
    %1715 = vmatprep.mubr.bf16.mxu0 0
    %1716 = vmatmul.mubr.bf16.gmra.mxu0 %v1083
    %v1717 = vpop.f32.mrf.mxu0
    %v1718 = vadd.f32 %v302, %v1717
    %v1719 = vpop.f32.mrf.mxu0
    %v1720 = vpop.f32.mrf.mxu0
    %v1721 = vadd.f32 %v302, %v1720
    %v1722 = vpop.f32.mrf.mxu0
    %1723 = vmatprep.mubr.bf16.mxu0 0
    %1724 = vmatmul.mubr.bf16.gmra.mxu0 %v1086
    %v1725 = vpop.f32.mrf.mxu0
    %v1726 = vadd.f32 %v302, %v1725
    %v1727 = vpop.f32.mrf.mxu0
    %v1728 = vpop.f32.mrf.mxu0
    %v1729 = vadd.f32 %v302, %v1728
    %v1730 = vpop.f32.mrf.mxu0
    %1731 = vmatprep.mubr.bf16.mxu0 0
    %1732 = vmatmul.mubr.bf16.gmra.mxu0 %v1089
    %v1733 = vpop.f32.mrf.mxu0
    %v1734 = vadd.f32 %v302, %v1733
    %v1735 = vpop.f32.mrf.mxu0
    %v1736 = vpop.f32.mrf.mxu0
    %v1737 = vadd.f32 %v302, %v1736
    %v1738 = vpop.f32.mrf.mxu0
    %1739 = vmatprep.mubr.bf16.mxu0 0
    %1740 = vmatmul.mubr.bf16.gmra.mxu0 %v1092
    %v1741 = vpop.f32.mrf.mxu0
    %v1742 = vadd.f32 %v302, %v1741
    %v1743 = vpop.f32.mrf.mxu0
    %v1744 = vpop.f32.mrf.mxu0
    %v1745 = vadd.f32 %v302, %v1744
    %v1746 = vpop.f32.mrf.mxu0
    %1747 = vmatprep.mubr.bf16.mxu0 0
    %1748 = vmatmul.mubr.bf16.gmra.mxu0 %v1095
    %v1749 = vpop.f32.mrf.mxu0
    %v1750 = vadd.f32 %v302, %v1749
    %v1751 = vpop.f32.mrf.mxu0
    %v1752 = vpop.f32.mrf.mxu0
    %v1753 = vadd.f32 %v302, %v1752
    %v1754 = vpop.f32.mrf.mxu0
    %1755 = vmatprep.mubr.bf16.mxu0 0
    %1756 = vmatmul.mubr.bf16.gmra.mxu0 %v1098
    %v1757 = vpop.f32.mrf.mxu0
    %v1758 = vadd.f32 %v302, %v1757
    %v1759 = vpop.f32.mrf.mxu0
    %v1760 = vpop.f32.mrf.mxu0
    %v1761 = vadd.f32 %v302, %v1760
    %v1762 = vpop.f32.mrf.mxu0
    %1763 = vmatprep.mubr.bf16.mxu0 0
    %1764 = vmatmul.mubr.bf16.gmra.mxu0 %v1101
    %v1765 = vpop.f32.mrf.mxu0
    %v1766 = vadd.f32 %v302, %v1765
    %v1767 = vpop.f32.mrf.mxu0
    %v1768 = vpop.f32.mrf.mxu0
    %v1769 = vadd.f32 %v302, %v1768
    %v1770 = vpop.f32.mrf.mxu0
    %1771 = vmatprep.mubr.bf16.mxu0 0
    %1772 = vmatmul.mubr.bf16.gmra.mxu0 %v1104
    %v1773 = vpop.f32.mrf.mxu0
    %v1774 = vadd.f32 %v302, %v1773
    %v1775 = vpop.f32.mrf.mxu0
    %v1776 = vpop.f32.mrf.mxu0
    %v1777 = vadd.f32 %v302, %v1776
    %v1778 = vpop.f32.mrf.mxu0
    %1779 = vmatprep.mubr.bf16.mxu0 0
    %1780 = vmatmul.mubr.bf16.gmra.mxu0 %v1107
    %v1781 = vpop.f32.mrf.mxu0
    %v1782 = vadd.f32 %v302, %v1781
    %v1783 = vpop.f32.mrf.mxu0
    %v1784 = vpop.f32.mrf.mxu0
    %v1785 = vadd.f32 %v302, %v1784
    %v1786 = vpop.f32.mrf.mxu0
    %1787 = vmatprep.mubr.bf16.mxu0 0
    %1788 = vmatmul.mubr.bf16.gmra.mxu0 %v1110
    %v1789 = vpop.f32.mrf.mxu0
    %v1790 = vadd.f32 %v302, %v1789
    %v1791 = vpop.f32.mrf.mxu0
    %v1792 = vpop.f32.mrf.mxu0
    %v1793 = vadd.f32 %v302, %v1792
    %v1794 = vpop.f32.mrf.mxu0
    %1795 = vmatprep.mubr.bf16.mxu0 0
    %1796 = vmatmul.mubr.bf16.gmra.mxu0 %v1113
    %v1797 = vpop.f32.mrf.mxu0
    %v1798 = vadd.f32 %v302, %v1797
    %v1799 = vpop.f32.mrf.mxu0
    %v1800 = vpop.f32.mrf.mxu0
    %v1801 = vadd.f32 %v302, %v1800
    %v1802 = vpop.f32.mrf.mxu0
    %1803 = vmatprep.mubr.bf16.mxu0 0
    %1804 = vmatmul.mubr.bf16.gmra.mxu0 %v1116
    %v1805 = vpop.f32.mrf.mxu0
    %v1806 = vadd.f32 %v302, %v1805
    %v1807 = vpop.f32.mrf.mxu0
    %v1808 = vpop.f32.mrf.mxu0
    %v1809 = vadd.f32 %v302, %v1808
    %v1810 = vpop.f32.mrf.mxu0
    %1811 = vmatprep.mubr.bf16.mxu0 0
    %1812 = vmatmul.mubr.bf16.gmra.mxu0 %v1119
    %v1813 = vpop.f32.mrf.mxu0
    %v1814 = vadd.f32 %v302, %v1813
    %v1815 = vpop.f32.mrf.mxu0
    %v1816 = vpop.f32.mrf.mxu0
    %v1817 = vadd.f32 %v302, %v1816
    %v1818 = vpop.f32.mrf.mxu0
    %1819 = vmatprep.mubr.bf16.mxu0 0
    %1820 = vmatmul.mubr.bf16.gmra.mxu0 %v1122
    %v1821 = vpop.f32.mrf.mxu0
    %v1822 = vadd.f32 %v302, %v1821
    %v1823 = vpop.f32.mrf.mxu0
    %v1824 = vpop.f32.mrf.mxu0
    %v1825 = vadd.f32 %v302, %v1824
    %v1826 = vpop.f32.mrf.mxu0
    %1827 = vmatprep.mubr.bf16.mxu0 0
    %1828 = vmatmul.mubr.bf16.gmra.mxu0 %v1125
    %v1829 = vpop.f32.mrf.mxu0
    %v1830 = vadd.f32 %v302, %v1829
    %v1831 = vpop.f32.mrf.mxu0
    %v1832 = vpop.f32.mrf.mxu0
    %v1833 = vadd.f32 %v302, %v1832
    %v1834 = vpop.f32.mrf.mxu0
    %1835 = vmatprep.mubr.bf16.mxu0 0
    %1836 = vmatmul.mubr.bf16.gmra.mxu0 %v1128
    %v1837 = vpop.f32.mrf.mxu0
    %v1838 = vadd.f32 %v302, %v1837
    %v1839 = vpop.f32.mrf.mxu0
    %v1840 = vpop.f32.mrf.mxu0
    %v1841 = vadd.f32 %v302, %v1840
    %v1842 = vpop.f32.mrf.mxu0
    %1843 = vmatprep.mubr.bf16.mxu0 0
    %1844 = vmatmul.mubr.bf16.gmra.mxu0 %v1131
    %v1845 = vpop.f32.mrf.mxu0
    %v1846 = vadd.f32 %v302, %v1845
    %v1847 = vpop.f32.mrf.mxu0
    %v1848 = vpop.f32.mrf.mxu0
    %v1849 = vadd.f32 %v302, %v1848
    %v1850 = vpop.f32.mrf.mxu0
    %1851 = vmatprep.mubr.bf16.mxu0 0
    %1852 = vmatmul.mubr.bf16.gmra.mxu0 %v1134
    %v1853 = vpop.f32.mrf.mxu0
    %v1854 = vadd.f32 %v302, %v1853
    %v1855 = vpop.f32.mrf.mxu0
    %v1856 = vpop.f32.mrf.mxu0
    %v1857 = vadd.f32 %v302, %v1856
    %v1858 = vpop.f32.mrf.mxu0
    %1859 = vmatprep.mubr.bf16.mxu0 0
    %1860 = vmatmul.mubr.bf16.gmra.mxu0 %v1137
    %v1861 = vpop.f32.mrf.mxu0
    %v1862 = vadd.f32 %v302, %v1861
    %v1863 = vpop.f32.mrf.mxu0
    %v1864 = vpop.f32.mrf.mxu0
    %v1865 = vadd.f32 %v302, %v1864
    %v1866 = vpop.f32.mrf.mxu0
    %1867 = vmatprep.mubr.bf16.mxu0 0
    %1868 = vmatmul.mubr.bf16.gmra.mxu0 %v1140
    %v1869 = vpop.f32.mrf.mxu0
    %v1870 = vadd.f32 %v302, %v1869
    %v1871 = vpop.f32.mrf.mxu0
    %v1872 = vpop.f32.mrf.mxu0
    %v1873 = vadd.f32 %v302, %v1872
    %v1874 = vpop.f32.mrf.mxu0
    %1875 = vmatprep.mubr.bf16.mxu0 0
    %1876 = vmatmul.mubr.bf16.gmra.mxu0 %v1143
    %v1877 = vpop.f32.mrf.mxu0
    %v1878 = vadd.f32 %v302, %v1877
    %v1879 = vpop.f32.mrf.mxu0
    %v1880 = vpop.f32.mrf.mxu0
    %v1881 = vadd.f32 %v302, %v1880
    %v1882 = vpop.f32.mrf.mxu0
    %1883 = vmatprep.mubr.bf16.mxu0 0
    %1884 = vmatmul.mubr.bf16.gmra.mxu0 %v1146
    %v1885 = vpop.f32.mrf.mxu0
    %v1886 = vadd.f32 %v302, %v1885
    %v1887 = vpop.f32.mrf.mxu0
    %v1888 = vpop.f32.mrf.mxu0
    %v1889 = vadd.f32 %v302, %v1888
    %v1890 = vpop.f32.mrf.mxu0
    %1891 = vmatprep.mubr.bf16.mxu0 0
    %1892 = vmatmul.mubr.bf16.gmra.mxu0 %v1149
    %v1893 = vpop.f32.mrf.mxu0
    %v1894 = vadd.f32 %v302, %v1893
    %v1895 = vpop.f32.mrf.mxu0
    %v1896 = vpop.f32.mrf.mxu0
    %v1897 = vadd.f32 %v302, %v1896
    %v1898 = vpop.f32.mrf.mxu0
    %1899 = vmatprep.mubr.bf16.mxu0 0
    %1900 = vmatmul.mubr.bf16.gmra.mxu0 %v1152
    %v1901 = vpop.f32.mrf.mxu0
    %v1902 = vadd.f32 %v302, %v1901
    %v1903 = vpop.f32.mrf.mxu0
    %v1904 = vpop.f32.mrf.mxu0
    %v1905 = vadd.f32 %v302, %v1904
    %v1906 = vpop.f32.mrf.mxu0
    %1907 = vmatprep.mubr.bf16.mxu0 0
    %1908 = vmatmul.mubr.bf16.gmra.mxu0 %v1155
    %v1909 = vpop.f32.mrf.mxu0
    %v1910 = vadd.f32 %v302, %v1909
    %v1911 = vpop.f32.mrf.mxu0
    %v1912 = vpop.f32.mrf.mxu0
    %v1913 = vadd.f32 %v302, %v1912
    %v1914 = vpop.f32.mrf.mxu0
    %1915 = vmatprep.mubr.bf16.mxu0 0
    %1916 = vmatmul.mubr.bf16.gmra.mxu0 %v1158
    %v1917 = vpop.f32.mrf.mxu0
    %v1918 = vadd.f32 %v302, %v1917
    %v1919 = vpop.f32.mrf.mxu0
    %v1920 = vpop.f32.mrf.mxu0
    %v1921 = vadd.f32 %v302, %v1920
    %v1922 = vpop.f32.mrf.mxu0
    %1923 = vmatprep.mubr.bf16.mxu0 0
    %1924 = vmatmul.mubr.bf16.gmra.mxu0 %v1161
    %v1925 = vpop.f32.mrf.mxu0
    %v1926 = vadd.f32 %v302, %v1925
    %v1927 = vpop.f32.mrf.mxu0
    %v1928 = vpop.f32.mrf.mxu0
    %v1929 = vadd.f32 %v302, %v1928
    %v1930 = vpop.f32.mrf.mxu0
    %1931 = vmatprep.mubr.bf16.mxu0 0
    %1932 = vmatmul.mubr.bf16.gmra.mxu0 %v1164
    %v1933 = vpop.f32.mrf.mxu0
    %v1934 = vadd.f32 %v302, %v1933
    %v1935 = vpop.f32.mrf.mxu0
    %v1936 = vpop.f32.mrf.mxu0
    %v1937 = vadd.f32 %v302, %v1936
    %v1938 = vpop.f32.mrf.mxu0
    %1939 = vmatprep.mubr.bf16.mxu0 0
    %1940 = vmatmul.mubr.bf16.gmra.mxu0 %v1167
    %v1941 = vpop.f32.mrf.mxu0
    %v1942 = vadd.f32 %v302, %v1941
    %v1943 = vpop.f32.mrf.mxu0
    %v1944 = vpop.f32.mrf.mxu0
    %v1945 = vadd.f32 %v302, %v1944
    %v1946 = vpop.f32.mrf.mxu0
    %1947 = vmatprep.mubr.bf16.mxu0 0
    %1948 = vmatmul.mubr.bf16.gmra.mxu0 %v1170
    %v1949 = vpop.f32.mrf.mxu0
    %v1950 = vadd.f32 %v302, %v1949
    %v1951 = vpop.f32.mrf.mxu0
    %v1952 = vpop.f32.mrf.mxu0
    %v1953 = vadd.f32 %v302, %v1952
    %v1954 = vpop.f32.mrf.mxu0
    %1955 = vmatprep.mubr.bf16.mxu0 0
    %1956 = vmatmul.mubr.bf16.gmra.mxu0 %v1173
    %v1957 = vpop.f32.mrf.mxu0
    %v1958 = vadd.f32 %v302, %v1957
    %v1959 = vpop.f32.mrf.mxu0
    %v1960 = vpop.f32.mrf.mxu0
    %v1961 = vadd.f32 %v302, %v1960
    %v1962 = vpop.f32.mrf.mxu0
    %1963 = vmatprep.mubr.bf16.mxu0 0
    %1964 = vmatmul.mubr.bf16.gmra.mxu0 %v1176
    %v1965 = vpop.f32.mrf.mxu0
    %v1966 = vadd.f32 %v302, %v1965
    %v1967 = vpop.f32.mrf.mxu0
    %v1968 = vpop.f32.mrf.mxu0
    %v1969 = vadd.f32 %v302, %v1968
    %v1970 = vpop.f32.mrf.mxu0
    %1971 = vmatprep.mubr.bf16.mxu0 0
    %1972 = vmatmul.mubr.bf16.gmra.mxu0 %v1179
    %v1973 = vpop.f32.mrf.mxu0
    %v1974 = vadd.f32 %v302, %v1973
    %v1975 = vpop.f32.mrf.mxu0
    %v1976 = vpop.f32.mrf.mxu0
    %v1977 = vadd.f32 %v302, %v1976
    %v1978 = vpop.f32.mrf.mxu0
    %1979 = vmatprep.mubr.bf16.mxu0 0
    %1980 = vmatmul.mubr.bf16.gmra.mxu0 %v1182
    %v1981 = vpop.f32.mrf.mxu0
    %v1982 = vadd.f32 %v302, %v1981
    %v1983 = vpop.f32.mrf.mxu0
    %v1984 = vpop.f32.mrf.mxu0
    %v1985 = vadd.f32 %v302, %v1984
    %v1986 = vpop.f32.mrf.mxu0
    %1987 = vmatprep.mubr.bf16.mxu0 0
    %1988 = vmatmul.mubr.bf16.gmra.mxu0 %v1185
    %v1989 = vpop.f32.mrf.mxu0
    %v1990 = vadd.f32 %v302, %v1989
    %v1991 = vpop.f32.mrf.mxu0
    %v1992 = vpop.f32.mrf.mxu0
    %v1993 = vadd.f32 %v302, %v1992
    %v1994 = vpop.f32.mrf.mxu0
    %1995 = vmatprep.mubr.bf16.mxu0 0
    %1996 = vmatmul.mubr.bf16.gmra.mxu0 %v1188
    %v1997 = vpop.f32.mrf.mxu0
    %v1998 = vadd.f32 %v302, %v1997
    %v1999 = vpop.f32.mrf.mxu0
    %v2000 = vpop.f32.mrf.mxu0
    %v2001 = vadd.f32 %v302, %v2000
    %v2002 = vpop.f32.mrf.mxu0
    %2003 = vmatprep.mubr.bf16.mxu0 0
    %2004 = vmatmul.mubr.bf16.gmra.mxu0 %v1191
    %v2005 = vpop.f32.mrf.mxu0
    %v2006 = vadd.f32 %v302, %v2005
    %v2007 = vpop.f32.mrf.mxu0
    %v2008 = vpop.f32.mrf.mxu0
    %v2009 = vadd.f32 %v302, %v2008
    %v2010 = vpop.f32.mrf.mxu0
    %2011 = vmatprep.mubr.bf16.mxu0 0
    %2012 = vmatmul.mubr.bf16.gmra.mxu0 %v1194
    %v2013 = vpop.f32.mrf.mxu0
    %v2014 = vadd.f32 %v302, %v2013
    %v2015 = vpop.f32.mrf.mxu0
    %v2016 = vpop.f32.mrf.mxu0
    %v2017 = vadd.f32 %v302, %v2016
    %v2018 = vpop.f32.mrf.mxu0
    %2019 = vmatprep.mubr.bf16.mxu0 0
    %2020 = vmatmul.mubr.bf16.gmra.mxu0 %v1197
    %v2021 = vpop.f32.mrf.mxu0
    %v2022 = vadd.f32 %v302, %v2021
    %v2023 = vpop.f32.mrf.mxu0
    %v2024 = vpop.f32.mrf.mxu0
    %v2025 = vadd.f32 %v302, %v2024
    %v2026 = vpop.f32.mrf.mxu0
    %2027 = vmatprep.mubr.bf16.mxu0 0
    %2028 = vmatmul.mubr.bf16.gmra.mxu0 %v1200
    %v2029 = vpop.f32.mrf.mxu0
    %v2030 = vadd.f32 %v302, %v2029
    %v2031 = vpop.f32.mrf.mxu0
    %v2032 = vpop.f32.mrf.mxu0
    %v2033 = vadd.f32 %v302, %v2032
    %v2034 = vpop.f32.mrf.mxu0
    %2035 = vmatprep.mubr.bf16.mxu0 0
    %2036 = vmatmul.mubr.bf16.gmra.mxu0 %v1203
    %v2037 = vpop.f32.mrf.mxu0
    %v2038 = vadd.f32 %v302, %v2037
    %v2039 = vpop.f32.mrf.mxu0
    %v2040 = vpop.f32.mrf.mxu0
    %v2041 = vadd.f32 %v302, %v2040
    %v2042 = vpop.f32.mrf.mxu0
    %2043 = vmatprep.mubr.bf16.mxu0 0
    %2044 = vmatmul.mubr.bf16.gmra.mxu0 %v1206
    %v2045 = vpop.f32.mrf.mxu0
    %v2046 = vadd.f32 %v302, %v2045
    %v2047 = vpop.f32.mrf.mxu0
    %v2048 = vpop.f32.mrf.mxu0
    %v2049 = vadd.f32 %v302, %v2048
    %v2050 = vpop.f32.mrf.mxu0
    %2051 = vmatprep.mubr.bf16.mxu0 0
    %2052 = vmatmul.mubr.bf16.gmra.mxu0 %v1209
    %v2053 = vpop.f32.mrf.mxu0
    %v2054 = vadd.f32 %v302, %v2053
    %v2055 = vpop.f32.mrf.mxu0
    %v2056 = vpop.f32.mrf.mxu0
    %v2057 = vadd.f32 %v302, %v2056
    %v2058 = vpop.f32.mrf.mxu0
    %2059 = vmatprep.mubr.bf16.mxu0 0
    %2060 = vmatmul.mubr.bf16.gmra.mxu0 %v1212
    %v2061 = vpop.f32.mrf.mxu0
    %v2062 = vadd.f32 %v302, %v2061
    %v2063 = vpop.f32.mrf.mxu0
    %v2064 = vpop.f32.mrf.mxu0
    %v2065 = vadd.f32 %v302, %v2064
    %v2066 = vpop.f32.mrf.mxu0
    %2067 = vmatprep.mubr.bf16.mxu0 0
    %2068 = vmatmul.mubr.bf16.gmra.mxu0 %v1215
    %v2069 = vpop.f32.mrf.mxu0
    %v2070 = vadd.f32 %v302, %v2069
    %v2071 = vpop.f32.mrf.mxu0
    %v2072 = vpop.f32.mrf.mxu0
    %v2073 = vadd.f32 %v302, %v2072
    %v2074 = vpop.f32.mrf.mxu0
    %2075 = vmatprep.mubr.bf16.mxu0 0
    %2076 = vmatmul.mubr.bf16.gmra.mxu0 %v1218
    %v2077 = vpop.f32.mrf.mxu0
    %v2078 = vadd.f32 %v302, %v2077
    %v2079 = vpop.f32.mrf.mxu0
    %v2080 = vpop.f32.mrf.mxu0
    %v2081 = vadd.f32 %v302, %v2080
    %v2082 = vpop.f32.mrf.mxu0
    %2083 = vmatprep.mubr.bf16.mxu0 0
    %2084 = vmatmul.mubr.bf16.gmra.mxu0 %v1221
    %v2085 = vpop.f32.mrf.mxu0
    %v2086 = vadd.f32 %v302, %v2085
    %v2087 = vpop.f32.mrf.mxu0
    %v2088 = vpop.f32.mrf.mxu0
    %v2089 = vadd.f32 %v302, %v2088
    %v2090 = vpop.f32.mrf.mxu0
    %2091 = vmatprep.mubr.bf16.mxu0 0
    %2092 = vmatmul.mubr.bf16.gmra.mxu0 %v1224
    %v2093 = vpop.f32.mrf.mxu0
    %v2094 = vadd.f32 %v302, %v2093
    %v2095 = vpop.f32.mrf.mxu0
    %v2096 = vpop.f32.mrf.mxu0
    %v2097 = vadd.f32 %v302, %v2096
    %v2098 = vpop.f32.mrf.mxu0
    %2099 = vmatprep.mubr.bf16.mxu0 0
    %2100 = vmatmul.mubr.bf16.gmra.mxu0 %v1227
    %v2101 = vpop.f32.mrf.mxu0
    %v2102 = vadd.f32 %v302, %v2101
    %v2103 = vpop.f32.mrf.mxu0
    %v2104 = vpop.f32.mrf.mxu0
    %v2105 = vadd.f32 %v302, %v2104
    %v2106 = vpop.f32.mrf.mxu0
    %2107 = vmatprep.mubr.bf16.mxu0 0
    %2108 = vmatmul.mubr.bf16.gmra.mxu0 %v1230
    %v2109 = vpop.f32.mrf.mxu0
    %v2110 = vadd.f32 %v302, %v2109
    %v2111 = vpop.f32.mrf.mxu0
    %v2112 = vpop.f32.mrf.mxu0
    %v2113 = vadd.f32 %v302, %v2112
    %v2114 = vpop.f32.mrf.mxu0
    %2115 = vmatprep.mubr.bf16.mxu0 0
    %2116 = vmatmul.mubr.bf16.gmra.mxu0 %v1233
    %v2117 = vpop.f32.mrf.mxu0
    %v2118 = vadd.f32 %v302, %v2117
    %v2119 = vpop.f32.mrf.mxu0
    %v2120 = vpop.f32.mrf.mxu0
    %v2121 = vadd.f32 %v302, %v2120
    %v2122 = vpop.f32.mrf.mxu0
    %2123 = vmatprep.mubr.bf16.mxu0 0
    %2124 = vmatmul.mubr.bf16.gmra.mxu0 %v1236
    %v2125 = vpop.f32.mrf.mxu0
    %v2126 = vadd.f32 %v302, %v2125
    %v2127 = vpop.f32.mrf.mxu0
    %v2128 = vpop.f32.mrf.mxu0
    %v2129 = vadd.f32 %v302, %v2128
    %v2130 = vpop.f32.mrf.mxu0
    %2131 = vmatprep.mubr.bf16.mxu0 0
    %2132 = vmatmul.mubr.bf16.gmra.mxu0 %v1239
    %v2133 = vpop.f32.mrf.mxu0
    %v2134 = vadd.f32 %v302, %v2133
    %v2135 = vpop.f32.mrf.mxu0
    %v2136 = vpop.f32.mrf.mxu0
    %v2137 = vadd.f32 %v302, %v2136
    %v2138 = vpop.f32.mrf.mxu0
    %2139 = vmatprep.mubr.bf16.mxu0 0
    %2140 = vmatmul.mubr.bf16.gmra.mxu0 %v1242
    %v2141 = vpop.f32.mrf.mxu0
    %v2142 = vadd.f32 %v302, %v2141
    %v2143 = vpop.f32.mrf.mxu0
    %v2144 = vpop.f32.mrf.mxu0
    %v2145 = vadd.f32 %v302, %v2144
    %v2146 = vpop.f32.mrf.mxu0
    %2147 = vmatprep.mubr.bf16.mxu0 0
    %2148 = vmatmul.mubr.bf16.gmra.mxu0 %v1245
    %v2149 = vpop.f32.mrf.mxu0
    %v2150 = vadd.f32 %v302, %v2149
    %v2151 = vpop.f32.mrf.mxu0
    %v2152 = vpop.f32.mrf.mxu0
    %v2153 = vadd.f32 %v302, %v2152
    %v2154 = vpop.f32.mrf.mxu0
    %2155 = vmatprep.mubr.bf16.mxu0 0
    %2156 = vmatmul.mubr.bf16.gmra.mxu0 %v1248
    %v2157 = vpop.f32.mrf.mxu0
    %v2158 = vadd.f32 %v302, %v2157
    %v2159 = vpop.f32.mrf.mxu0
    %v2160 = vpop.f32.mrf.mxu0
    %v2161 = vadd.f32 %v302, %v2160
    %v2162 = vpop.f32.mrf.mxu0
    %2163 = vmatprep.mubr.bf16.mxu0 0
    %2164 = vmatmul.mubr.bf16.gmra.mxu0 %v1251
    %v2165 = vpop.f32.mrf.mxu0
    %v2166 = vadd.f32 %v302, %v2165
    %v2167 = vpop.f32.mrf.mxu0
    %v2168 = vpop.f32.mrf.mxu0
    %v2169 = vadd.f32 %v302, %v2168
    %v2170 = vpop.f32.mrf.mxu0
    %2171 = vmatprep.mubr.bf16.mxu0 0
    %2172 = vmatmul.mubr.bf16.gmra.mxu0 %v1254
    %v2173 = vpop.f32.mrf.mxu0
    %v2174 = vadd.f32 %v302, %v2173
    %v2175 = vpop.f32.mrf.mxu0
    %v2176 = vpop.f32.mrf.mxu0
    %v2177 = vadd.f32 %v302, %v2176
    %v2178 = vpop.f32.mrf.mxu0
    %2179 = vmatprep.mubr.bf16.mxu0 0
    %2180 = vmatmul.mubr.bf16.gmra.mxu0 %v1257
    %v2181 = vpop.f32.mrf.mxu0
    %v2182 = vadd.f32 %v302, %v2181
    %v2183 = vpop.f32.mrf.mxu0
    %v2184 = vpop.f32.mrf.mxu0
    %v2185 = vadd.f32 %v302, %v2184
    %v2186 = vpop.f32.mrf.mxu0
    %2187 = vmatprep.mubr.bf16.mxu0 0
    %2188 = vmatmul.mubr.bf16.gmra.mxu0 %v1260
    %v2189 = vpop.f32.mrf.mxu0
    %v2190 = vadd.f32 %v302, %v2189
    %v2191 = vpop.f32.mrf.mxu0
    %v2192 = vpop.f32.mrf.mxu0
    %v2193 = vadd.f32 %v302, %v2192
    %v2194 = vpop.f32.mrf.mxu0
    %2195 = vmatprep.mubr.bf16.mxu0 0
    %2196 = vmatmul.mubr.bf16.gmra.mxu0 %v1263
    %v2197 = vpop.f32.mrf.mxu0
    %v2198 = vadd.f32 %v302, %v2197
    %v2199 = vpop.f32.mrf.mxu0
    %v2200 = vpop.f32.mrf.mxu0
    %v2201 = vadd.f32 %v302, %v2200
    %v2202 = vpop.f32.mrf.mxu0
    %2203 = vmatprep.mubr.bf16.mxu0 0
    %2204 = vmatmul.mubr.bf16.gmra.mxu0 %v1266
    %v2205 = vpop.f32.mrf.mxu0
    %v2206 = vadd.f32 %v302, %v2205
    %v2207 = vpop.f32.mrf.mxu0
    %v2208 = vpop.f32.mrf.mxu0
    %v2209 = vadd.f32 %v302, %v2208
    %v2210 = vpop.f32.mrf.mxu0
    %2211 = vmatprep.mubr.bf16.mxu0 0
    %2212 = vmatmul.mubr.bf16.gmra.mxu0 %v1269
    %v2213 = vpop.f32.mrf.mxu0
    %v2214 = vadd.f32 %v302, %v2213
    %v2215 = vpop.f32.mrf.mxu0
    %v2216 = vpop.f32.mrf.mxu0
    %v2217 = vadd.f32 %v302, %v2216
    %v2218 = vpop.f32.mrf.mxu0
    %2219 = vmatprep.mubr.bf16.mxu0 0
    %2220 = vmatmul.mubr.bf16.gmra.mxu0 %v1272
    %v2221 = vpop.f32.mrf.mxu0
    %v2222 = vadd.f32 %v302, %v2221
    %v2223 = vpop.f32.mrf.mxu0
    %v2224 = vpop.f32.mrf.mxu0
    %v2225 = vadd.f32 %v302, %v2224
    %v2226 = vpop.f32.mrf.mxu0
    %2227 = vmatprep.mubr.bf16.mxu0 0
    %2228 = vmatmul.mubr.bf16.gmra.mxu0 %v1275
    %v2229 = vpop.f32.mrf.mxu0
    %v2230 = vadd.f32 %v302, %v2229
    %v2231 = vpop.f32.mrf.mxu0
    %v2232 = vpop.f32.mrf.mxu0
    %v2233 = vadd.f32 %v302, %v2232
    %v2234 = vpop.f32.mrf.mxu0
    %2235 = vmatprep.mubr.bf16.mxu0 0
    %2236 = vmatmul.mubr.bf16.gmra.mxu0 %v1278
    %v2237 = vpop.f32.mrf.mxu0
    %v2238 = vadd.f32 %v302, %v2237
    %v2239 = vpop.f32.mrf.mxu0
    %v2240 = vpop.f32.mrf.mxu0
    %v2241 = vadd.f32 %v302, %v2240
    %v2242 = vpop.f32.mrf.mxu0
    %2243 = vmatprep.mubr.bf16.mxu0 0
    %2244 = vmatmul.mubr.bf16.gmra.mxu0 %v1281
    %v2245 = vpop.f32.mrf.mxu0
    %v2246 = vadd.f32 %v302, %v2245
    %v2247 = vpop.f32.mrf.mxu0
    %v2248 = vpop.f32.mrf.mxu0
    %v2249 = vadd.f32 %v302, %v2248
    %v2250 = vpop.f32.mrf.mxu0
    %2251 = vmatprep.mubr.bf16.mxu0 0
    %2252 = vmatmul.mubr.bf16.gmra.mxu0 %v1284
    %v2253 = vpop.f32.mrf.mxu0
    %v2254 = vadd.f32 %v302, %v2253
    %v2255 = vpop.f32.mrf.mxu0
    %v2256 = vpop.f32.mrf.mxu0
    %v2257 = vadd.f32 %v302, %v2256
    %v2258 = vpop.f32.mrf.mxu0
    %2259 = vmatprep.mubr.bf16.mxu0 0
    %2260 = vmatmul.mubr.bf16.gmra.mxu0 %v1287
    %v2261 = vpop.f32.mrf.mxu0
    %v2262 = vadd.f32 %v302, %v2261
    %v2263 = vpop.f32.mrf.mxu0
    %v2264 = vpop.f32.mrf.mxu0
    %v2265 = vadd.f32 %v302, %v2264
    %v2266 = vpop.f32.mrf.mxu0
    %2267 = vmatprep.mubr.bf16.mxu0 0
    %2268 = vmatmul.mubr.bf16.gmra.mxu0 %v1290
    %v2269 = vpop.f32.mrf.mxu0
    %v2270 = vadd.f32 %v302, %v2269
    %v2271 = vpop.f32.mrf.mxu0
    %v2272 = vpop.f32.mrf.mxu0
    %v2273 = vadd.f32 %v302, %v2272
    %v2274 = vpop.f32.mrf.mxu0
    %2275 = vmatprep.mubr.bf16.mxu0 0
    %2276 = vmatmul.mubr.bf16.gmra.mxu0 %v1293
    %v2277 = vpop.f32.mrf.mxu0
    %v2278 = vadd.f32 %v302, %v2277
    %v2279 = vpop.f32.mrf.mxu0
    %v2280 = vpop.f32.mrf.mxu0
    %v2281 = vadd.f32 %v302, %v2280
    %v2282 = vpop.f32.mrf.mxu0
    %2283 = vmatprep.mubr.bf16.mxu0 0
    %2284 = vmatmul.mubr.bf16.gmra.mxu0 %v1296
    %v2285 = vpop.f32.mrf.mxu0
    %v2286 = vadd.f32 %v302, %v2285
    %v2287 = vpop.f32.mrf.mxu0
    %v2288 = vpop.f32.mrf.mxu0
    %v2289 = vadd.f32 %v302, %v2288
    %v2290 = vpop.f32.mrf.mxu0
    %2291 = vmatprep.mubr.bf16.mxu0 0
    %2292 = vmatmul.mubr.bf16.gmra.mxu0 %v1299
    %v2293 = vpop.f32.mrf.mxu0
    %v2294 = vadd.f32 %v302, %v2293
    %v2295 = vpop.f32.mrf.mxu0
    %v2296 = vpop.f32.mrf.mxu0
    %v2297 = vadd.f32 %v302, %v2296
    %v2298 = vpop.f32.mrf.mxu0
    %2299 = vmatprep.mubr.bf16.mxu0 0
    %2300 = vmatmul.mubr.bf16.gmra.mxu0 %v1302
    %v2301 = vpop.f32.mrf.mxu0
    %v2302 = vadd.f32 %v302, %v2301
    %v2303 = vpop.f32.mrf.mxu0
    %v2304 = vpop.f32.mrf.mxu0
    %v2305 = vadd.f32 %v302, %v2304
    %v2306 = vpop.f32.mrf.mxu0
    %2307 = vmatprep.mubr.bf16.mxu0 0
    %2308 = vmatmul.mubr.bf16.gmra.mxu0 %v1305
    %v2309 = vpop.f32.mrf.mxu0
    %v2310 = vadd.f32 %v302, %v2309
    %v2311 = vpop.f32.mrf.mxu0
    %v2312 = vpop.f32.mrf.mxu0
    %v2313 = vadd.f32 %v302, %v2312
    %v2314 = vpop.f32.mrf.mxu0
    %2315 = vmatprep.mubr.bf16.mxu0 0
    %2316 = vmatmul.mubr.bf16.gmra.mxu0 %v1308
    %v2317 = vpop.f32.mrf.mxu0
    %v2318 = vadd.f32 %v302, %v2317
    %v2319 = vpop.f32.mrf.mxu0
    %v2320 = vpop.f32.mrf.mxu0
    %v2321 = vadd.f32 %v302, %v2320
    %v2322 = vpop.f32.mrf.mxu0
    %2323 = vmatprep.mubr.bf16.mxu0 0
    %2324 = vmatmul.mubr.bf16.gmra.mxu0 %v1311
    %v2325 = vpop.f32.mrf.mxu0
    %v2326 = vadd.f32 %v302, %v2325
    %v2327 = vpop.f32.mrf.mxu0
    %v2328 = vpop.f32.mrf.mxu0
    %v2329 = vadd.f32 %v302, %v2328
    %v2330 = vpop.f32.mrf.mxu0
    %2331 = vmatprep.mubr.bf16.mxu0 0
    %2332 = vmatmul.mubr.bf16.gmra.mxu0 %v1314
    %v2333 = vpop.f32.mrf.mxu0
    %v2334 = vadd.f32 %v302, %v2333
    %v2335 = vpop.f32.mrf.mxu0
    %v2336 = vpop.f32.mrf.mxu0
    %v2337 = vadd.f32 %v302, %v2336
    %v2338 = vpop.f32.mrf.mxu0
    %2339 = vmatprep.mubr.bf16.mxu0 0
    %2340 = vmatmul.mubr.bf16.gmra.mxu0 %v1317
    %v2341 = vpop.f32.mrf.mxu0
    %v2342 = vadd.f32 %v302, %v2341
    %v2343 = vpop.f32.mrf.mxu0
    %v2344 = vpop.f32.mrf.mxu0
    %v2345 = vadd.f32 %v302, %v2344
    %v2346 = vpop.f32.mrf.mxu0
    %2347 = vmatprep.mubr.bf16.mxu0 0
    %2348 = vmatmul.mubr.bf16.gmra.mxu0 %v1320
    %v2349 = vpop.f32.mrf.mxu0
    %v2350 = vadd.f32 %v302, %v2349
    %v2351 = vpop.f32.mrf.mxu0
    %v2352 = vpop.f32.mrf.mxu0
    %v2353 = vadd.f32 %v302, %v2352
    %v2354 = vpop.f32.mrf.mxu0
    %2355 = vmatprep.mubr.bf16.mxu0 0
    %2356 = vmatmul.mubr.bf16.gmra.mxu0 %v1323
    %v2357 = vpop.f32.mrf.mxu0
    %v2358 = vadd.f32 %v302, %v2357
    %v2359 = vpop.f32.mrf.mxu0
    %v2360 = vpop.f32.mrf.mxu0
    %v2361 = vadd.f32 %v302, %v2360
    %v2362 = vpop.f32.mrf.mxu0
    %2363 = vmatprep.mubr.bf16.mxu0 0
    %2364 = vmatmul.mubr.bf16.gmra.mxu0 %v1326
    %v2365 = vpop.f32.mrf.mxu0
    %v2366 = vadd.f32 %v302, %v2365
    %v2367 = vpop.f32.mrf.mxu0
    %v2368 = vpop.f32.mrf.mxu0
    %v2369 = vadd.f32 %v302, %v2368
    %v2370 = vpop.f32.mrf.mxu0
    %2371 = vmatprep.mubr.bf16.mxu0 0
    %2372 = vmatmul.mubr.bf16.gmra.mxu0 %v1329
    %v2373 = vpop.f32.mrf.mxu0
    %v2374 = vadd.f32 %v302, %v2373
    %v2375 = vpop.f32.mrf.mxu0
    %v2376 = vpop.f32.mrf.mxu0
    %v2377 = vadd.f32 %v302, %v2376
    %v2378 = vpop.f32.mrf.mxu0
    %2379 = vmatprep.mubr.bf16.mxu0 0
    %2380 = vmatmul.mubr.bf16.gmra.mxu0 %v1332
    %v2381 = vpop.f32.mrf.mxu0
    %v2382 = vadd.f32 %v302, %v2381
    %v2383 = vpop.f32.mrf.mxu0
    %v2384 = vpop.f32.mrf.mxu0
    %v2385 = vadd.f32 %v302, %v2384
    %v2386 = vpop.f32.mrf.mxu0
    %2387 = vmatprep.mubr.bf16.mxu0 0
    %2388 = vmatmul.mubr.bf16.gmra.mxu0 %v1335
    %v2389 = vpop.f32.mrf.mxu0
    %v2390 = vadd.f32 %v302, %v2389
    %v2391 = vpop.f32.mrf.mxu0
    %v2392 = vpop.f32.mrf.mxu0
    %v2393 = vadd.f32 %v302, %v2392
    %v2394 = vpop.f32.mrf.mxu0
    %2395 = vmatprep.mubr.bf16.mxu0 0
    %2396 = vmatmul.mubr.bf16.gmra.mxu0 %v1338
    %v2397 = vpop.f32.mrf.mxu0
    %v2398 = vadd.f32 %v302, %v2397
    %v2399 = vpop.f32.mrf.mxu0
    %v2400 = vpop.f32.mrf.mxu0
    %v2401 = vadd.f32 %v302, %v2400
    %v2402 = vpop.f32.mrf.mxu0
    %2403 = vdwg.mxu0
    %v2404 = vmax.f32 %v1382, 0.0
    %v2405 = vmax.f32 %v1385, 0.0
    %v2406 = vmax.f32 %v1390, 0.0
    %v2407 = vmax.f32 %v1393, 0.0
    %v2408 = vmax.f32 %v1398, 0.0
    %v2409 = vmax.f32 %v1401, 0.0
    %v2410 = vmax.f32 %v1406, 0.0
    %v2411 = vmax.f32 %v1409, 0.0
    %v2412 = vmax.f32 %v1414, 0.0
    %v2413 = vmax.f32 %v1417, 0.0
    %v2414 = vmax.f32 %v1422, 0.0
    %v2415 = vmax.f32 %v1425, 0.0
    %v2416 = vmax.f32 %v1430, 0.0
    %v2417 = vmax.f32 %v1433, 0.0
    %v2418 = vmax.f32 %v1438, 0.0
    %v2419 = vmax.f32 %v1441, 0.0
    %v2420 = vmax.f32 %v1446, 0.0
    %v2421 = vmax.f32 %v1449, 0.0
    %v2422 = vmax.f32 %v1454, 0.0
    %v2423 = vmax.f32 %v1457, 0.0
    %v2424 = vmax.f32 %v1462, 0.0
    %v2425 = vmax.f32 %v1465, 0.0
    %v2426 = vmax.f32 %v1470, 0.0
    %v2427 = vmax.f32 %v1473, 0.0
    %v2428 = vmax.f32 %v1478, 0.0
    %v2429 = vmax.f32 %v1481, 0.0
    %v2430 = vmax.f32 %v1486, 0.0
    %v2431 = vmax.f32 %v1489, 0.0
    %v2432 = vmax.f32 %v1494, 0.0
    %v2433 = vmax.f32 %v1497, 0.0
    %v2434 = vmax.f32 %v1502, 0.0
    %v2435 = vmax.f32 %v1505, 0.0
    %v2436 = vmax.f32 %v1510, 0.0
    %v2437 = vmax.f32 %v1513, 0.0
    %v2438 = vmax.f32 %v1518, 0.0
    %v2439 = vmax.f32 %v1521, 0.0
    %v2440 = vmax.f32 %v1526, 0.0
    %v2441 = vmax.f32 %v1529, 0.0
    %v2442 = vmax.f32 %v1534, 0.0
    %v2443 = vmax.f32 %v1537, 0.0
    %v2444 = vmax.f32 %v1542, 0.0
    %v2445 = vmax.f32 %v1545, 0.0
    %v2446 = vmax.f32 %v1550, 0.0
    %v2447 = vmax.f32 %v1553, 0.0
    %v2448 = vmax.f32 %v1558, 0.0
    %v2449 = vmax.f32 %v1561, 0.0
    %v2450 = vmax.f32 %v1566, 0.0
    %v2451 = vmax.f32 %v1569, 0.0
    %v2452 = vmax.f32 %v1574, 0.0
    %v2453 = vmax.f32 %v1577, 0.0
    %v2454 = vmax.f32 %v1582, 0.0
    %v2455 = vmax.f32 %v1585, 0.0
    %v2456 = vmax.f32 %v1590, 0.0
    %v2457 = vmax.f32 %v1593, 0.0
    %v2458 = vmax.f32 %v1598, 0.0
    %v2459 = vmax.f32 %v1601, 0.0
    %v2460 = vmax.f32 %v1606, 0.0
    %v2461 = vmax.f32 %v1609, 0.0
    %v2462 = vmax.f32 %v1614, 0.0
    %v2463 = vmax.f32 %v1617, 0.0
    %v2464 = vmax.f32 %v1622, 0.0
    %v2465 = vmax.f32 %v1625, 0.0
    %v2466 = vmax.f32 %v1630, 0.0
    %v2467 = vmax.f32 %v1633, 0.0
    %v2468 = vmax.f32 %v1638, 0.0
    %v2469 = vmax.f32 %v1641, 0.0
    %v2470 = vmax.f32 %v1646, 0.0
    %v2471 = vmax.f32 %v1649, 0.0
    %v2472 = vmax.f32 %v1654, 0.0
    %v2473 = vmax.f32 %v1657, 0.0
    %v2474 = vmax.f32 %v1662, 0.0
    %v2475 = vmax.f32 %v1665, 0.0
    %v2476 = vmax.f32 %v1670, 0.0
    %v2477 = vmax.f32 %v1673, 0.0
    %v2478 = vmax.f32 %v1678, 0.0
    %v2479 = vmax.f32 %v1681, 0.0
    %v2480 = vmax.f32 %v1686, 0.0
    %v2481 = vmax.f32 %v1689, 0.0
    %v2482 = vmax.f32 %v1694, 0.0
    %v2483 = vmax.f32 %v1697, 0.0
    %v2484 = vmax.f32 %v1702, 0.0
    %v2485 = vmax.f32 %v1705, 0.0
    %v2486 = vmax.f32 %v1710, 0.0
    %v2487 = vmax.f32 %v1713, 0.0
    %v2488 = vmax.f32 %v1718, 0.0
    %v2489 = vmax.f32 %v1721, 0.0
    %v2490 = vmax.f32 %v1726, 0.0
    %v2491 = vmax.f32 %v1729, 0.0
    %v2492 = vmax.f32 %v1734, 0.0
    %v2493 = vmax.f32 %v1737, 0.0
    %v2494 = vmax.f32 %v1742, 0.0
    %v2495 = vmax.f32 %v1745, 0.0
    %v2496 = vmax.f32 %v1750, 0.0
    %v2497 = vmax.f32 %v1753, 0.0
    %v2498 = vmax.f32 %v1758, 0.0
    %v2499 = vmax.f32 %v1761, 0.0
    %v2500 = vmax.f32 %v1766, 0.0
    %v2501 = vmax.f32 %v1769, 0.0
    %v2502 = vmax.f32 %v1774, 0.0
    %v2503 = vmax.f32 %v1777, 0.0
    %v2504 = vmax.f32 %v1782, 0.0
    %v2505 = vmax.f32 %v1785, 0.0
    %v2506 = vmax.f32 %v1790, 0.0
    %v2507 = vmax.f32 %v1793, 0.0
    %v2508 = vmax.f32 %v1798, 0.0
    %v2509 = vmax.f32 %v1801, 0.0
    %v2510 = vmax.f32 %v1806, 0.0
    %v2511 = vmax.f32 %v1809, 0.0
    %v2512 = vmax.f32 %v1814, 0.0
    %v2513 = vmax.f32 %v1817, 0.0
    %v2514 = vmax.f32 %v1822, 0.0
    %v2515 = vmax.f32 %v1825, 0.0
    %v2516 = vmax.f32 %v1830, 0.0
    %v2517 = vmax.f32 %v1833, 0.0
    %v2518 = vmax.f32 %v1838, 0.0
    %v2519 = vmax.f32 %v1841, 0.0
    %v2520 = vmax.f32 %v1846, 0.0
    %v2521 = vmax.f32 %v1849, 0.0
    %v2522 = vmax.f32 %v1854, 0.0
    %v2523 = vmax.f32 %v1857, 0.0
    %v2524 = vmax.f32 %v1862, 0.0
    %v2525 = vmax.f32 %v1865, 0.0
    %v2526 = vmax.f32 %v1870, 0.0
    %v2527 = vmax.f32 %v1873, 0.0
    %v2528 = vmax.f32 %v1878, 0.0
    %v2529 = vmax.f32 %v1881, 0.0
    %v2530 = vmax.f32 %v1886, 0.0
    %v2531 = vmax.f32 %v1889, 0.0
    %v2532 = vmax.f32 %v1894, 0.0
    %v2533 = vmax.f32 %v1897, 0.0
    %v2534 = vmax.f32 %v1902, 0.0
    %v2535 = vmax.f32 %v1905, 0.0
    %v2536 = vmax.f32 %v1910, 0.0
    %v2537 = vmax.f32 %v1913, 0.0
    %v2538 = vmax.f32 %v1918, 0.0
    %v2539 = vmax.f32 %v1921, 0.0
    %v2540 = vmax.f32 %v1926, 0.0
    %v2541 = vmax.f32 %v1929, 0.0
    %v2542 = vmax.f32 %v1934, 0.0
    %v2543 = vmax.f32 %v1937, 0.0
    %v2544 = vmax.f32 %v1942, 0.0
    %v2545 = vmax.f32 %v1945, 0.0
    %v2546 = vmax.f32 %v1950, 0.0
    %v2547 = vmax.f32 %v1953, 0.0
    %v2548 = vmax.f32 %v1958, 0.0
    %v2549 = vmax.f32 %v1961, 0.0
    %v2550 = vmax.f32 %v1966, 0.0
    %v2551 = vmax.f32 %v1969, 0.0
    %v2552 = vmax.f32 %v1974, 0.0
    %v2553 = vmax.f32 %v1977, 0.0
    %v2554 = vmax.f32 %v1982, 0.0
    %v2555 = vmax.f32 %v1985, 0.0
    %v2556 = vmax.f32 %v1990, 0.0
    %v2557 = vmax.f32 %v1993, 0.0
    %v2558 = vmax.f32 %v1998, 0.0
    %v2559 = vmax.f32 %v2001, 0.0
    %v2560 = vmax.f32 %v2006, 0.0
    %v2561 = vmax.f32 %v2009, 0.0
    %v2562 = vmax.f32 %v2014, 0.0
    %v2563 = vmax.f32 %v2017, 0.0
    %v2564 = vmax.f32 %v2022, 0.0
    %v2565 = vmax.f32 %v2025, 0.0
    %v2566 = vmax.f32 %v2030, 0.0
    %v2567 = vmax.f32 %v2033, 0.0
    %v2568 = vmax.f32 %v2038, 0.0
    %v2569 = vmax.f32 %v2041, 0.0
    %v2570 = vmax.f32 %v2046, 0.0
    %v2571 = vmax.f32 %v2049, 0.0
    %v2572 = vmax.f32 %v2054, 0.0
    %v2573 = vmax.f32 %v2057, 0.0
    %v2574 = vmax.f32 %v2062, 0.0
    %v2575 = vmax.f32 %v2065, 0.0
    %v2576 = vmax.f32 %v2070, 0.0
    %v2577 = vmax.f32 %v2073, 0.0
    %v2578 = vmax.f32 %v2078, 0.0
    %v2579 = vmax.f32 %v2081, 0.0
    %v2580 = vmax.f32 %v2086, 0.0
    %v2581 = vmax.f32 %v2089, 0.0
    %v2582 = vmax.f32 %v2094, 0.0
    %v2583 = vmax.f32 %v2097, 0.0
    %v2584 = vmax.f32 %v2102, 0.0
    %v2585 = vmax.f32 %v2105, 0.0
    %v2586 = vmax.f32 %v2110, 0.0
    %v2587 = vmax.f32 %v2113, 0.0
    %v2588 = vmax.f32 %v2118, 0.0
    %v2589 = vmax.f32 %v2121, 0.0
    %v2590 = vmax.f32 %v2126, 0.0
    %v2591 = vmax.f32 %v2129, 0.0
    %v2592 = vmax.f32 %v2134, 0.0
    %v2593 = vmax.f32 %v2137, 0.0
    %v2594 = vmax.f32 %v2142, 0.0
    %v2595 = vmax.f32 %v2145, 0.0
    %v2596 = vmax.f32 %v2150, 0.0
    %v2597 = vmax.f32 %v2153, 0.0
    %v2598 = vmax.f32 %v2158, 0.0
    %v2599 = vmax.f32 %v2161, 0.0
    %v2600 = vmax.f32 %v2166, 0.0
    %v2601 = vmax.f32 %v2169, 0.0
    %v2602 = vmax.f32 %v2174, 0.0
    %v2603 = vmax.f32 %v2177, 0.0
    %v2604 = vmax.f32 %v2182, 0.0
    %v2605 = vmax.f32 %v2185, 0.0
    %v2606 = vmax.f32 %v2190, 0.0
    %v2607 = vmax.f32 %v2193, 0.0
    %v2608 = vmax.f32 %v2198, 0.0
    %v2609 = vmax.f32 %v2201, 0.0
    %v2610 = vmax.f32 %v2206, 0.0
    %v2611 = vmax.f32 %v2209, 0.0
    %v2612 = vmax.f32 %v2214, 0.0
    %v2613 = vmax.f32 %v2217, 0.0
    %v2614 = vmax.f32 %v2222, 0.0
    %v2615 = vmax.f32 %v2225, 0.0
    %v2616 = vmax.f32 %v2230, 0.0
    %v2617 = vmax.f32 %v2233, 0.0
    %v2618 = vmax.f32 %v2238, 0.0
    %v2619 = vmax.f32 %v2241, 0.0
    %v2620 = vmax.f32 %v2246, 0.0
    %v2621 = vmax.f32 %v2249, 0.0
    %v2622 = vmax.f32 %v2254, 0.0
    %v2623 = vmax.f32 %v2257, 0.0
    %v2624 = vmax.f32 %v2262, 0.0
    %v2625 = vmax.f32 %v2265, 0.0
    %v2626 = vmax.f32 %v2270, 0.0
    %v2627 = vmax.f32 %v2273, 0.0
    %v2628 = vmax.f32 %v2278, 0.0
    %v2629 = vmax.f32 %v2281, 0.0
    %v2630 = vmax.f32 %v2286, 0.0
    %v2631 = vmax.f32 %v2289, 0.0
    %v2632 = vmax.f32 %v2294, 0.0
    %v2633 = vmax.f32 %v2297, 0.0
    %v2634 = vmax.f32 %v2302, 0.0
    %v2635 = vmax.f32 %v2305, 0.0
    %v2636 = vmax.f32 %v2310, 0.0
    %v2637 = vmax.f32 %v2313, 0.0
    %v2638 = vmax.f32 %v2318, 0.0
    %v2639 = vmax.f32 %v2321, 0.0
    %v2640 = vmax.f32 %v2326, 0.0
    %v2641 = vmax.f32 %v2329, 0.0
    %v2642 = vmax.f32 %v2334, 0.0
    %v2643 = vmax.f32 %v2337, 0.0
    %v2644 = vmax.f32 %v2342, 0.0
    %v2645 = vmax.f32 %v2345, 0.0
    %v2646 = vmax.f32 %v2350, 0.0
    %v2647 = vmax.f32 %v2353, 0.0
    %v2648 = vmax.f32 %v2358, 0.0
    %v2649 = vmax.f32 %v2361, 0.0
    %v2650 = vmax.f32 %v2366, 0.0
    %v2651 = vmax.f32 %v2369, 0.0
    %v2652 = vmax.f32 %v2374, 0.0
    %v2653 = vmax.f32 %v2377, 0.0
    %v2654 = vmax.f32 %v2382, 0.0
    %v2655 = vmax.f32 %v2385, 0.0
    %v2656 = vmax.f32 %v2390, 0.0
    %v2657 = vmax.f32 %v2393, 0.0
    %v2658 = vmax.f32 %v2398, 0.0
    %v2659 = vmax.f32 %v2401, 0.0
    %v2660 = vadd.f32 %v2404, %v2405
    %v2661 = vadd.f32 %v2660, %v2406
    %v2662 = vadd.f32 %v2661, %v2407
    %v2663 = vadd.f32 %v2662, %v2408
    %v2664 = vadd.f32 %v2663, %v2409
    %v2665 = vadd.f32 %v2664, %v2410
    %v2666 = vadd.f32 %v2665, %v2411
    %v2667 = vadd.f32 %v2666, %v2412
    %v2668 = vadd.f32 %v2667, %v2413
    %v2669 = vadd.f32 %v2668, %v2414
    %v2670 = vadd.f32 %v2669, %v2415
    %v2671 = vadd.f32 %v2670, %v2416
    %v2672 = vadd.f32 %v2671, %v2417
    %v2673 = vadd.f32 %v2672, %v2418
    %v2674 = vadd.f32 %v2673, %v2419
    %v2675 = vadd.f32 %v2674, %v2420
    %v2676 = vadd.f32 %v2675, %v2421
    %v2677 = vadd.f32 %v2676, %v2422
    %v2678 = vadd.f32 %v2677, %v2423
    %v2679 = vadd.f32 %v2678, %v2424
    %v2680 = vadd.f32 %v2679, %v2425
    %v2681 = vadd.f32 %v2680, %v2426
    %v2682 = vadd.f32 %v2681, %v2427
    %v2683 = vadd.f32 %v2682, %v2428
    %v2684 = vadd.f32 %v2683, %v2429
    %v2685 = vadd.f32 %v2684, %v2430
    %v2686 = vadd.f32 %v2685, %v2431
    %v2687 = vadd.f32 %v2686, %v2432
    %v2688 = vadd.f32 %v2687, %v2433
    %v2689 = vadd.f32 %v2688, %v2434
    %v2690 = vadd.f32 %v2689, %v2435
    %v2691 = vrot.slane %v2690, 4
    %v2692 = vadd.f32 %v2690, %v2691
    %v2693 = vrot.slane %v2692, 2
    %v2694 = vadd.f32 %v2692, %v2693
    %v2695 = vrot.slane %v2694, 1
    %v2696 = vadd.f32 %v2694, %v2695
    %v2697 = vadd.f32 %v2436, %v2437
    %v2698 = vadd.f32 %v2697, %v2438
    %v2699 = vadd.f32 %v2698, %v2439
    %v2700 = vadd.f32 %v2699, %v2440
    %v2701 = vadd.f32 %v2700, %v2441
    %v2702 = vadd.f32 %v2701, %v2442
    %v2703 = vadd.f32 %v2702, %v2443
    %v2704 = vadd.f32 %v2703, %v2444
    %v2705 = vadd.f32 %v2704, %v2445
    %v2706 = vadd.f32 %v2705, %v2446
    %v2707 = vadd.f32 %v2706, %v2447
    %v2708 = vadd.f32 %v2707, %v2448
    %v2709 = vadd.f32 %v2708, %v2449
    %v2710 = vadd.f32 %v2709, %v2450
    %v2711 = vadd.f32 %v2710, %v2451
    %v2712 = vadd.f32 %v2711, %v2452
    %v2713 = vadd.f32 %v2712, %v2453
    %v2714 = vadd.f32 %v2713, %v2454
    %v2715 = vadd.f32 %v2714, %v2455
    %v2716 = vadd.f32 %v2715, %v2456
    %v2717 = vadd.f32 %v2716, %v2457
    %v2718 = vadd.f32 %v2717, %v2458
    %v2719 = vadd.f32 %v2718, %v2459
    %v2720 = vadd.f32 %v2719, %v2460
    %v2721 = vadd.f32 %v2720, %v2461
    %v2722 = vadd.f32 %v2721, %v2462
    %v2723 = vadd.f32 %v2722, %v2463
    %v2724 = vadd.f32 %v2723, %v2464
    %v2725 = vadd.f32 %v2724, %v2465
    %v2726 = vadd.f32 %v2725, %v2466
    %v2727 = vadd.f32 %v2726, %v2467
    %v2728 = vrot.slane %v2727, 4
    %v2729 = vadd.f32 %v2727, %v2728
    %v2730 = vrot.slane %v2729, 2
    %v2731 = vadd.f32 %v2729, %v2730
    %v2732 = vrot.slane %v2731, 1
    %v2733 = vadd.f32 %v2731, %v2732
    %v2734 = vadd.f32 %v2468, %v2469
    %v2735 = vadd.f32 %v2734, %v2470
    %v2736 = vadd.f32 %v2735, %v2471
    %v2737 = vadd.f32 %v2736, %v2472
    %v2738 = vadd.f32 %v2737, %v2473
    %v2739 = vadd.f32 %v2738, %v2474
    %v2740 = vadd.f32 %v2739, %v2475
    %v2741 = vadd.f32 %v2740, %v2476
    %v2742 = vadd.f32 %v2741, %v2477
    %v2743 = vadd.f32 %v2742, %v2478
    %v2744 = vadd.f32 %v2743, %v2479
    %v2745 = vadd.f32 %v2744, %v2480
    %v2746 = vadd.f32 %v2745, %v2481
    %v2747 = vadd.f32 %v2746, %v2482
    %v2748 = vadd.f32 %v2747, %v2483
    %v2749 = vadd.f32 %v2748, %v2484
    %v2750 = vadd.f32 %v2749, %v2485
    %v2751 = vadd.f32 %v2750, %v2486
    %v2752 = vadd.f32 %v2751, %v2487
    %v2753 = vadd.f32 %v2752, %v2488
    %v2754 = vadd.f32 %v2753, %v2489
    %v2755 = vadd.f32 %v2754, %v2490
    %v2756 = vadd.f32 %v2755, %v2491
    %v2757 = vadd.f32 %v2756, %v2492
    %v2758 = vadd.f32 %v2757, %v2493
    %v2759 = vadd.f32 %v2758, %v2494
    %v2760 = vadd.f32 %v2759, %v2495
    %v2761 = vadd.f32 %v2760, %v2496
    %v2762 = vadd.f32 %v2761, %v2497
    %v2763 = vadd.f32 %v2762, %v2498
    %v2764 = vadd.f32 %v2763, %v2499
    %v2765 = vrot.slane %v2764, 4
    %v2766 = vadd.f32 %v2764, %v2765
    %v2767 = vrot.slane %v2766, 2
    %v2768 = vadd.f32 %v2766, %v2767
    %v2769 = vrot.slane %v2768, 1
    %v2770 = vadd.f32 %v2768, %v2769
    %v2771 = vadd.f32 %v2500, %v2501
    %v2772 = vadd.f32 %v2771, %v2502
    %v2773 = vadd.f32 %v2772, %v2503
    %v2774 = vadd.f32 %v2773, %v2504
    %v2775 = vadd.f32 %v2774, %v2505
    %v2776 = vadd.f32 %v2775, %v2506
    %v2777 = vadd.f32 %v2776, %v2507
    %v2778 = vadd.f32 %v2777, %v2508
    %v2779 = vadd.f32 %v2778, %v2509
    %v2780 = vadd.f32 %v2779, %v2510
    %v2781 = vadd.f32 %v2780, %v2511
    %v2782 = vadd.f32 %v2781, %v2512
    %v2783 = vadd.f32 %v2782, %v2513
    %v2784 = vadd.f32 %v2783, %v2514
    %v2785 = vadd.f32 %v2784, %v2515
    %v2786 = vadd.f32 %v2785, %v2516
    %v2787 = vadd.f32 %v2786, %v2517
    %v2788 = vadd.f32 %v2787, %v2518
    %v2789 = vadd.f32 %v2788, %v2519
    %v2790 = vadd.f32 %v2789, %v2520
    %v2791 = vadd.f32 %v2790, %v2521
    %v2792 = vadd.f32 %v2791, %v2522
    %v2793 = vadd.f32 %v2792, %v2523
    %v2794 = vadd.f32 %v2793, %v2524
    %v2795 = vadd.f32 %v2794, %v2525
    %v2796 = vadd.f32 %v2795, %v2526
    %v2797 = vadd.f32 %v2796, %v2527
    %v2798 = vadd.f32 %v2797, %v2528
    %v2799 = vadd.f32 %v2798, %v2529
    %v2800 = vadd.f32 %v2799, %v2530
    %v2801 = vadd.f32 %v2800, %v2531
    %v2802 = vrot.slane %v2801, 4
    %v2803 = vadd.f32 %v2801, %v2802
    %v2804 = vrot.slane %v2803, 2
    %v2805 = vadd.f32 %v2803, %v2804
    %v2806 = vrot.slane %v2805, 1
    %v2807 = vadd.f32 %v2805, %v2806
    %v2808 = vadd.f32 %v2532, %v2533
    %v2809 = vadd.f32 %v2808, %v2534
    %v2810 = vadd.f32 %v2809, %v2535
    %v2811 = vadd.f32 %v2810, %v2536
    %v2812 = vadd.f32 %v2811, %v2537
    %v2813 = vadd.f32 %v2812, %v2538
    %v2814 = vadd.f32 %v2813, %v2539
    %v2815 = vadd.f32 %v2814, %v2540
    %v2816 = vadd.f32 %v2815, %v2541
    %v2817 = vadd.f32 %v2816, %v2542
    %v2818 = vadd.f32 %v2817, %v2543
    %v2819 = vadd.f32 %v2818, %v2544
    %v2820 = vadd.f32 %v2819, %v2545
    %v2821 = vadd.f32 %v2820, %v2546
    %v2822 = vadd.f32 %v2821, %v2547
    %v2823 = vadd.f32 %v2822, %v2548
    %v2824 = vadd.f32 %v2823, %v2549
    %v2825 = vadd.f32 %v2824, %v2550
    %v2826 = vadd.f32 %v2825, %v2551
    %v2827 = vadd.f32 %v2826, %v2552
    %v2828 = vadd.f32 %v2827, %v2553
    %v2829 = vadd.f32 %v2828, %v2554
    %v2830 = vadd.f32 %v2829, %v2555
    %v2831 = vadd.f32 %v2830, %v2556
    %v2832 = vadd.f32 %v2831, %v2557
    %v2833 = vadd.f32 %v2832, %v2558
    %v2834 = vadd.f32 %v2833, %v2559
    %v2835 = vadd.f32 %v2834, %v2560
    %v2836 = vadd.f32 %v2835, %v2561
    %v2837 = vadd.f32 %v2836, %v2562
    %v2838 = vadd.f32 %v2837, %v2563
    %v2839 = vrot.slane %v2838, 4
    %v2840 = vadd.f32 %v2838, %v2839
    %v2841 = vrot.slane %v2840, 2
    %v2842 = vadd.f32 %v2840, %v2841
    %v2843 = vrot.slane %v2842, 1
    %v2844 = vadd.f32 %v2842, %v2843
    %v2845 = vadd.f32 %v2564, %v2565
    %v2846 = vadd.f32 %v2845, %v2566
    %v2847 = vadd.f32 %v2846, %v2567
    %v2848 = vadd.f32 %v2847, %v2568
    %v2849 = vadd.f32 %v2848, %v2569
    %v2850 = vadd.f32 %v2849, %v2570
    %v2851 = vadd.f32 %v2850, %v2571
    %v2852 = vadd.f32 %v2851, %v2572
    %v2853 = vadd.f32 %v2852, %v2573
    %v2854 = vadd.f32 %v2853, %v2574
    %v2855 = vadd.f32 %v2854, %v2575
    %v2856 = vadd.f32 %v2855, %v2576
    %v2857 = vadd.f32 %v2856, %v2577
    %v2858 = vadd.f32 %v2857, %v2578
    %v2859 = vadd.f32 %v2858, %v2579
    %v2860 = vadd.f32 %v2859, %v2580
    %v2861 = vadd.f32 %v2860, %v2581
    %v2862 = vadd.f32 %v2861, %v2582
    %v2863 = vadd.f32 %v2862, %v2583
    %v2864 = vadd.f32 %v2863, %v2584
    %v2865 = vadd.f32 %v2864, %v2585
    %v2866 = vadd.f32 %v2865, %v2586
    %v2867 = vadd.f32 %v2866, %v2587
    %v2868 = vadd.f32 %v2867, %v2588
    %v2869 = vadd.f32 %v2868, %v2589
    %v2870 = vadd.f32 %v2869, %v2590
    %v2871 = vadd.f32 %v2870, %v2591
    %v2872 = vadd.f32 %v2871, %v2592
    %v2873 = vadd.f32 %v2872, %v2593
    %v2874 = vadd.f32 %v2873, %v2594
    %v2875 = vadd.f32 %v2874, %v2595
    %v2876 = vrot.slane %v2875, 4
    %v2877 = vadd.f32 %v2875, %v2876
    %v2878 = vrot.slane %v2877, 2
    %v2879 = vadd.f32 %v2877, %v2878
    %v2880 = vrot.slane %v2879, 1
    %v2881 = vadd.f32 %v2879, %v2880
    %v2882 = vadd.f32 %v2596, %v2597
    %v2883 = vadd.f32 %v2882, %v2598
    %v2884 = vadd.f32 %v2883, %v2599
    %v2885 = vadd.f32 %v2884, %v2600
    %v2886 = vadd.f32 %v2885, %v2601
    %v2887 = vadd.f32 %v2886, %v2602
    %v2888 = vadd.f32 %v2887, %v2603
    %v2889 = vadd.f32 %v2888, %v2604
    %v2890 = vadd.f32 %v2889, %v2605
    %v2891 = vadd.f32 %v2890, %v2606
    %v2892 = vadd.f32 %v2891, %v2607
    %v2893 = vadd.f32 %v2892, %v2608
    %v2894 = vadd.f32 %v2893, %v2609
    %v2895 = vadd.f32 %v2894, %v2610
    %v2896 = vadd.f32 %v2895, %v2611
    %v2897 = vadd.f32 %v2896, %v2612
    %v2898 = vadd.f32 %v2897, %v2613
    %v2899 = vadd.f32 %v2898, %v2614
    %v2900 = vadd.f32 %v2899, %v2615
    %v2901 = vadd.f32 %v2900, %v2616
    %v2902 = vadd.f32 %v2901, %v2617
    %v2903 = vadd.f32 %v2902, %v2618
    %v2904 = vadd.f32 %v2903, %v2619
    %v2905 = vadd.f32 %v2904, %v2620
    %v2906 = vadd.f32 %v2905, %v2621
    %v2907 = vadd.f32 %v2906, %v2622
    %v2908 = vadd.f32 %v2907, %v2623
    %v2909 = vadd.f32 %v2908, %v2624
    %v2910 = vadd.f32 %v2909, %v2625
    %v2911 = vadd.f32 %v2910, %v2626
    %v2912 = vadd.f32 %v2911, %v2627
    %v2913 = vrot.slane %v2912, 4
    %v2914 = vadd.f32 %v2912, %v2913
    %v2915 = vrot.slane %v2914, 2
    %v2916 = vadd.f32 %v2914, %v2915
    %v2917 = vrot.slane %v2916, 1
    %v2918 = vadd.f32 %v2916, %v2917
    %v2919 = vadd.f32 %v2628, %v2629
    %v2920 = vadd.f32 %v2919, %v2630
    %v2921 = vadd.f32 %v2920, %v2631
    %v2922 = vadd.f32 %v2921, %v2632
    %v2923 = vadd.f32 %v2922, %v2633
    %v2924 = vadd.f32 %v2923, %v2634
    %v2925 = vadd.f32 %v2924, %v2635
    %v2926 = vadd.f32 %v2925, %v2636
    %v2927 = vadd.f32 %v2926, %v2637
    %v2928 = vadd.f32 %v2927, %v2638
    %v2929 = vadd.f32 %v2928, %v2639
    %v2930 = vadd.f32 %v2929, %v2640
    %v2931 = vadd.f32 %v2930, %v2641
    %v2932 = vadd.f32 %v2931, %v2642
    %v2933 = vadd.f32 %v2932, %v2643
    %v2934 = vadd.f32 %v2933, %v2644
    %v2935 = vadd.f32 %v2934, %v2645
    %v2936 = vadd.f32 %v2935, %v2646
    %v2937 = vadd.f32 %v2936, %v2647
    %v2938 = vadd.f32 %v2937, %v2648
    %v2939 = vadd.f32 %v2938, %v2649
    %v2940 = vadd.f32 %v2939, %v2650
    %v2941 = vadd.f32 %v2940, %v2651
    %v2942 = vadd.f32 %v2941, %v2652
    %v2943 = vadd.f32 %v2942, %v2653
    %v2944 = vadd.f32 %v2943, %v2654
    %v2945 = vadd.f32 %v2944, %v2655
    %v2946 = vadd.f32 %v2945, %v2656
    %v2947 = vadd.f32 %v2946, %v2657
    %v2948 = vadd.f32 %v2947, %v2658
    %v2949 = vadd.f32 %v2948, %v2659
    %v2950 = vrot.slane %v2949, 4
    %v2951 = vadd.f32 %v2949, %v2950
    %v2952 = vrot.slane %v2951, 2
    %v2953 = vadd.f32 %v2951, %v2952
    %v2954 = vrot.slane %v2953, 1
    %v2955 = vadd.f32 %v2953, %v2954
    %v2956 = vrcp.pop 256.0
    %v2957 = vmul.f32 %v2696, %v2956
    %v2958 = vmul.f32 %v2733, %v2956
    %v2959 = vmul.f32 %v2770, %v2956
    %v2960 = vmul.f32 %v2807, %v2956
    %v2961 = vmul.f32 %v2844, %v2956
    %v2962 = vmul.f32 %v2881, %v2956
    %v2963 = vmul.f32 %v2918, %v2956
    %v2964 = vmul.f32 %v2955, %v2956
    %v2965 = vpack.c.bf16 %v2957, %v2957
    %v2966 = vpack.c.bf16 %v2958, %v2958
    %v2967 = vpack.c.bf16 %v2959, %v2959
    %v2968 = vpack.c.bf16 %v2960, %v2960
    %v2969 = vpack.c.bf16 %v2961, %v2961
    %v2970 = vpack.c.bf16 %v2962, %v2962
    %v2971 = vpack.c.bf16 %v2963, %v2963
    %v2972 = vpack.c.bf16 %v2964, %v2964
    %v2973 = vld [vmem:[%s3] sm:$0xff]
    %v2974 = vld [vmem:[%s3 + $0x8] sm:$0xff]
    %v2975 = vld [vmem:[%s3 + $0x10] sm:$0xff]
    %v2976 = vld [vmem:[%s3 + $0x18] sm:$0xff]
    %v2977 = vld [vmem:[%s3 + $0x20] sm:$0xff]
    %v2978 = vld [vmem:[%s3 + $0x28] sm:$0xff]
    %v2979 = vld [vmem:[%s3 + $0x30] sm:$0xff]
    %v2980 = vld [vmem:[%s3 + $0x38] sm:$0xff]
    %v2981 = vld [vmem:[%s3 + $0x40] sm:$0xff]
    %v2982 = vld [vmem:[%s3 + $0x48] sm:$0xff]
    %v2983 = vld [vmem:[%s3 + $0x50] sm:$0xff]
    %v2984 = vld [vmem:[%s3 + $0x58] sm:$0xff]
    %v2985 = vld [vmem:[%s3 + $0x60] sm:$0xff]
    %v2986 = vld [vmem:[%s3 + $0x68] sm:$0xff]
    %v2987 = vld [vmem:[%s3 + $0x70] sm:$0xff]
    %v2988 = vld [vmem:[%s3 + $0x78] sm:$0xff]
    %v2989 = vld [vmem:[%s3 + $0x80] sm:$0xff]
    %v2990 = vld [vmem:[%s3 + $0x88] sm:$0xff]
    %v2991 = vld [vmem:[%s3 + $0x90] sm:$0xff]
    %v2992 = vld [vmem:[%s3 + $0x98] sm:$0xff]
    %v2993 = vld [vmem:[%s3 + $0xa0] sm:$0xff]
    %v2994 = vld [vmem:[%s3 + $0xa8] sm:$0xff]
    %v2995 = vld [vmem:[%s3 + $0xb0] sm:$0xff]
    %v2996 = vld [vmem:[%s3 + $0xb8] sm:$0xff]
    %v2997 = vld [vmem:[%s3 + $0xc0] sm:$0xff]
    %v2998 = vld [vmem:[%s3 + $0xc8] sm:$0xff]
    %v2999 = vld [vmem:[%s3 + $0xd0] sm:$0xff]
    %v3000 = vld [vmem:[%s3 + $0xd8] sm:$0xff]
    %v3001 = vld [vmem:[%s3 + $0xe0] sm:$0xff]
    %v3002 = vld [vmem:[%s3 + $0xe8] sm:$0xff]
    %v3003 = vld [vmem:[%s3 + $0xf0] sm:$0xff]
    %v3004 = vld [vmem:[%s3 + $0xf8] sm:$0xff]
    %v3005 = vld [vmem:[%s5] sm:$0xf]
    %v3007 = vlaneseq
    %v3008 = vshrl.u32 %v3007, 7
    %v3009 = vsub.s32 0, %v3008
    %v3010 = vrot.slane %v3005, %v3009
    %v3011 = vlaneseq
    %v3012 = vshrl.u32 %v3011, 7
    %v3013 = vsub.s32 1, %v3012
    %v3014 = vrot.slane %v3005, %v3013
    %v3015 = vlaneseq
    %v3016 = vshrl.u32 %v3015, 7
    %v3017 = vsub.s32 2, %v3016
    %v3018 = vrot.slane %v3005, %v3017
    %v3019 = vlaneseq
    %v3020 = vshrl.u32 %v3019, 7
    %v3021 = vsub.s32 3, %v3020
    %v3022 = vrot.slane %v3005, %v3021
    %v3035 = vunpack.c.l.b16 %v2965
    %v3036 = vunpack.c.l.b16 %v2966
    %v3037 = vunpack.c.l.b16 %v2967
    %v3038 = vunpack.c.l.b16 %v2968
    %v3039 = vunpack.c.l.b16 %v2969
    %v3040 = vunpack.c.l.b16 %v2970
    %v3041 = vunpack.c.l.b16 %v2971
    %v3042 = vunpack.c.l.b16 %v2972
    %vm3043 = vcmask 1041409
    %v3044 = vsel %vm3043, %v3036, %v3035
    %vm3045 = vcmask 1042434
    %v3046 = vsel %vm3045, %v3037, %v3044
    %vm3047 = vcmask 1043459
    %v3048 = vsel %vm3047, %v3038, %v3046
    %vm3049 = vcmask 1044484
    %v3050 = vsel %vm3049, %v3039, %v3048
    %vm3051 = vcmask 1045509
    %v3052 = vsel %vm3051, %v3040, %v3050
    %vm3053 = vcmask 1046534
    %v3054 = vsel %vm3053, %v3041, %v3052
    %vm3055 = vcmask 1047559
    %v3056 = vsel %vm3055, %v3042, %v3054
    %v3057 = vpack.c.b16 %v3056, %v3056
    %v3091 = vunpack.c.l.b16 %v2973
    %v3092 = vunpack.c.h.b16 %v2973
    %v3093 = vunpack.c.l.b16 %v2974
    %v3094 = vunpack.c.h.b16 %v2974
    %v3095 = vunpack.c.l.b16 %v2975
    %v3096 = vunpack.c.h.b16 %v2975
    %v3097 = vunpack.c.l.b16 %v2976
    %v3098 = vunpack.c.h.b16 %v2976
    %v3099 = vunpack.c.l.b16 %v2977
    %v3100 = vunpack.c.h.b16 %v2977
    %v3101 = vunpack.c.l.b16 %v2978
    %v3102 = vunpack.c.h.b16 %v2978
    %v3103 = vunpack.c.l.b16 %v2979
    %v3104 = vunpack.c.h.b16 %v2979
    %v3105 = vunpack.c.l.b16 %v2980
    %v3106 = vunpack.c.h.b16 %v2980
    %v3107 = vunpack.c.l.b16 %v2981
    %v3108 = vunpack.c.h.b16 %v2981
    %v3109 = vunpack.c.l.b16 %v2982
    %v3110 = vunpack.c.h.b16 %v2982
    %v3111 = vunpack.c.l.b16 %v2983
    %v3112 = vunpack.c.h.b16 %v2983
    %v3113 = vunpack.c.l.b16 %v2984
    %v3114 = vunpack.c.h.b16 %v2984
    %v3115 = vunpack.c.l.b16 %v2985
    %v3116 = vunpack.c.h.b16 %v2985
    %v3117 = vunpack.c.l.b16 %v2986
    %v3118 = vunpack.c.h.b16 %v2986
    %v3119 = vunpack.c.l.b16 %v2987
    %v3120 = vunpack.c.h.b16 %v2987
    %v3121 = vunpack.c.l.b16 %v2988
    %v3122 = vunpack.c.h.b16 %v2988
    %v3123 = vunpack.c.l.b16 %v2989
    %v3124 = vunpack.c.h.b16 %v2989
    %v3125 = vunpack.c.l.b16 %v2990
    %v3126 = vunpack.c.h.b16 %v2990
    %v3127 = vunpack.c.l.b16 %v2991
    %v3128 = vunpack.c.h.b16 %v2991
    %v3129 = vunpack.c.l.b16 %v2992
    %v3130 = vunpack.c.h.b16 %v2992
    %v3131 = vunpack.c.l.b16 %v2993
    %v3132 = vunpack.c.h.b16 %v2993
    %v3133 = vunpack.c.l.b16 %v2994
    %v3134 = vunpack.c.h.b16 %v2994
    %v3135 = vunpack.c.l.b16 %v2995
    %v3136 = vunpack.c.h.b16 %v2995
    %v3137 = vunpack.c.l.b16 %v2996
    %v3138 = vunpack.c.h.b16 %v2996
    %v3139 = vunpack.c.l.b16 %v2997
    %v3140 = vunpack.c.h.b16 %v2997
    %v3141 = vunpack.c.l.b16 %v2998
    %v3142 = vunpack.c.h.b16 %v2998
    %v3143 = vunpack.c.l.b16 %v2999
    %v3144 = vunpack.c.h.b16 %v2999
    %v3145 = vunpack.c.l.b16 %v3000
    %v3146 = vunpack.c.h.b16 %v3000
    %v3147 = vunpack.c.l.b16 %v3001
    %v3148 = vunpack.c.h.b16 %v3001
    %v3149 = vunpack.c.l.b16 %v3002
    %v3150 = vunpack.c.h.b16 %v3002
    %v3151 = vunpack.c.l.b16 %v3003
    %v3152 = vunpack.c.h.b16 %v3003
    %v3153 = vunpack.c.l.b16 %v3004
    %v3154 = vunpack.c.h.b16 %v3004
    %v3155 = vpack.c.b16 %v3095, %v3091
    %v3156 = vpack.c.b16 %v3096, %v3092
    %v3157 = vpack.c.b16 %v3097, %v3093
    %v3158 = vpack.c.b16 %v3098, %v3094
    %v3159 = vpack.c.b16 %v3103, %v3099
    %v3160 = vpack.c.b16 %v3104, %v3100
    %v3161 = vpack.c.b16 %v3105, %v3101
    %v3162 = vpack.c.b16 %v3106, %v3102
    %v3163 = vpack.c.b16 %v3111, %v3107
    %v3164 = vpack.c.b16 %v3112, %v3108
    %v3165 = vpack.c.b16 %v3113, %v3109
    %v3166 = vpack.c.b16 %v3114, %v3110
    %v3167 = vpack.c.b16 %v3119, %v3115
    %v3168 = vpack.c.b16 %v3120, %v3116
    %v3169 = vpack.c.b16 %v3121, %v3117
    %v3170 = vpack.c.b16 %v3122, %v3118
    %v3171 = vpack.c.b16 %v3127, %v3123
    %v3172 = vpack.c.b16 %v3128, %v3124
    %v3173 = vpack.c.b16 %v3129, %v3125
    %v3174 = vpack.c.b16 %v3130, %v3126
    %v3175 = vpack.c.b16 %v3135, %v3131
    %v3176 = vpack.c.b16 %v3136, %v3132
    %v3177 = vpack.c.b16 %v3137, %v3133
    %v3178 = vpack.c.b16 %v3138, %v3134
    %v3179 = vpack.c.b16 %v3143, %v3139
    %v3180 = vpack.c.b16 %v3144, %v3140
    %v3181 = vpack.c.b16 %v3145, %v3141
    %v3182 = vpack.c.b16 %v3146, %v3142
    %v3183 = vpack.c.b16 %v3151, %v3147
    %v3184 = vpack.c.b16 %v3152, %v3148
    %v3185 = vpack.c.b16 %v3153, %v3149
    %v3186 = vpack.c.b16 %v3154, %v3150
    %3219 = vmatprep.subr.bf16.mxu0 %v3184
    %3220 = vmatpush1.bf16.msra.mxu0 %v3183
    %3221 = vmatprep.subr.bf16.mxu0 %v3180
    %3222 = vmatpush1.bf16.msra.mxu0 %v3179
    %3223 = vmatprep.subr.bf16.mxu0 %v3176
    %3224 = vmatpush1.bf16.msra.mxu0 %v3175
    %3225 = vmatprep.subr.bf16.mxu0 %v3172
    %3226 = vmatpush1.bf16.msra.mxu0 %v3171
    %3227 = vmatprep.subr.bf16.mxu0 %v3168
    %3228 = vmatpush1.bf16.msra.mxu0 %v3167
    %3229 = vmatprep.subr.bf16.mxu0 %v3164
    %3230 = vmatpush1.bf16.msra.mxu0 %v3163
    %3231 = vmatprep.subr.bf16.mxu0 %v3160
    %3232 = vmatpush1.bf16.msra.mxu0 %v3159
    %3233 = vmatprep.subr.bf16.mxu0 %v3156
    %3234 = vmatpush1.bf16.msra.mxu0 %v3155
    %3235 = vmatprep.subr.bf16.mxu0 0
    %3236 = vmatpush2.bf16.msra.mxu0 0
    %3237 = vmatprep.subr.bf16.mxu0 0
    %3238 = vmatpush2.bf16.msra.mxu0 0
    %3239 = vmatprep.subr.bf16.mxu0 0
    %3240 = vmatpush2.bf16.msra.mxu0 0
    %3241 = vmatprep.subr.bf16.mxu0 0
    %3242 = vmatpush2.bf16.msra.mxu0 0
    %3243 = vmatprep.subr.bf16.mxu0 0
    %3244 = vmatpush2.bf16.msra.mxu0 0
    %3245 = vmatprep.subr.bf16.mxu0 0
    %3246 = vmatpush2.bf16.msra.mxu0 0
    %3247 = vmatprep.subr.bf16.mxu0 0
    %3248 = vmatpush2.bf16.msra.mxu0 0
    %3249 = vmatprep.subr.bf16.mxu0 0
    %3250 = vmatpush2.bf16.msra.mxu0 0
    %3251 = vmatprep.mubr.bf16.mxu0 0
    %3252 = vmatmul.mubr.bf16.gmra.mxu0 %v3057
    %v3253 = vpop.f32.mrf.mxu0
    %v3254 = vadd.f32 %v3010, %v3253
    %v3255 = vpop.f32.mrf.mxu0
    %v3256 = vadd.f32 %v3014, %v3255
    %v3257 = vpop.f32.mrf.mxu0
    %v3258 = vpop.f32.mrf.mxu0
    %3259 = vdwg.mxu0
    %3260 = vmatprep.subr.bf16.mxu0 %v3186
    %3261 = vmatpush1.bf16.msra.mxu0 %v3185
    %3262 = vmatprep.subr.bf16.mxu0 %v3182
    %3263 = vmatpush1.bf16.msra.mxu0 %v3181
    %3264 = vmatprep.subr.bf16.mxu0 %v3178
    %3265 = vmatpush1.bf16.msra.mxu0 %v3177
    %3266 = vmatprep.subr.bf16.mxu0 %v3174
    %3267 = vmatpush1.bf16.msra.mxu0 %v3173
    %3268 = vmatprep.subr.bf16.mxu0 %v3170
    %3269 = vmatpush1.bf16.msra.mxu0 %v3169
    %3270 = vmatprep.subr.bf16.mxu0 %v3166
    %3271 = vmatpush1.bf16.msra.mxu0 %v3165
    %3272 = vmatprep.subr.bf16.mxu0 %v3162
    %3273 = vmatpush1.bf16.msra.mxu0 %v3161
    %3274 = vmatprep.subr.bf16.mxu0 %v3158
    %3275 = vmatpush1.bf16.msra.mxu0 %v3157
    %3276 = vmatprep.subr.bf16.mxu0 0
    %3277 = vmatpush2.bf16.msra.mxu0 0
    %3278 = vmatprep.subr.bf16.mxu0 0
    %3279 = vmatpush2.bf16.msra.mxu0 0
    %3280 = vmatprep.subr.bf16.mxu0 0
    %3281 = vmatpush2.bf16.msra.mxu0 0
    %3282 = vmatprep.subr.bf16.mxu0 0
    %3283 = vmatpush2.bf16.msra.mxu0 0
    %3284 = vmatprep.subr.bf16.mxu0 0
    %3285 = vmatpush2.bf16.msra.mxu0 0
    %3286 = vmatprep.subr.bf16.mxu0 0
    %3287 = vmatpush2.bf16.msra.mxu0 0
    %3288 = vmatprep.subr.bf16.mxu0 0
    %3289 = vmatpush2.bf16.msra.mxu0 0
    %3290 = vmatprep.subr.bf16.mxu0 0
    %3291 = vmatpush2.bf16.msra.mxu0 0
    %3292 = vmatprep.mubr.bf16.mxu0 0
    %3293 = vmatmul.mubr.bf16.gmra.mxu0 %v3057
    %v3294 = vpop.f32.mrf.mxu0
    %v3295 = vadd.f32 %v3018, %v3294
    %v3296 = vpop.f32.mrf.mxu0
    %v3297 = vadd.f32 %v3022, %v3296
    %v3298 = vpop.f32.mrf.mxu0
    %v3299 = vpop.f32.mrf.mxu0
    %3300 = vdwg.mxu0
    %v3301 = vld [vmem:[%s4] sm:$0xff]
    %v3302 = vld [vmem:[%s4 + $0x8] sm:$0xff]
    %v3303 = vld [vmem:[%s4 + $0x10] sm:$0xff]
    %v3304 = vld [vmem:[%s4 + $0x18] sm:$0xff]
    %v3305 = vld [vmem:[%s4 + $0x20] sm:$0xff]
    %v3306 = vld [vmem:[%s4 + $0x28] sm:$0xff]
    %v3307 = vld [vmem:[%s4 + $0x30] sm:$0xff]
    %v3308 = vld [vmem:[%s4 + $0x38] sm:$0xff]
    %v3309 = vld [vmem:[%s4 + $0x40] sm:$0xff]
    %v3310 = vld [vmem:[%s4 + $0x48] sm:$0xff]
    %v3311 = vld [vmem:[%s4 + $0x50] sm:$0xff]
    %v3312 = vld [vmem:[%s4 + $0x58] sm:$0xff]
    %v3313 = vld [vmem:[%s4 + $0x60] sm:$0xff]
    %v3314 = vld [vmem:[%s4 + $0x68] sm:$0xff]
    %v3315 = vld [vmem:[%s4 + $0x70] sm:$0xff]
    %v3316 = vld [vmem:[%s4 + $0x78] sm:$0xff]
    %v3317 = vld [vmem:[%s4 + $0x80] sm:$0xff]
    %v3318 = vld [vmem:[%s4 + $0x88] sm:$0xff]
    %v3319 = vld [vmem:[%s4 + $0x90] sm:$0xff]
    %v3320 = vld [vmem:[%s4 + $0x98] sm:$0xff]
    %v3321 = vld [vmem:[%s4 + $0xa0] sm:$0xff]
    %v3322 = vld [vmem:[%s4 + $0xa8] sm:$0xff]
    %v3323 = vld [vmem:[%s4 + $0xb0] sm:$0xff]
    %v3324 = vld [vmem:[%s4 + $0xb8] sm:$0xff]
    %v3325 = vld [vmem:[%s4 + $0xc0] sm:$0xff]
    %v3326 = vld [vmem:[%s4 + $0xc8] sm:$0xff]
    %v3327 = vld [vmem:[%s4 + $0xd0] sm:$0xff]
    %v3328 = vld [vmem:[%s4 + $0xd8] sm:$0xff]
    %v3329 = vld [vmem:[%s4 + $0xe0] sm:$0xff]
    %v3330 = vld [vmem:[%s4 + $0xe8] sm:$0xff]
    %v3331 = vld [vmem:[%s4 + $0xf0] sm:$0xff]
    %v3332 = vld [vmem:[%s4 + $0xf8] sm:$0xff]
    %v3365 = vunpack.c.l.b16 %v3301
    %v3366 = vunpack.c.h.b16 %v3301
    %v3367 = vunpack.c.l.b16 %v3302
    %v3368 = vunpack.c.h.b16 %v3302
    %v3369 = vunpack.c.l.b16 %v3303
    %v3370 = vunpack.c.h.b16 %v3303
    %v3371 = vunpack.c.l.b16 %v3304
    %v3372 = vunpack.c.h.b16 %v3304
    %v3373 = vunpack.c.l.b16 %v3305
    %v3374 = vunpack.c.h.b16 %v3305
    %v3375 = vunpack.c.l.b16 %v3306
    %v3376 = vunpack.c.h.b16 %v3306
    %v3377 = vunpack.c.l.b16 %v3307
    %v3378 = vunpack.c.h.b16 %v3307
    %v3379 = vunpack.c.l.b16 %v3308
    %v3380 = vunpack.c.h.b16 %v3308
    %v3381 = vunpack.c.l.b16 %v3309
    %v3382 = vunpack.c.h.b16 %v3309
    %v3383 = vunpack.c.l.b16 %v3310
    %v3384 = vunpack.c.h.b16 %v3310
    %v3385 = vunpack.c.l.b16 %v3311
    %v3386 = vunpack.c.h.b16 %v3311
    %v3387 = vunpack.c.l.b16 %v3312
    %v3388 = vunpack.c.h.b16 %v3312
    %v3389 = vunpack.c.l.b16 %v3313
    %v3390 = vunpack.c.h.b16 %v3313
    %v3391 = vunpack.c.l.b16 %v3314
    %v3392 = vunpack.c.h.b16 %v3314
    %v3393 = vunpack.c.l.b16 %v3315
    %v3394 = vunpack.c.h.b16 %v3315
    %v3395 = vunpack.c.l.b16 %v3316
    %v3396 = vunpack.c.h.b16 %v3316
    %v3397 = vunpack.c.l.b16 %v3317
    %v3398 = vunpack.c.h.b16 %v3317
    %v3399 = vunpack.c.l.b16 %v3318
    %v3400 = vunpack.c.h.b16 %v3318
    %v3401 = vunpack.c.l.b16 %v3319
    %v3402 = vunpack.c.h.b16 %v3319
    %v3403 = vunpack.c.l.b16 %v3320
    %v3404 = vunpack.c.h.b16 %v3320
    %v3405 = vunpack.c.l.b16 %v3321
    %v3406 = vunpack.c.h.b16 %v3321
    %v3407 = vunpack.c.l.b16 %v3322
    %v3408 = vunpack.c.h.b16 %v3322
    %v3409 = vunpack.c.l.b16 %v3323
    %v3410 = vunpack.c.h.b16 %v3323
    %v3411 = vunpack.c.l.b16 %v3324
    %v3412 = vunpack.c.h.b16 %v3324
    %v3413 = vunpack.c.l.b16 %v3325
    %v3414 = vunpack.c.h.b16 %v3325
    %v3415 = vunpack.c.l.b16 %v3326
    %v3416 = vunpack.c.h.b16 %v3326
    %v3417 = vunpack.c.l.b16 %v3327
    %v3418 = vunpack.c.h.b16 %v3327
    %v3419 = vunpack.c.l.b16 %v3328
    %v3420 = vunpack.c.h.b16 %v3328
    %v3421 = vunpack.c.l.b16 %v3329
    %v3422 = vunpack.c.h.b16 %v3329
    %v3423 = vunpack.c.l.b16 %v3330
    %v3424 = vunpack.c.h.b16 %v3330
    %v3425 = vunpack.c.l.b16 %v3331
    %v3426 = vunpack.c.h.b16 %v3331
    %v3427 = vunpack.c.l.b16 %v3332
    %v3428 = vunpack.c.h.b16 %v3332
    %v3429 = vpack.c.b16 %v3369, %v3365
    %v3430 = vpack.c.b16 %v3370, %v3366
    %v3431 = vpack.c.b16 %v3371, %v3367
    %v3432 = vpack.c.b16 %v3372, %v3368
    %v3433 = vpack.c.b16 %v3377, %v3373
    %v3434 = vpack.c.b16 %v3378, %v3374
    %v3435 = vpack.c.b16 %v3379, %v3375
    %v3436 = vpack.c.b16 %v3380, %v3376
    %v3437 = vpack.c.b16 %v3385, %v3381
    %v3438 = vpack.c.b16 %v3386, %v3382
    %v3439 = vpack.c.b16 %v3387, %v3383
    %v3440 = vpack.c.b16 %v3388, %v3384
    %v3441 = vpack.c.b16 %v3393, %v3389
    %v3442 = vpack.c.b16 %v3394, %v3390
    %v3443 = vpack.c.b16 %v3395, %v3391
    %v3444 = vpack.c.b16 %v3396, %v3392
    %v3445 = vpack.c.b16 %v3401, %v3397
    %v3446 = vpack.c.b16 %v3402, %v3398
    %v3447 = vpack.c.b16 %v3403, %v3399
    %v3448 = vpack.c.b16 %v3404, %v3400
    %v3449 = vpack.c.b16 %v3409, %v3405
    %v3450 = vpack.c.b16 %v3410, %v3406
    %v3451 = vpack.c.b16 %v3411, %v3407
    %v3452 = vpack.c.b16 %v3412, %v3408
    %v3453 = vpack.c.b16 %v3417, %v3413
    %v3454 = vpack.c.b16 %v3418, %v3414
    %v3455 = vpack.c.b16 %v3419, %v3415
    %v3456 = vpack.c.b16 %v3420, %v3416
    %v3457 = vpack.c.b16 %v3425, %v3421
    %v3458 = vpack.c.b16 %v3426, %v3422
    %v3459 = vpack.c.b16 %v3427, %v3423
    %v3460 = vpack.c.b16 %v3428, %v3424
    %3493 = vmatprep.subr.bf16.mxu0 %v3458
    %3494 = vmatpush1.bf16.msra.mxu0 %v3457
    %3495 = vmatprep.subr.bf16.mxu0 %v3454
    %3496 = vmatpush1.bf16.msra.mxu0 %v3453
    %3497 = vmatprep.subr.bf16.mxu0 %v3450
    %3498 = vmatpush1.bf16.msra.mxu0 %v3449
    %3499 = vmatprep.subr.bf16.mxu0 %v3446
    %3500 = vmatpush1.bf16.msra.mxu0 %v3445
    %3501 = vmatprep.subr.bf16.mxu0 %v3442
    %3502 = vmatpush1.bf16.msra.mxu0 %v3441
    %3503 = vmatprep.subr.bf16.mxu0 %v3438
    %3504 = vmatpush1.bf16.msra.mxu0 %v3437
    %3505 = vmatprep.subr.bf16.mxu0 %v3434
    %3506 = vmatpush1.bf16.msra.mxu0 %v3433
    %3507 = vmatprep.subr.bf16.mxu0 %v3430
    %3508 = vmatpush1.bf16.msra.mxu0 %v3429
    %3509 = vmatprep.subr.bf16.mxu0 0
    %3510 = vmatpush2.bf16.msra.mxu0 0
    %3511 = vmatprep.subr.bf16.mxu0 0
    %3512 = vmatpush2.bf16.msra.mxu0 0
    %3513 = vmatprep.subr.bf16.mxu0 0
    %3514 = vmatpush2.bf16.msra.mxu0 0
    %3515 = vmatprep.subr.bf16.mxu0 0
    %3516 = vmatpush2.bf16.msra.mxu0 0
    %3517 = vmatprep.subr.bf16.mxu0 0
    %3518 = vmatpush2.bf16.msra.mxu0 0
    %3519 = vmatprep.subr.bf16.mxu0 0
    %3520 = vmatpush2.bf16.msra.mxu0 0
    %3521 = vmatprep.subr.bf16.mxu0 0
    %3522 = vmatpush2.bf16.msra.mxu0 0
    %3523 = vmatprep.subr.bf16.mxu0 0
    %3524 = vmatpush2.bf16.msra.mxu0 0
    %3525 = vmatprep.mubr.bf16.mxu0 0
    %3526 = vmatmul.mubr.bf16.gmra.mxu0 0
    %v3527 = vpop.f32.mrf.mxu0
    %v3528 = vadd.f32 0.0, %v3527
    %v3529 = vpop.f32.mrf.mxu0
    %v3530 = vadd.f32 0.0, %v3529
    %v3531 = vpop.f32.mrf.mxu0
    %v3532 = vpop.f32.mrf.mxu0
    %3533 = vdwg.mxu0
    %3534 = vmatprep.subr.bf16.mxu0 %v3460
    %3535 = vmatpush1.bf16.msra.mxu0 %v3459
    %3536 = vmatprep.subr.bf16.mxu0 %v3456
    %3537 = vmatpush1.bf16.msra.mxu0 %v3455
    %3538 = vmatprep.subr.bf16.mxu0 %v3452
    %3539 = vmatpush1.bf16.msra.mxu0 %v3451
    %3540 = vmatprep.subr.bf16.mxu0 %v3448
    %3541 = vmatpush1.bf16.msra.mxu0 %v3447
    %3542 = vmatprep.subr.bf16.mxu0 %v3444
    %3543 = vmatpush1.bf16.msra.mxu0 %v3443
    %3544 = vmatprep.subr.bf16.mxu0 %v3440
    %3545 = vmatpush1.bf16.msra.mxu0 %v3439
    %3546 = vmatprep.subr.bf16.mxu0 %v3436
    %3547 = vmatpush1.bf16.msra.mxu0 %v3435
    %3548 = vmatprep.subr.bf16.mxu0 %v3432
    %3549 = vmatpush1.bf16.msra.mxu0 %v3431
    %3550 = vmatprep.subr.bf16.mxu0 0
    %3551 = vmatpush2.bf16.msra.mxu0 0
    %3552 = vmatprep.subr.bf16.mxu0 0
    %3553 = vmatpush2.bf16.msra.mxu0 0
    %3554 = vmatprep.subr.bf16.mxu0 0
    %3555 = vmatpush2.bf16.msra.mxu0 0
    %3556 = vmatprep.subr.bf16.mxu0 0
    %3557 = vmatpush2.bf16.msra.mxu0 0
    %3558 = vmatprep.subr.bf16.mxu0 0
    %3559 = vmatpush2.bf16.msra.mxu0 0
    %3560 = vmatprep.subr.bf16.mxu0 0
    %3561 = vmatpush2.bf16.msra.mxu0 0
    %3562 = vmatprep.subr.bf16.mxu0 0
    %3563 = vmatpush2.bf16.msra.mxu0 0
    %3564 = vmatprep.subr.bf16.mxu0 0
    %3565 = vmatpush2.bf16.msra.mxu0 0
    %3566 = vmatprep.mubr.bf16.mxu0 0
    %3567 = vmatmul.mubr.bf16.gmra.mxu0 0
    %v3568 = vpop.f32.mrf.mxu0
    %v3569 = vadd.f32 0.0, %v3568
    %v3570 = vpop.f32.mrf.mxu0
    %v3571 = vadd.f32 0.0, %v3570
    %v3572 = vpop.f32.mrf.mxu0
    %v3573 = vpop.f32.mrf.mxu0
    %3574 = vdwg.mxu0
    %v3575 = vadd.f32 %v3254, %v3528
    %v3576 = vadd.f32 %v3256, %v3530
    %v3577 = vadd.f32 %v3295, %v3569
    %v3578 = vadd.f32 %v3297, %v3571
    %v3579 = vxor.u32 %v3575, 2147483648
    %v3580 = vmul.f32 %v3579, 1.442695
    %v3581 = vpow.pop %v3580
    %v3582 = vadd.f32 %v3581, 1.0
    %v3583 = vrcp.pop %v3582
    %v3584 = vmul.f32 1.0, %v3583
    %v3585 = vxor.u32 %v3576, 2147483648
    %v3586 = vmul.f32 %v3585, 1.442695
    %v3587 = vpow.pop %v3586
    %v3588 = vadd.f32 %v3587, 1.0
    %v3589 = vrcp.pop %v3588
    %v3590 = vmul.f32 1.0, %v3589
    %v3591 = vtanh.pop %v3577
    %v3592 = vxor.u32 %v3578, 2147483648
    %v3593 = vmul.f32 %v3592, 1.442695
    %v3594 = vpow.pop %v3593
    %v3595 = vadd.f32 %v3594, 1.0
    %v3596 = vrcp.pop %v3595
    %v3597 = vmul.f32 1.0, %v3596
    %v3598 = vmul.f32 %v3590, 0.0
    %v3599 = vmul.f32 %v3584, %v3591
    %v3600 = vadd.f32 %v3598, %v3599
    %v3601 = vtanh.pop %v3600
    %v3602 = vmul.f32 %v3597, %v3601
    %v3603 = vpack.c.bf16 %v3602, %v3602
    %v3604 = vpack.c.bf16 0.0, 0.0
    %v3605 = vld [vmem:[%s6] sm:$0xff]
    %v3606 = vld [vmem:[%s6 + $0x8] sm:$0xff]
    %v3607 = vld [vmem:[%s6 + $0x10] sm:$0xff]
    %v3608 = vld [vmem:[%s6 + $0x18] sm:$0xff]
    %v3609 = vld [vmem:[%s6 + $0x20] sm:$0xff]
    %v3610 = vld [vmem:[%s6 + $0x28] sm:$0xff]
    %v3611 = vld [vmem:[%s6 + $0x30] sm:$0xff]
    %v3612 = vld [vmem:[%s6 + $0x38] sm:$0xff]
    %v3613 = vld [vmem:[%s6 + $0x40] sm:$0xff]
    %v3614 = vld [vmem:[%s6 + $0x48] sm:$0xff]
    %v3615 = vld [vmem:[%s6 + $0x50] sm:$0xff]
    %v3616 = vld [vmem:[%s6 + $0x58] sm:$0xff]
    %v3617 = vld [vmem:[%s6 + $0x60] sm:$0xff]
    %v3618 = vld [vmem:[%s6 + $0x68] sm:$0xff]
    %v3619 = vld [vmem:[%s6 + $0x70] sm:$0xff]
    %v3620 = vld [vmem:[%s6 + $0x78] sm:$0xff]
    %v3621 = vld [vmem:[%s6 + $0x80] sm:$0xff]
    %v3622 = vld [vmem:[%s6 + $0x88] sm:$0xff]
    %v3623 = vld [vmem:[%s6 + $0x90] sm:$0xff]
    %v3624 = vld [vmem:[%s6 + $0x98] sm:$0xff]
    %v3625 = vld [vmem:[%s6 + $0xa0] sm:$0xff]
    %v3626 = vld [vmem:[%s6 + $0xa8] sm:$0xff]
    %v3627 = vld [vmem:[%s6 + $0xb0] sm:$0xff]
    %v3628 = vld [vmem:[%s6 + $0xb8] sm:$0xff]
    %v3629 = vld [vmem:[%s6 + $0xc0] sm:$0xff]
    %v3630 = vld [vmem:[%s6 + $0xc8] sm:$0xff]
    %v3631 = vld [vmem:[%s6 + $0xd0] sm:$0xff]
    %v3632 = vld [vmem:[%s6 + $0xd8] sm:$0xff]
    %v3633 = vld [vmem:[%s6 + $0xe0] sm:$0xff]
    %v3634 = vld [vmem:[%s6 + $0xe8] sm:$0xff]
    %v3635 = vld [vmem:[%s6 + $0xf0] sm:$0xff]
    %v3636 = vld [vmem:[%s6 + $0xf8] sm:$0xff]
    %v3637 = vld [vmem:[%s6 + $0x100] sm:$0xff]
    %v3638 = vld [vmem:[%s6 + $0x108] sm:$0xff]
    %v3639 = vld [vmem:[%s6 + $0x110] sm:$0xff]
    %v3640 = vld [vmem:[%s6 + $0x118] sm:$0xff]
    %v3641 = vld [vmem:[%s6 + $0x120] sm:$0xff]
    %v3642 = vld [vmem:[%s6 + $0x128] sm:$0xff]
    %v3643 = vld [vmem:[%s6 + $0x130] sm:$0xff]
    %v3644 = vld [vmem:[%s6 + $0x138] sm:$0xff]
    %v3645 = vld [vmem:[%s6 + $0x140] sm:$0xff]
    %v3646 = vld [vmem:[%s6 + $0x148] sm:$0xff]
    %v3647 = vld [vmem:[%s6 + $0x150] sm:$0xff]
    %v3648 = vld [vmem:[%s6 + $0x158] sm:$0xff]
    %v3649 = vld [vmem:[%s6 + $0x160] sm:$0xff]
    %v3650 = vld [vmem:[%s6 + $0x168] sm:$0xff]
    %v3651 = vld [vmem:[%s6 + $0x170] sm:$0xff]
    %v3652 = vld [vmem:[%s6 + $0x178] sm:$0xff]
    %v3653 = vld [vmem:[%s6 + $0x180] sm:$0xff]
    %v3654 = vld [vmem:[%s6 + $0x188] sm:$0xff]
    %v3655 = vld [vmem:[%s6 + $0x190] sm:$0xff]
    %v3656 = vld [vmem:[%s6 + $0x198] sm:$0xff]
    %v3657 = vld [vmem:[%s6 + $0x1a0] sm:$0xff]
    %v3658 = vld [vmem:[%s6 + $0x1a8] sm:$0xff]
    %v3659 = vld [vmem:[%s6 + $0x1b0] sm:$0xff]
    %v3660 = vld [vmem:[%s6 + $0x1b8] sm:$0xff]
    %v3661 = vld [vmem:[%s6 + $0x1c0] sm:$0xff]
    %v3662 = vld [vmem:[%s6 + $0x1c8] sm:$0xff]
    %v3663 = vld [vmem:[%s6 + $0x1d0] sm:$0xff]
    %v3664 = vld [vmem:[%s6 + $0x1d8] sm:$0xff]
    %v3665 = vld [vmem:[%s6 + $0x1e0] sm:$0xff]
    %v3666 = vld [vmem:[%s6 + $0x1e8] sm:$0xff]
    %v3667 = vld [vmem:[%s6 + $0x1f0] sm:$0xff]
    %v3668 = vld [vmem:[%s6 + $0x1f8] sm:$0xff]
    %v3669 = vld [vmem:[%s7] sm:$0xf]
    %v3734 = vunpack.c.l.b16 %v3605
    %v3735 = vunpack.c.h.b16 %v3605
    %v3736 = vunpack.c.l.b16 %v3606
    %v3737 = vunpack.c.h.b16 %v3606
    %v3738 = vunpack.c.l.b16 %v3607
    %v3739 = vunpack.c.h.b16 %v3607
    %v3740 = vunpack.c.l.b16 %v3608
    %v3741 = vunpack.c.h.b16 %v3608
    %v3742 = vunpack.c.l.b16 %v3609
    %v3743 = vunpack.c.h.b16 %v3609
    %v3744 = vunpack.c.l.b16 %v3610
    %v3745 = vunpack.c.h.b16 %v3610
    %v3746 = vunpack.c.l.b16 %v3611
    %v3747 = vunpack.c.h.b16 %v3611
    %v3748 = vunpack.c.l.b16 %v3612
    %v3749 = vunpack.c.h.b16 %v3612
    %v3750 = vunpack.c.l.b16 %v3613
    %v3751 = vunpack.c.h.b16 %v3613
    %v3752 = vunpack.c.l.b16 %v3614
    %v3753 = vunpack.c.h.b16 %v3614
    %v3754 = vunpack.c.l.b16 %v3615
    %v3755 = vunpack.c.h.b16 %v3615
    %v3756 = vunpack.c.l.b16 %v3616
    %v3757 = vunpack.c.h.b16 %v3616
    %v3758 = vunpack.c.l.b16 %v3617
    %v3759 = vunpack.c.h.b16 %v3617
    %v3760 = vunpack.c.l.b16 %v3618
    %v3761 = vunpack.c.h.b16 %v3618
    %v3762 = vunpack.c.l.b16 %v3619
    %v3763 = vunpack.c.h.b16 %v3619
    %v3764 = vunpack.c.l.b16 %v3620
    %v3765 = vunpack.c.h.b16 %v3620
    %v3766 = vunpack.c.l.b16 %v3621
    %v3767 = vunpack.c.h.b16 %v3621
    %v3768 = vunpack.c.l.b16 %v3622
    %v3769 = vunpack.c.h.b16 %v3622
    %v3770 = vunpack.c.l.b16 %v3623
    %v3771 = vunpack.c.h.b16 %v3623
    %v3772 = vunpack.c.l.b16 %v3624
    %v3773 = vunpack.c.h.b16 %v3624
    %v3774 = vunpack.c.l.b16 %v3625
    %v3775 = vunpack.c.h.b16 %v3625
    %v3776 = vunpack.c.l.b16 %v3626
    %v3777 = vunpack.c.h.b16 %v3626
    %v3778 = vunpack.c.l.b16 %v3627
    %v3779 = vunpack.c.h.b16 %v3627
    %v3780 = vunpack.c.l.b16 %v3628
    %v3781 = vunpack.c.h.b16 %v3628
    %v3782 = vunpack.c.l.b16 %v3629
    %v3783 = vunpack.c.h.b16 %v3629
    %v3784 = vunpack.c.l.b16 %v3630
    %v3785 = vunpack.c.h.b16 %v3630
    %v3786 = vunpack.c.l.b16 %v3631
    %v3787 = vunpack.c.h.b16 %v3631
    %v3788 = vunpack.c.l.b16 %v3632
    %v3789 = vunpack.c.h.b16 %v3632
    %v3790 = vunpack.c.l.b16 %v3633
    %v3791 = vunpack.c.h.b16 %v3633
    %v3792 = vunpack.c.l.b16 %v3634
    %v3793 = vunpack.c.h.b16 %v3634
    %v3794 = vunpack.c.l.b16 %v3635
    %v3795 = vunpack.c.h.b16 %v3635
    %v3796 = vunpack.c.l.b16 %v3636
    %v3797 = vunpack.c.h.b16 %v3636
    %v3798 = vunpack.c.l.b16 %v3637
    %v3799 = vunpack.c.h.b16 %v3637
    %v3800 = vunpack.c.l.b16 %v3638
    %v3801 = vunpack.c.h.b16 %v3638
    %v3802 = vunpack.c.l.b16 %v3639
    %v3803 = vunpack.c.h.b16 %v3639
    %v3804 = vunpack.c.l.b16 %v3640
    %v3805 = vunpack.c.h.b16 %v3640
    %v3806 = vunpack.c.l.b16 %v3641
    %v3807 = vunpack.c.h.b16 %v3641
    %v3808 = vunpack.c.l.b16 %v3642
    %v3809 = vunpack.c.h.b16 %v3642
    %v3810 = vunpack.c.l.b16 %v3643
    %v3811 = vunpack.c.h.b16 %v3643
    %v3812 = vunpack.c.l.b16 %v3644
    %v3813 = vunpack.c.h.b16 %v3644
    %v3814 = vunpack.c.l.b16 %v3645
    %v3815 = vunpack.c.h.b16 %v3645
    %v3816 = vunpack.c.l.b16 %v3646
    %v3817 = vunpack.c.h.b16 %v3646
    %v3818 = vunpack.c.l.b16 %v3647
    %v3819 = vunpack.c.h.b16 %v3647
    %v3820 = vunpack.c.l.b16 %v3648
    %v3821 = vunpack.c.h.b16 %v3648
    %v3822 = vunpack.c.l.b16 %v3649
    %v3823 = vunpack.c.h.b16 %v3649
    %v3824 = vunpack.c.l.b16 %v3650
    %v3825 = vunpack.c.h.b16 %v3650
    %v3826 = vunpack.c.l.b16 %v3651
    %v3827 = vunpack.c.h.b16 %v3651
    %v3828 = vunpack.c.l.b16 %v3652
    %v3829 = vunpack.c.h.b16 %v3652
    %v3830 = vunpack.c.l.b16 %v3653
    %v3831 = vunpack.c.h.b16 %v3653
    %v3832 = vunpack.c.l.b16 %v3654
    %v3833 = vunpack.c.h.b16 %v3654
    %v3834 = vunpack.c.l.b16 %v3655
    %v3835 = vunpack.c.h.b16 %v3655
    %v3836 = vunpack.c.l.b16 %v3656
    %v3837 = vunpack.c.h.b16 %v3656
    %v3838 = vunpack.c.l.b16 %v3657
    %v3839 = vunpack.c.h.b16 %v3657
    %v3840 = vunpack.c.l.b16 %v3658
    %v3841 = vunpack.c.h.b16 %v3658
    %v3842 = vunpack.c.l.b16 %v3659
    %v3843 = vunpack.c.h.b16 %v3659
    %v3844 = vunpack.c.l.b16 %v3660
    %v3845 = vunpack.c.h.b16 %v3660
    %v3846 = vunpack.c.l.b16 %v3661
    %v3847 = vunpack.c.h.b16 %v3661
    %v3848 = vunpack.c.l.b16 %v3662
    %v3849 = vunpack.c.h.b16 %v3662
    %v3850 = vunpack.c.l.b16 %v3663
    %v3851 = vunpack.c.h.b16 %v3663
    %v3852 = vunpack.c.l.b16 %v3664
    %v3853 = vunpack.c.h.b16 %v3664
    %v3854 = vunpack.c.l.b16 %v3665
    %v3855 = vunpack.c.h.b16 %v3665
    %v3856 = vunpack.c.l.b16 %v3666
    %v3857 = vunpack.c.h.b16 %v3666
    %v3858 = vunpack.c.l.b16 %v3667
    %v3859 = vunpack.c.h.b16 %v3667
    %v3860 = vunpack.c.l.b16 %v3668
    %v3861 = vunpack.c.h.b16 %v3668
    %v3862 = vpack.c.b16 %v3738, %v3734
    %v3863 = vpack.c.b16 %v3739, %v3735
    %v3864 = vpack.c.b16 %v3740, %v3736
    %v3865 = vpack.c.b16 %v3741, %v3737
    %v3866 = vpack.c.b16 %v3746, %v3742
    %v3867 = vpack.c.b16 %v3747, %v3743
    %v3868 = vpack.c.b16 %v3748, %v3744
    %v3869 = vpack.c.b16 %v3749, %v3745
    %v3870 = vpack.c.b16 %v3754, %v3750
    %v3871 = vpack.c.b16 %v3755, %v3751
    %v3872 = vpack.c.b16 %v3756, %v3752
    %v3873 = vpack.c.b16 %v3757, %v3753
    %v3874 = vpack.c.b16 %v3762, %v3758
    %v3875 = vpack.c.b16 %v3763, %v3759
    %v3876 = vpack.c.b16 %v3764, %v3760
    %v3877 = vpack.c.b16 %v3765, %v3761
    %v3878 = vpack.c.b16 %v3770, %v3766
    %v3879 = vpack.c.b16 %v3771, %v3767
    %v3880 = vpack.c.b16 %v3772, %v3768
    %v3881 = vpack.c.b16 %v3773, %v3769
    %v3882 = vpack.c.b16 %v3778, %v3774
    %v3883 = vpack.c.b16 %v3779, %v3775
    %v3884 = vpack.c.b16 %v3780, %v3776
    %v3885 = vpack.c.b16 %v3781, %v3777
    %v3886 = vpack.c.b16 %v3786, %v3782
    %v3887 = vpack.c.b16 %v3787, %v3783
    %v3888 = vpack.c.b16 %v3788, %v3784
    %v3889 = vpack.c.b16 %v3789, %v3785
    %v3890 = vpack.c.b16 %v3794, %v3790
    %v3891 = vpack.c.b16 %v3795, %v3791
    %v3892 = vpack.c.b16 %v3796, %v3792
    %v3893 = vpack.c.b16 %v3797, %v3793
    %v3894 = vpack.c.b16 %v3802, %v3798
    %v3895 = vpack.c.b16 %v3803, %v3799
    %v3896 = vpack.c.b16 %v3804, %v3800
    %v3897 = vpack.c.b16 %v3805, %v3801
    %v3898 = vpack.c.b16 %v3810, %v3806
    %v3899 = vpack.c.b16 %v3811, %v3807
    %v3900 = vpack.c.b16 %v3812, %v3808
    %v3901 = vpack.c.b16 %v3813, %v3809
    %v3902 = vpack.c.b16 %v3818, %v3814
    %v3903 = vpack.c.b16 %v3819, %v3815
    %v3904 = vpack.c.b16 %v3820, %v3816
    %v3905 = vpack.c.b16 %v3821, %v3817
    %v3906 = vpack.c.b16 %v3826, %v3822
    %v3907 = vpack.c.b16 %v3827, %v3823
    %v3908 = vpack.c.b16 %v3828, %v3824
    %v3909 = vpack.c.b16 %v3829, %v3825
    %v3910 = vpack.c.b16 %v3834, %v3830
    %v3911 = vpack.c.b16 %v3835, %v3831
    %v3912 = vpack.c.b16 %v3836, %v3832
    %v3913 = vpack.c.b16 %v3837, %v3833
    %v3914 = vpack.c.b16 %v3842, %v3838
    %v3915 = vpack.c.b16 %v3843, %v3839
    %v3916 = vpack.c.b16 %v3844, %v3840
    %v3917 = vpack.c.b16 %v3845, %v3841
    %v3918 = vpack.c.b16 %v3850, %v3846
    %v3919 = vpack.c.b16 %v3851, %v3847
    %v3920 = vpack.c.b16 %v3852, %v3848
    %v3921 = vpack.c.b16 %v3853, %v3849
    %v3922 = vpack.c.b16 %v3858, %v3854
    %v3923 = vpack.c.b16 %v3859, %v3855
    %v3924 = vpack.c.b16 %v3860, %v3856
    %v3925 = vpack.c.b16 %v3861, %v3857
    %v3991 = vlaneseq
    %v3992 = vshrl.u32 %v3991, 7
    %v3993 = vsub.s32 0, %v3992
    %v3994 = vrot.slane %v3669, %v3993
    %v3995 = vlaneseq
    %v3996 = vshrl.u32 %v3995, 7
    %v3997 = vsub.s32 1, %v3996
    %v3998 = vrot.slane %v3669, %v3997
    %v3999 = vlaneseq
    %v4000 = vshrl.u32 %v3999, 7
    %v4001 = vsub.s32 2, %v4000
    %v4002 = vrot.slane %v3669, %v4001
    %v4003 = vlaneseq
    %v4004 = vshrl.u32 %v4003, 7
    %v4005 = vsub.s32 3, %v4004
    %v4006 = vrot.slane %v3669, %v4005
    %4011 = vmatprep.subr.bf16.mxu0 %v3891
    %4012 = vmatpush1.bf16.msra.mxu0 %v3890
    %4013 = vmatprep.subr.bf16.mxu0 %v3887
    %4014 = vmatpush1.bf16.msra.mxu0 %v3886
    %4015 = vmatprep.subr.bf16.mxu0 %v3883
    %4016 = vmatpush1.bf16.msra.mxu0 %v3882
    %4017 = vmatprep.subr.bf16.mxu0 %v3879
    %4018 = vmatpush1.bf16.msra.mxu0 %v3878
    %4019 = vmatprep.subr.bf16.mxu0 %v3875
    %4020 = vmatpush1.bf16.msra.mxu0 %v3874
    %4021 = vmatprep.subr.bf16.mxu0 %v3871
    %4022 = vmatpush1.bf16.msra.mxu0 %v3870
    %4023 = vmatprep.subr.bf16.mxu0 %v3867
    %4024 = vmatpush1.bf16.msra.mxu0 %v3866
    %4025 = vmatprep.subr.bf16.mxu0 %v3863
    %4026 = vmatpush1.bf16.msra.mxu0 %v3862
    %4027 = vmatprep.subr.bf16.mxu0 %v3923
    %4028 = vmatpush2.bf16.msra.mxu0 %v3922
    %4029 = vmatprep.subr.bf16.mxu0 %v3919
    %4030 = vmatpush2.bf16.msra.mxu0 %v3918
    %4031 = vmatprep.subr.bf16.mxu0 %v3915
    %4032 = vmatpush2.bf16.msra.mxu0 %v3914
    %4033 = vmatprep.subr.bf16.mxu0 %v3911
    %4034 = vmatpush2.bf16.msra.mxu0 %v3910
    %4035 = vmatprep.subr.bf16.mxu0 %v3907
    %4036 = vmatpush2.bf16.msra.mxu0 %v3906
    %4037 = vmatprep.subr.bf16.mxu0 %v3903
    %4038 = vmatpush2.bf16.msra.mxu0 %v3902
    %4039 = vmatprep.subr.bf16.mxu0 %v3899
    %4040 = vmatpush2.bf16.msra.mxu0 %v3898
    %4041 = vmatprep.subr.bf16.mxu0 %v3895
    %4042 = vmatpush2.bf16.msra.mxu0 %v3894
    %4043 = vmatprep.mubr.bf16.mxu0 %v3604
    %4044 = vmatmul.mubr.bf16.gmra.mxu0 %v3603
    %v4045 = vpop.f32.mrf.mxu0
    %v4046 = vadd.f32 %v3994, %v4045
    %v4047 = vpop.f32.mrf.mxu0
    %v4048 = vadd.f32 %v3998, %v4047
    %v4049 = vpop.f32.mrf.mxu0
    %v4050 = vpop.f32.mrf.mxu0
    %4051 = vdwg.mxu0
    %4052 = vmatprep.subr.bf16.mxu0 %v3893
    %4053 = vmatpush1.bf16.msra.mxu0 %v3892
    %4054 = vmatprep.subr.bf16.mxu0 %v3889
    %4055 = vmatpush1.bf16.msra.mxu0 %v3888
    %4056 = vmatprep.subr.bf16.mxu0 %v3885
    %4057 = vmatpush1.bf16.msra.mxu0 %v3884
    %4058 = vmatprep.subr.bf16.mxu0 %v3881
    %4059 = vmatpush1.bf16.msra.mxu0 %v3880
    %4060 = vmatprep.subr.bf16.mxu0 %v3877
    %4061 = vmatpush1.bf16.msra.mxu0 %v3876
    %4062 = vmatprep.subr.bf16.mxu0 %v3873
    %4063 = vmatpush1.bf16.msra.mxu0 %v3872
    %4064 = vmatprep.subr.bf16.mxu0 %v3869
    %4065 = vmatpush1.bf16.msra.mxu0 %v3868
    %4066 = vmatprep.subr.bf16.mxu0 %v3865
    %4067 = vmatpush1.bf16.msra.mxu0 %v3864
    %4068 = vmatprep.subr.bf16.mxu0 %v3925
    %4069 = vmatpush2.bf16.msra.mxu0 %v3924
    %4070 = vmatprep.subr.bf16.mxu0 %v3921
    %4071 = vmatpush2.bf16.msra.mxu0 %v3920
    %4072 = vmatprep.subr.bf16.mxu0 %v3917
    %4073 = vmatpush2.bf16.msra.mxu0 %v3916
    %4074 = vmatprep.subr.bf16.mxu0 %v3913
    %4075 = vmatpush2.bf16.msra.mxu0 %v3912
    %4076 = vmatprep.subr.bf16.mxu0 %v3909
    %4077 = vmatpush2.bf16.msra.mxu0 %v3908
    %4078 = vmatprep.subr.bf16.mxu0 %v3905
    %4079 = vmatpush2.bf16.msra.mxu0 %v3904
    %4080 = vmatprep.subr.bf16.mxu0 %v3901
    %4081 = vmatpush2.bf16.msra.mxu0 %v3900
    %4082 = vmatprep.subr.bf16.mxu0 %v3897
    %4083 = vmatpush2.bf16.msra.mxu0 %v3896
    %4084 = vmatprep.mubr.bf16.mxu0 %v3604
    %4085 = vmatmul.mubr.bf16.gmra.mxu0 %v3603
    %v4086 = vpop.f32.mrf.mxu0
    %v4087 = vadd.f32 %v4002, %v4086
    %v4088 = vpop.f32.mrf.mxu0
    %v4089 = vadd.f32 %v4006, %v4088
    %v4090 = vpop.f32.mrf.mxu0
    %v4091 = vpop.f32.mrf.mxu0
    %4092 = vdwg.mxu0
    %v4093 = vxor.u32 %v4046, 2147483648
    %v4094 = vmul.f32 %v4093, 1.442695
    %v4095 = vpow.pop %v4094
    %v4096 = vadd.f32 %v4095, 1.0
    %v4097 = vrcp.pop %v4096
    %v4098 = vmul.f32 1.0, %v4097
    %v4099 = vxor.u32 %v4048, 2147483648
    %v4100 = vmul.f32 %v4099, 1.442695
    %v4101 = vpow.pop %v4100
    %v4102 = vadd.f32 %v4101, 1.0
    %v4103 = vrcp.pop %v4102
    %v4104 = vmul.f32 1.0, %v4103
    %v4105 = vtanh.pop %v4087
    %v4106 = vxor.u32 %v4089, 2147483648
    %v4107 = vmul.f32 %v4106, 1.442695
    %v4108 = vpow.pop %v4107
    %v4109 = vadd.f32 %v4108, 1.0
    %v4110 = vrcp.pop %v4109
    %v4111 = vmul.f32 1.0, %v4110
    %v4112 = vmul.f32 %v4104, 0.0
    %v4113 = vmul.f32 %v4098, %v4105
    %v4114 = vadd.f32 %v4112, %v4113
    %v4115 = vtanh.pop %v4114
    %v4116 = vmul.f32 %v4111, %v4115
    %4117 = vmatprep.subr.bf16.mxu0 %v3458
    %4118 = vmatpush1.bf16.msra.mxu0 %v3457
    %4119 = vmatprep.subr.bf16.mxu0 %v3454
    %4120 = vmatpush1.bf16.msra.mxu0 %v3453
    %4121 = vmatprep.subr.bf16.mxu0 %v3450
    %4122 = vmatpush1.bf16.msra.mxu0 %v3449
    %4123 = vmatprep.subr.bf16.mxu0 %v3446
    %4124 = vmatpush1.bf16.msra.mxu0 %v3445
    %4125 = vmatprep.subr.bf16.mxu0 %v3442
    %4126 = vmatpush1.bf16.msra.mxu0 %v3441
    %4127 = vmatprep.subr.bf16.mxu0 %v3438
    %4128 = vmatpush1.bf16.msra.mxu0 %v3437
    %4129 = vmatprep.subr.bf16.mxu0 %v3434
    %4130 = vmatpush1.bf16.msra.mxu0 %v3433
    %4131 = vmatprep.subr.bf16.mxu0 %v3430
    %4132 = vmatpush1.bf16.msra.mxu0 %v3429
    %4133 = vmatprep.subr.bf16.mxu0 0
    %4134 = vmatpush2.bf16.msra.mxu0 0
    %4135 = vmatprep.subr.bf16.mxu0 0
    %4136 = vmatpush2.bf16.msra.mxu0 0
    %4137 = vmatprep.subr.bf16.mxu0 0
    %4138 = vmatpush2.bf16.msra.mxu0 0
    %4139 = vmatprep.subr.bf16.mxu0 0
    %4140 = vmatpush2.bf16.msra.mxu0 0
    %4141 = vmatprep.subr.bf16.mxu0 0
    %4142 = vmatpush2.bf16.msra.mxu0 0
    %4143 = vmatprep.subr.bf16.mxu0 0
    %4144 = vmatpush2.bf16.msra.mxu0 0
    %4145 = vmatprep.subr.bf16.mxu0 0
    %4146 = vmatpush2.bf16.msra.mxu0 0
    %4147 = vmatprep.subr.bf16.mxu0 0
    %4148 = vmatpush2.bf16.msra.mxu0 0
    %4149 = vmatprep.mubr.bf16.mxu0 0
    %4150 = vmatmul.mubr.bf16.gmra.mxu0 %v3603
    %v4151 = vpop.f32.mrf.mxu0
    %v4152 = vadd.f32 0.0, %v4151
    %v4153 = vpop.f32.mrf.mxu0
    %v4154 = vadd.f32 0.0, %v4153
    %v4155 = vpop.f32.mrf.mxu0
    %v4156 = vpop.f32.mrf.mxu0
    %4157 = vdwg.mxu0
    %4158 = vmatprep.subr.bf16.mxu0 %v3460
    %4159 = vmatpush1.bf16.msra.mxu0 %v3459
    %4160 = vmatprep.subr.bf16.mxu0 %v3456
    %4161 = vmatpush1.bf16.msra.mxu0 %v3455
    %4162 = vmatprep.subr.bf16.mxu0 %v3452
    %4163 = vmatpush1.bf16.msra.mxu0 %v3451
    %4164 = vmatprep.subr.bf16.mxu0 %v3448
    %4165 = vmatpush1.bf16.msra.mxu0 %v3447
    %4166 = vmatprep.subr.bf16.mxu0 %v3444
    %4167 = vmatpush1.bf16.msra.mxu0 %v3443
    %4168 = vmatprep.subr.bf16.mxu0 %v3440
    %4169 = vmatpush1.bf16.msra.mxu0 %v3439
    %4170 = vmatprep.subr.bf16.mxu0 %v3436
    %4171 = vmatpush1.bf16.msra.mxu0 %v3435
    %4172 = vmatprep.subr.bf16.mxu0 %v3432
    %4173 = vmatpush1.bf16.msra.mxu0 %v3431
    %4174 = vmatprep.subr.bf16.mxu0 0
    %4175 = vmatpush2.bf16.msra.mxu0 0
    %4176 = vmatprep.subr.bf16.mxu0 0
    %4177 = vmatpush2.bf16.msra.mxu0 0
    %4178 = vmatprep.subr.bf16.mxu0 0
    %4179 = vmatpush2.bf16.msra.mxu0 0
    %4180 = vmatprep.subr.bf16.mxu0 0
    %4181 = vmatpush2.bf16.msra.mxu0 0
    %4182 = vmatprep.subr.bf16.mxu0 0
    %4183 = vmatpush2.bf16.msra.mxu0 0
    %4184 = vmatprep.subr.bf16.mxu0 0
    %4185 = vmatpush2.bf16.msra.mxu0 0
    %4186 = vmatprep.subr.bf16.mxu0 0
    %4187 = vmatpush2.bf16.msra.mxu0 0
    %4188 = vmatprep.subr.bf16.mxu0 0
    %4189 = vmatpush2.bf16.msra.mxu0 0
    %4190 = vmatprep.mubr.bf16.mxu0 0
    %4191 = vmatmul.mubr.bf16.gmra.mxu0 %v3603
    %v4192 = vpop.f32.mrf.mxu0
    %v4193 = vadd.f32 0.0, %v4192
    %v4194 = vpop.f32.mrf.mxu0
    %v4195 = vadd.f32 0.0, %v4194
    %v4196 = vpop.f32.mrf.mxu0
    %v4197 = vpop.f32.mrf.mxu0
    %4198 = vdwg.mxu0
    %v4203 = vrot.slane %v4152, 7
    %v4204 = vrot.slane %v4154, 7
    %v4205 = vrot.slane %v4193, 7
    %v4206 = vrot.slane %v4195, 7
    %v4211 = vadd.f32 %v3254, %v4203
    %v4212 = vadd.f32 %v3256, %v4204
    %v4213 = vadd.f32 %v3295, %v4205
    %v4214 = vadd.f32 %v3297, %v4206
    %v4215 = vxor.u32 %v4211, 2147483648
    %v4216 = vmul.f32 %v4215, 1.442695
    %v4217 = vpow.pop %v4216
    %v4218 = vadd.f32 %v4217, 1.0
    %v4219 = vrcp.pop %v4218
    %v4220 = vmul.f32 1.0, %v4219
    %v4221 = vxor.u32 %v4212, 2147483648
    %v4222 = vmul.f32 %v4221, 1.442695
    %v4223 = vpow.pop %v4222
    %v4224 = vadd.f32 %v4223, 1.0
    %v4225 = vrcp.pop %v4224
    %v4226 = vmul.f32 1.0, %v4225
    %v4227 = vtanh.pop %v4213
    %v4228 = vxor.u32 %v4214, 2147483648
    %v4229 = vmul.f32 %v4228, 1.442695
    %v4230 = vpow.pop %v4229
    %v4231 = vadd.f32 %v4230, 1.0
    %v4232 = vrcp.pop %v4231
    %v4233 = vmul.f32 1.0, %v4232
    %v4235 = vrot.slane %v3600, 7
    %v4237 = vmul.f32 %v4226, %v4235
    %v4238 = vmul.f32 %v4220, %v4227
    %v4239 = vadd.f32 %v4237, %v4238
    %v4240 = vtanh.pop %v4239
    %v4241 = vmul.f32 %v4233, %v4240
    %v4243 = vrot.slane %v4116, 7
    %v4245 = vpack.c.bf16 %v4241, %v4241
    %v4246 = vpack.c.bf16 %v4243, %v4243
    %v4248 = vshrl.u32 %v4245, 16
    %v4251 = vshrl.u32 %v4246, 16
    %4255 = vmatprep.subr.bf16.mxu0 %v3891
    %4256 = vmatpush1.bf16.msra.mxu0 %v3890
    %4257 = vmatprep.subr.bf16.mxu0 %v3887
    %4258 = vmatpush1.bf16.msra.mxu0 %v3886
    %4259 = vmatprep.subr.bf16.mxu0 %v3883
    %4260 = vmatpush1.bf16.msra.mxu0 %v3882
    %4261 = vmatprep.subr.bf16.mxu0 %v3879
    %4262 = vmatpush1.bf16.msra.mxu0 %v3878
    %4263 = vmatprep.subr.bf16.mxu0 %v3875
    %4264 = vmatpush1.bf16.msra.mxu0 %v3874
    %4265 = vmatprep.subr.bf16.mxu0 %v3871
    %4266 = vmatpush1.bf16.msra.mxu0 %v3870
    %4267 = vmatprep.subr.bf16.mxu0 %v3867
    %4268 = vmatpush1.bf16.msra.mxu0 %v3866
    %4269 = vmatprep.subr.bf16.mxu0 %v3863
    %4270 = vmatpush1.bf16.msra.mxu0 %v3862
    %4271 = vmatprep.subr.bf16.mxu0 %v3923
    %4272 = vmatpush2.bf16.msra.mxu0 %v3922
    %4273 = vmatprep.subr.bf16.mxu0 %v3919
    %4274 = vmatpush2.bf16.msra.mxu0 %v3918
    %4275 = vmatprep.subr.bf16.mxu0 %v3915
    %4276 = vmatpush2.bf16.msra.mxu0 %v3914
    %4277 = vmatprep.subr.bf16.mxu0 %v3911
    %4278 = vmatpush2.bf16.msra.mxu0 %v3910
    %4279 = vmatprep.subr.bf16.mxu0 %v3907
    %4280 = vmatpush2.bf16.msra.mxu0 %v3906
    %4281 = vmatprep.subr.bf16.mxu0 %v3903
    %4282 = vmatpush2.bf16.msra.mxu0 %v3902
    %4283 = vmatprep.subr.bf16.mxu0 %v3899
    %4284 = vmatpush2.bf16.msra.mxu0 %v3898
    %4285 = vmatprep.subr.bf16.mxu0 %v3895
    %4286 = vmatpush2.bf16.msra.mxu0 %v3894
    %4287 = vmatprep.mubr.bf16.mxu0 %v4251
    %4288 = vmatmul.mubr.bf16.gmra.mxu0 %v4248
    %v4289 = vpop.f32.mrf.mxu0
    %v4290 = vadd.f32 %v3994, %v4289
    %v4291 = vpop.f32.mrf.mxu0
    %v4292 = vadd.f32 %v3998, %v4291
    %v4293 = vpop.f32.mrf.mxu0
    %v4294 = vpop.f32.mrf.mxu0
    %4295 = vdwg.mxu0
    %4296 = vmatprep.subr.bf16.mxu0 %v3893
    %4297 = vmatpush1.bf16.msra.mxu0 %v3892
    %4298 = vmatprep.subr.bf16.mxu0 %v3889
    %4299 = vmatpush1.bf16.msra.mxu0 %v3888
    %4300 = vmatprep.subr.bf16.mxu0 %v3885
    %4301 = vmatpush1.bf16.msra.mxu0 %v3884
    %4302 = vmatprep.subr.bf16.mxu0 %v3881
    %4303 = vmatpush1.bf16.msra.mxu0 %v3880
    %4304 = vmatprep.subr.bf16.mxu0 %v3877
    %4305 = vmatpush1.bf16.msra.mxu0 %v3876
    %4306 = vmatprep.subr.bf16.mxu0 %v3873
    %4307 = vmatpush1.bf16.msra.mxu0 %v3872
    %4308 = vmatprep.subr.bf16.mxu0 %v3869
    %4309 = vmatpush1.bf16.msra.mxu0 %v3868
    %4310 = vmatprep.subr.bf16.mxu0 %v3865
    %4311 = vmatpush1.bf16.msra.mxu0 %v3864
    %4312 = vmatprep.subr.bf16.mxu0 %v3925
    %4313 = vmatpush2.bf16.msra.mxu0 %v3924
    %4314 = vmatprep.subr.bf16.mxu0 %v3921
    %4315 = vmatpush2.bf16.msra.mxu0 %v3920
    %4316 = vmatprep.subr.bf16.mxu0 %v3917
    %4317 = vmatpush2.bf16.msra.mxu0 %v3916
    %4318 = vmatprep.subr.bf16.mxu0 %v3913
    %4319 = vmatpush2.bf16.msra.mxu0 %v3912
    %4320 = vmatprep.subr.bf16.mxu0 %v3909
    %4321 = vmatpush2.bf16.msra.mxu0 %v3908
    %4322 = vmatprep.subr.bf16.mxu0 %v3905
    %4323 = vmatpush2.bf16.msra.mxu0 %v3904
    %4324 = vmatprep.subr.bf16.mxu0 %v3901
    %4325 = vmatpush2.bf16.msra.mxu0 %v3900
    %4326 = vmatprep.subr.bf16.mxu0 %v3897
    %4327 = vmatpush2.bf16.msra.mxu0 %v3896
    %4328 = vmatprep.mubr.bf16.mxu0 %v4251
    %4329 = vmatmul.mubr.bf16.gmra.mxu0 %v4248
    %v4330 = vpop.f32.mrf.mxu0
    %v4331 = vadd.f32 %v4002, %v4330
    %v4332 = vpop.f32.mrf.mxu0
    %v4333 = vadd.f32 %v4006, %v4332
    %v4334 = vpop.f32.mrf.mxu0
    %v4335 = vpop.f32.mrf.mxu0
    %4336 = vdwg.mxu0
    %v4337 = vxor.u32 %v4290, 2147483648
    %v4338 = vmul.f32 %v4337, 1.442695
    %v4339 = vpow.pop %v4338
    %v4340 = vadd.f32 %v4339, 1.0
    %v4341 = vrcp.pop %v4340
    %v4342 = vmul.f32 1.0, %v4341
    %v4343 = vxor.u32 %v4292, 2147483648
    %v4344 = vmul.f32 %v4343, 1.442695
    %v4345 = vpow.pop %v4344
    %v4346 = vadd.f32 %v4345, 1.0
    %v4347 = vrcp.pop %v4346
    %v4348 = vmul.f32 1.0, %v4347
    %v4349 = vtanh.pop %v4331
    %v4350 = vxor.u32 %v4333, 2147483648
    %v4351 = vmul.f32 %v4350, 1.442695
    %v4352 = vpow.pop %v4351
    %v4353 = vadd.f32 %v4352, 1.0
    %v4354 = vrcp.pop %v4353
    %v4355 = vmul.f32 1.0, %v4354
    %v4356 = vmul.f32 %v4348, %v4114
    %v4357 = vmul.f32 %v4342, %v4349
    %v4358 = vadd.f32 %v4356, %v4357
    %v4359 = vtanh.pop %v4358
    %v4360 = vmul.f32 %v4355, %v4359
    %4361 = vmatprep.subr.bf16.mxu0 %v3458
    %4362 = vmatpush1.bf16.msra.mxu0 %v3457
    %4363 = vmatprep.subr.bf16.mxu0 %v3454
    %4364 = vmatpush1.bf16.msra.mxu0 %v3453
    %4365 = vmatprep.subr.bf16.mxu0 %v3450
    %4366 = vmatpush1.bf16.msra.mxu0 %v3449
    %4367 = vmatprep.subr.bf16.mxu0 %v3446
    %4368 = vmatpush1.bf16.msra.mxu0 %v3445
    %4369 = vmatprep.subr.bf16.mxu0 %v3442
    %4370 = vmatpush1.bf16.msra.mxu0 %v3441
    %4371 = vmatprep.subr.bf16.mxu0 %v3438
    %4372 = vmatpush1.bf16.msra.mxu0 %v3437
    %4373 = vmatprep.subr.bf16.mxu0 %v3434
    %4374 = vmatpush1.bf16.msra.mxu0 %v3433
    %4375 = vmatprep.subr.bf16.mxu0 %v3430
    %4376 = vmatpush1.bf16.msra.mxu0 %v3429
    %4377 = vmatprep.subr.bf16.mxu0 0
    %4378 = vmatpush2.bf16.msra.mxu0 0
    %4379 = vmatprep.subr.bf16.mxu0 0
    %4380 = vmatpush2.bf16.msra.mxu0 0
    %4381 = vmatprep.subr.bf16.mxu0 0
    %4382 = vmatpush2.bf16.msra.mxu0 0
    %4383 = vmatprep.subr.bf16.mxu0 0
    %4384 = vmatpush2.bf16.msra.mxu0 0
    %4385 = vmatprep.subr.bf16.mxu0 0
    %4386 = vmatpush2.bf16.msra.mxu0 0
    %4387 = vmatprep.subr.bf16.mxu0 0
    %4388 = vmatpush2.bf16.msra.mxu0 0
    %4389 = vmatprep.subr.bf16.mxu0 0
    %4390 = vmatpush2.bf16.msra.mxu0 0
    %4391 = vmatprep.subr.bf16.mxu0 0
    %4392 = vmatpush2.bf16.msra.mxu0 0
    %4393 = vmatprep.mubr.bf16.mxu0 0
    %4394 = vmatmul.mubr.bf16.gmra.mxu0 %v4248
    %v4395 = vpop.f32.mrf.mxu0
    %v4396 = vadd.f32 0.0, %v4395
    %v4397 = vpop.f32.mrf.mxu0
    %v4398 = vadd.f32 0.0, %v4397
    %v4399 = vpop.f32.mrf.mxu0
    %v4400 = vpop.f32.mrf.mxu0
    %4401 = vdwg.mxu0
    %4402 = vmatprep.subr.bf16.mxu0 %v3460
    %4403 = vmatpush1.bf16.msra.mxu0 %v3459
    %4404 = vmatprep.subr.bf16.mxu0 %v3456
    %4405 = vmatpush1.bf16.msra.mxu0 %v3455
    %4406 = vmatprep.subr.bf16.mxu0 %v3452
    %4407 = vmatpush1.bf16.msra.mxu0 %v3451
    %4408 = vmatprep.subr.bf16.mxu0 %v3448
    %4409 = vmatpush1.bf16.msra.mxu0 %v3447
    %4410 = vmatprep.subr.bf16.mxu0 %v3444
    %4411 = vmatpush1.bf16.msra.mxu0 %v3443
    %4412 = vmatprep.subr.bf16.mxu0 %v3440
    %4413 = vmatpush1.bf16.msra.mxu0 %v3439
    %4414 = vmatprep.subr.bf16.mxu0 %v3436
    %4415 = vmatpush1.bf16.msra.mxu0 %v3435
    %4416 = vmatprep.subr.bf16.mxu0 %v3432
    %4417 = vmatpush1.bf16.msra.mxu0 %v3431
    %4418 = vmatprep.subr.bf16.mxu0 0
    %4419 = vmatpush2.bf16.msra.mxu0 0
    %4420 = vmatprep.subr.bf16.mxu0 0
    %4421 = vmatpush2.bf16.msra.mxu0 0
    %4422 = vmatprep.subr.bf16.mxu0 0
    %4423 = vmatpush2.bf16.msra.mxu0 0
    %4424 = vmatprep.subr.bf16.mxu0 0
    %4425 = vmatpush2.bf16.msra.mxu0 0
    %4426 = vmatprep.subr.bf16.mxu0 0
    %4427 = vmatpush2.bf16.msra.mxu0 0
    %4428 = vmatprep.subr.bf16.mxu0 0
    %4429 = vmatpush2.bf16.msra.mxu0 0
    %4430 = vmatprep.subr.bf16.mxu0 0
    %4431 = vmatpush2.bf16.msra.mxu0 0
    %4432 = vmatprep.subr.bf16.mxu0 0
    %4433 = vmatpush2.bf16.msra.mxu0 0
    %4434 = vmatprep.mubr.bf16.mxu0 0
    %4435 = vmatmul.mubr.bf16.gmra.mxu0 %v4248
    %v4436 = vpop.f32.mrf.mxu0
    %v4437 = vadd.f32 0.0, %v4436
    %v4438 = vpop.f32.mrf.mxu0
    %v4439 = vadd.f32 0.0, %v4438
    %v4440 = vpop.f32.mrf.mxu0
    %v4441 = vpop.f32.mrf.mxu0
    %4442 = vdwg.mxu0
    %v4447 = vrot.slane %v4396, 6
    %v4448 = vrot.slane %v4398, 6
    %v4449 = vrot.slane %v4437, 6
    %v4450 = vrot.slane %v4439, 6
    %v4455 = vadd.f32 %v3254, %v4447
    %v4456 = vadd.f32 %v3256, %v4448
    %v4457 = vadd.f32 %v3295, %v4449
    %v4458 = vadd.f32 %v3297, %v4450
    %v4459 = vxor.u32 %v4455, 2147483648
    %v4460 = vmul.f32 %v4459, 1.442695
    %v4461 = vpow.pop %v4460
    %v4462 = vadd.f32 %v4461, 1.0
    %v4463 = vrcp.pop %v4462
    %v4464 = vmul.f32 1.0, %v4463
    %v4465 = vxor.u32 %v4456, 2147483648
    %v4466 = vmul.f32 %v4465, 1.442695
    %v4467 = vpow.pop %v4466
    %v4468 = vadd.f32 %v4467, 1.0
    %v4469 = vrcp.pop %v4468
    %v4470 = vmul.f32 1.0, %v4469
    %v4471 = vtanh.pop %v4457
    %v4472 = vxor.u32 %v4458, 2147483648
    %v4473 = vmul.f32 %v4472, 1.442695
    %v4474 = vpow.pop %v4473
    %v4475 = vadd.f32 %v4474, 1.0
    %v4476 = vrcp.pop %v4475
    %v4477 = vmul.f32 1.0, %v4476
    %v4479 = vrot.slane %v4239, 7
    %v4481 = vmul.f32 %v4470, %v4479
    %v4482 = vmul.f32 %v4464, %v4471
    %v4483 = vadd.f32 %v4481, %v4482
    %v4484 = vtanh.pop %v4483
    %v4485 = vmul.f32 %v4477, %v4484
    %v4487 = vrot.slane %v4360, 6
    %v4489 = vpack.c.bf16 %v4485, %v4485
    %v4490 = vpack.c.bf16 %v4487, %v4487
    %v4493 = vrot.slane %v4489, 1
    %v4494 = vrot.slane %v4490, 1
    %4497 = vmatprep.subr.bf16.mxu0 %v3891
    %4498 = vmatpush1.bf16.msra.mxu0 %v3890
    %4499 = vmatprep.subr.bf16.mxu0 %v3887
    %4500 = vmatpush1.bf16.msra.mxu0 %v3886
    %4501 = vmatprep.subr.bf16.mxu0 %v3883
    %4502 = vmatpush1.bf16.msra.mxu0 %v3882
    %4503 = vmatprep.subr.bf16.mxu0 %v3879
    %4504 = vmatpush1.bf16.msra.mxu0 %v3878
    %4505 = vmatprep.subr.bf16.mxu0 %v3875
    %4506 = vmatpush1.bf16.msra.mxu0 %v3874
    %4507 = vmatprep.subr.bf16.mxu0 %v3871
    %4508 = vmatpush1.bf16.msra.mxu0 %v3870
    %4509 = vmatprep.subr.bf16.mxu0 %v3867
    %4510 = vmatpush1.bf16.msra.mxu0 %v3866
    %4511 = vmatprep.subr.bf16.mxu0 %v3863
    %4512 = vmatpush1.bf16.msra.mxu0 %v3862
    %4513 = vmatprep.subr.bf16.mxu0 %v3923
    %4514 = vmatpush2.bf16.msra.mxu0 %v3922
    %4515 = vmatprep.subr.bf16.mxu0 %v3919
    %4516 = vmatpush2.bf16.msra.mxu0 %v3918
    %4517 = vmatprep.subr.bf16.mxu0 %v3915
    %4518 = vmatpush2.bf16.msra.mxu0 %v3914
    %4519 = vmatprep.subr.bf16.mxu0 %v3911
    %4520 = vmatpush2.bf16.msra.mxu0 %v3910
    %4521 = vmatprep.subr.bf16.mxu0 %v3907
    %4522 = vmatpush2.bf16.msra.mxu0 %v3906
    %4523 = vmatprep.subr.bf16.mxu0 %v3903
    %4524 = vmatpush2.bf16.msra.mxu0 %v3902
    %4525 = vmatprep.subr.bf16.mxu0 %v3899
    %4526 = vmatpush2.bf16.msra.mxu0 %v3898
    %4527 = vmatprep.subr.bf16.mxu0 %v3895
    %4528 = vmatpush2.bf16.msra.mxu0 %v3894
    %4529 = vmatprep.mubr.bf16.mxu0 %v4494
    %4530 = vmatmul.mubr.bf16.gmra.mxu0 %v4493
    %v4531 = vpop.f32.mrf.mxu0
    %v4532 = vadd.f32 %v3994, %v4531
    %v4533 = vpop.f32.mrf.mxu0
    %v4534 = vadd.f32 %v3998, %v4533
    %v4535 = vpop.f32.mrf.mxu0
    %v4536 = vpop.f32.mrf.mxu0
    %4537 = vdwg.mxu0
    %4538 = vmatprep.subr.bf16.mxu0 %v3893
    %4539 = vmatpush1.bf16.msra.mxu0 %v3892
    %4540 = vmatprep.subr.bf16.mxu0 %v3889
    %4541 = vmatpush1.bf16.msra.mxu0 %v3888
    %4542 = vmatprep.subr.bf16.mxu0 %v3885
    %4543 = vmatpush1.bf16.msra.mxu0 %v3884
    %4544 = vmatprep.subr.bf16.mxu0 %v3881
    %4545 = vmatpush1.bf16.msra.mxu0 %v3880
    %4546 = vmatprep.subr.bf16.mxu0 %v3877
    %4547 = vmatpush1.bf16.msra.mxu0 %v3876
    %4548 = vmatprep.subr.bf16.mxu0 %v3873
    %4549 = vmatpush1.bf16.msra.mxu0 %v3872
    %4550 = vmatprep.subr.bf16.mxu0 %v3869
    %4551 = vmatpush1.bf16.msra.mxu0 %v3868
    %4552 = vmatprep.subr.bf16.mxu0 %v3865
    %4553 = vmatpush1.bf16.msra.mxu0 %v3864
    %4554 = vmatprep.subr.bf16.mxu0 %v3925
    %4555 = vmatpush2.bf16.msra.mxu0 %v3924
    %4556 = vmatprep.subr.bf16.mxu0 %v3921
    %4557 = vmatpush2.bf16.msra.mxu0 %v3920
    %4558 = vmatprep.subr.bf16.mxu0 %v3917
    %4559 = vmatpush2.bf16.msra.mxu0 %v3916
    %4560 = vmatprep.subr.bf16.mxu0 %v3913
    %4561 = vmatpush2.bf16.msra.mxu0 %v3912
    %4562 = vmatprep.subr.bf16.mxu0 %v3909
    %4563 = vmatpush2.bf16.msra.mxu0 %v3908
    %4564 = vmatprep.subr.bf16.mxu0 %v3905
    %4565 = vmatpush2.bf16.msra.mxu0 %v3904
    %4566 = vmatprep.subr.bf16.mxu0 %v3901
    %4567 = vmatpush2.bf16.msra.mxu0 %v3900
    %4568 = vmatprep.subr.bf16.mxu0 %v3897
    %4569 = vmatpush2.bf16.msra.mxu0 %v3896
    %4570 = vmatprep.mubr.bf16.mxu0 %v4494
    %4571 = vmatmul.mubr.bf16.gmra.mxu0 %v4493
    %v4572 = vpop.f32.mrf.mxu0
    %v4573 = vadd.f32 %v4002, %v4572
    %v4574 = vpop.f32.mrf.mxu0
    %v4575 = vadd.f32 %v4006, %v4574
    %v4576 = vpop.f32.mrf.mxu0
    %v4577 = vpop.f32.mrf.mxu0
    %4578 = vdwg.mxu0
    %v4579 = vxor.u32 %v4532, 2147483648
    %v4580 = vmul.f32 %v4579, 1.442695
    %v4581 = vpow.pop %v4580
    %v4582 = vadd.f32 %v4581, 1.0
    %v4583 = vrcp.pop %v4582
    %v4584 = vmul.f32 1.0, %v4583
    %v4585 = vxor.u32 %v4534, 2147483648
    %v4586 = vmul.f32 %v4585, 1.442695
    %v4587 = vpow.pop %v4586
    %v4588 = vadd.f32 %v4587, 1.0
    %v4589 = vrcp.pop %v4588
    %v4590 = vmul.f32 1.0, %v4589
    %v4591 = vtanh.pop %v4573
    %v4592 = vxor.u32 %v4575, 2147483648
    %v4593 = vmul.f32 %v4592, 1.442695
    %v4594 = vpow.pop %v4593
    %v4595 = vadd.f32 %v4594, 1.0
    %v4596 = vrcp.pop %v4595
    %v4597 = vmul.f32 1.0, %v4596
    %v4598 = vmul.f32 %v4590, %v4358
    %v4599 = vmul.f32 %v4584, %v4591
    %v4600 = vadd.f32 %v4598, %v4599
    %v4601 = vtanh.pop %v4600
    %v4602 = vmul.f32 %v4597, %v4601
    %4603 = vmatprep.subr.bf16.mxu0 %v3458
    %4604 = vmatpush1.bf16.msra.mxu0 %v3457
    %4605 = vmatprep.subr.bf16.mxu0 %v3454
    %4606 = vmatpush1.bf16.msra.mxu0 %v3453
    %4607 = vmatprep.subr.bf16.mxu0 %v3450
    %4608 = vmatpush1.bf16.msra.mxu0 %v3449
    %4609 = vmatprep.subr.bf16.mxu0 %v3446
    %4610 = vmatpush1.bf16.msra.mxu0 %v3445
    %4611 = vmatprep.subr.bf16.mxu0 %v3442
    %4612 = vmatpush1.bf16.msra.mxu0 %v3441
    %4613 = vmatprep.subr.bf16.mxu0 %v3438
    %4614 = vmatpush1.bf16.msra.mxu0 %v3437
    %4615 = vmatprep.subr.bf16.mxu0 %v3434
    %4616 = vmatpush1.bf16.msra.mxu0 %v3433
    %4617 = vmatprep.subr.bf16.mxu0 %v3430
    %4618 = vmatpush1.bf16.msra.mxu0 %v3429
    %4619 = vmatprep.subr.bf16.mxu0 0
    %4620 = vmatpush2.bf16.msra.mxu0 0
    %4621 = vmatprep.subr.bf16.mxu0 0
    %4622 = vmatpush2.bf16.msra.mxu0 0
    %4623 = vmatprep.subr.bf16.mxu0 0
    %4624 = vmatpush2.bf16.msra.mxu0 0
    %4625 = vmatprep.subr.bf16.mxu0 0
    %4626 = vmatpush2.bf16.msra.mxu0 0
    %4627 = vmatprep.subr.bf16.mxu0 0
    %4628 = vmatpush2.bf16.msra.mxu0 0
    %4629 = vmatprep.subr.bf16.mxu0 0
    %4630 = vmatpush2.bf16.msra.mxu0 0
    %4631 = vmatprep.subr.bf16.mxu0 0
    %4632 = vmatpush2.bf16.msra.mxu0 0
    %4633 = vmatprep.subr.bf16.mxu0 0
    %4634 = vmatpush2.bf16.msra.mxu0 0
    %4635 = vmatprep.mubr.bf16.mxu0 0
    %4636 = vmatmul.mubr.bf16.gmra.mxu0 %v4493
    %v4637 = vpop.f32.mrf.mxu0
    %v4638 = vadd.f32 0.0, %v4637
    %v4639 = vpop.f32.mrf.mxu0
    %v4640 = vadd.f32 0.0, %v4639
    %v4641 = vpop.f32.mrf.mxu0
    %v4642 = vpop.f32.mrf.mxu0
    %4643 = vdwg.mxu0
    %4644 = vmatprep.subr.bf16.mxu0 %v3460
    %4645 = vmatpush1.bf16.msra.mxu0 %v3459
    %4646 = vmatprep.subr.bf16.mxu0 %v3456
    %4647 = vmatpush1.bf16.msra.mxu0 %v3455
    %4648 = vmatprep.subr.bf16.mxu0 %v3452
    %4649 = vmatpush1.bf16.msra.mxu0 %v3451
    %4650 = vmatprep.subr.bf16.mxu0 %v3448
    %4651 = vmatpush1.bf16.msra.mxu0 %v3447
    %4652 = vmatprep.subr.bf16.mxu0 %v3444
    %4653 = vmatpush1.bf16.msra.mxu0 %v3443
    %4654 = vmatprep.subr.bf16.mxu0 %v3440
    %4655 = vmatpush1.bf16.msra.mxu0 %v3439
    %4656 = vmatprep.subr.bf16.mxu0 %v3436
    %4657 = vmatpush1.bf16.msra.mxu0 %v3435
    %4658 = vmatprep.subr.bf16.mxu0 %v3432
    %4659 = vmatpush1.bf16.msra.mxu0 %v3431
    %4660 = vmatprep.subr.bf16.mxu0 0
    %4661 = vmatpush2.bf16.msra.mxu0 0
    %4662 = vmatprep.subr.bf16.mxu0 0
    %4663 = vmatpush2.bf16.msra.mxu0 0
    %4664 = vmatprep.subr.bf16.mxu0 0
    %4665 = vmatpush2.bf16.msra.mxu0 0
    %4666 = vmatprep.subr.bf16.mxu0 0
    %4667 = vmatpush2.bf16.msra.mxu0 0
    %4668 = vmatprep.subr.bf16.mxu0 0
    %4669 = vmatpush2.bf16.msra.mxu0 0
    %4670 = vmatprep.subr.bf16.mxu0 0
    %4671 = vmatpush2.bf16.msra.mxu0 0
    %4672 = vmatprep.subr.bf16.mxu0 0
    %4673 = vmatpush2.bf16.msra.mxu0 0
    %4674 = vmatprep.subr.bf16.mxu0 0
    %4675 = vmatpush2.bf16.msra.mxu0 0
    %4676 = vmatprep.mubr.bf16.mxu0 0
    %4677 = vmatmul.mubr.bf16.gmra.mxu0 %v4493
    %v4678 = vpop.f32.mrf.mxu0
    %v4679 = vadd.f32 0.0, %v4678
    %v4680 = vpop.f32.mrf.mxu0
    %v4681 = vadd.f32 0.0, %v4680
    %v4682 = vpop.f32.mrf.mxu0
    %v4683 = vpop.f32.mrf.mxu0
    %4684 = vdwg.mxu0
    %v4689 = vrot.slane %v4638, 5
    %v4690 = vrot.slane %v4640, 5
    %v4691 = vrot.slane %v4679, 5
    %v4692 = vrot.slane %v4681, 5
    %v4697 = vadd.f32 %v3254, %v4689
    %v4698 = vadd.f32 %v3256, %v4690
    %v4699 = vadd.f32 %v3295, %v4691
    %v4700 = vadd.f32 %v3297, %v4692
    %v4701 = vxor.u32 %v4697, 2147483648
    %v4702 = vmul.f32 %v4701, 1.442695
    %v4703 = vpow.pop %v4702
    %v4704 = vadd.f32 %v4703, 1.0
    %v4705 = vrcp.pop %v4704
    %v4706 = vmul.f32 1.0, %v4705
    %v4707 = vxor.u32 %v4698, 2147483648
    %v4708 = vmul.f32 %v4707, 1.442695
    %v4709 = vpow.pop %v4708
    %v4710 = vadd.f32 %v4709, 1.0
    %v4711 = vrcp.pop %v4710
    %v4712 = vmul.f32 1.0, %v4711
    %v4713 = vtanh.pop %v4699
    %v4714 = vxor.u32 %v4700, 2147483648
    %v4715 = vmul.f32 %v4714, 1.442695
    %v4716 = vpow.pop %v4715
    %v4717 = vadd.f32 %v4716, 1.0
    %v4718 = vrcp.pop %v4717
    %v4719 = vmul.f32 1.0, %v4718
    %v4721 = vrot.slane %v4483, 7
    %v4723 = vmul.f32 %v4712, %v4721
    %v4724 = vmul.f32 %v4706, %v4713
    %v4725 = vadd.f32 %v4723, %v4724
    %v4726 = vtanh.pop %v4725
    %v4727 = vmul.f32 %v4719, %v4726
    %v4729 = vrot.slane %v4602, 5
    %v4731 = vpack.c.bf16 %v4727, %v4727
    %v4732 = vpack.c.bf16 %v4729, %v4729
    %v4734 = vshrl.u32 %v4731, 16
    %v4736 = vrot.slane %v4734, 1
    %v4738 = vshrl.u32 %v4732, 16
    %v4740 = vrot.slane %v4738, 1
    %4743 = vmatprep.subr.bf16.mxu0 %v3891
    %4744 = vmatpush1.bf16.msra.mxu0 %v3890
    %4745 = vmatprep.subr.bf16.mxu0 %v3887
    %4746 = vmatpush1.bf16.msra.mxu0 %v3886
    %4747 = vmatprep.subr.bf16.mxu0 %v3883
    %4748 = vmatpush1.bf16.msra.mxu0 %v3882
    %4749 = vmatprep.subr.bf16.mxu0 %v3879
    %4750 = vmatpush1.bf16.msra.mxu0 %v3878
    %4751 = vmatprep.subr.bf16.mxu0 %v3875
    %4752 = vmatpush1.bf16.msra.mxu0 %v3874
    %4753 = vmatprep.subr.bf16.mxu0 %v3871
    %4754 = vmatpush1.bf16.msra.mxu0 %v3870
    %4755 = vmatprep.subr.bf16.mxu0 %v3867
    %4756 = vmatpush1.bf16.msra.mxu0 %v3866
    %4757 = vmatprep.subr.bf16.mxu0 %v3863
    %4758 = vmatpush1.bf16.msra.mxu0 %v3862
    %4759 = vmatprep.subr.bf16.mxu0 %v3923
    %4760 = vmatpush2.bf16.msra.mxu0 %v3922
    %4761 = vmatprep.subr.bf16.mxu0 %v3919
    %4762 = vmatpush2.bf16.msra.mxu0 %v3918
    %4763 = vmatprep.subr.bf16.mxu0 %v3915
    %4764 = vmatpush2.bf16.msra.mxu0 %v3914
    %4765 = vmatprep.subr.bf16.mxu0 %v3911
    %4766 = vmatpush2.bf16.msra.mxu0 %v3910
    %4767 = vmatprep.subr.bf16.mxu0 %v3907
    %4768 = vmatpush2.bf16.msra.mxu0 %v3906
    %4769 = vmatprep.subr.bf16.mxu0 %v3903
    %4770 = vmatpush2.bf16.msra.mxu0 %v3902
    %4771 = vmatprep.subr.bf16.mxu0 %v3899
    %4772 = vmatpush2.bf16.msra.mxu0 %v3898
    %4773 = vmatprep.subr.bf16.mxu0 %v3895
    %4774 = vmatpush2.bf16.msra.mxu0 %v3894
    %4775 = vmatprep.mubr.bf16.mxu0 %v4740
    %4776 = vmatmul.mubr.bf16.gmra.mxu0 %v4736
    %v4777 = vpop.f32.mrf.mxu0
    %v4778 = vadd.f32 %v3994, %v4777
    %v4779 = vpop.f32.mrf.mxu0
    %v4780 = vadd.f32 %v3998, %v4779
    %v4781 = vpop.f32.mrf.mxu0
    %v4782 = vpop.f32.mrf.mxu0
    %4783 = vdwg.mxu0
    %4784 = vmatprep.subr.bf16.mxu0 %v3893
    %4785 = vmatpush1.bf16.msra.mxu0 %v3892
    %4786 = vmatprep.subr.bf16.mxu0 %v3889
    %4787 = vmatpush1.bf16.msra.mxu0 %v3888
    %4788 = vmatprep.subr.bf16.mxu0 %v3885
    %4789 = vmatpush1.bf16.msra.mxu0 %v3884
    %4790 = vmatprep.subr.bf16.mxu0 %v3881
    %4791 = vmatpush1.bf16.msra.mxu0 %v3880
    %4792 = vmatprep.subr.bf16.mxu0 %v3877
    %4793 = vmatpush1.bf16.msra.mxu0 %v3876
    %4794 = vmatprep.subr.bf16.mxu0 %v3873
    %4795 = vmatpush1.bf16.msra.mxu0 %v3872
    %4796 = vmatprep.subr.bf16.mxu0 %v3869
    %4797 = vmatpush1.bf16.msra.mxu0 %v3868
    %4798 = vmatprep.subr.bf16.mxu0 %v3865
    %4799 = vmatpush1.bf16.msra.mxu0 %v3864
    %4800 = vmatprep.subr.bf16.mxu0 %v3925
    %4801 = vmatpush2.bf16.msra.mxu0 %v3924
    %4802 = vmatprep.subr.bf16.mxu0 %v3921
    %4803 = vmatpush2.bf16.msra.mxu0 %v3920
    %4804 = vmatprep.subr.bf16.mxu0 %v3917
    %4805 = vmatpush2.bf16.msra.mxu0 %v3916
    %4806 = vmatprep.subr.bf16.mxu0 %v3913
    %4807 = vmatpush2.bf16.msra.mxu0 %v3912
    %4808 = vmatprep.subr.bf16.mxu0 %v3909
    %4809 = vmatpush2.bf16.msra.mxu0 %v3908
    %4810 = vmatprep.subr.bf16.mxu0 %v3905
    %4811 = vmatpush2.bf16.msra.mxu0 %v3904
    %4812 = vmatprep.subr.bf16.mxu0 %v3901
    %4813 = vmatpush2.bf16.msra.mxu0 %v3900
    %4814 = vmatprep.subr.bf16.mxu0 %v3897
    %4815 = vmatpush2.bf16.msra.mxu0 %v3896
    %4816 = vmatprep.mubr.bf16.mxu0 %v4740
    %4817 = vmatmul.mubr.bf16.gmra.mxu0 %v4736
    %v4818 = vpop.f32.mrf.mxu0
    %v4819 = vadd.f32 %v4002, %v4818
    %v4820 = vpop.f32.mrf.mxu0
    %v4821 = vadd.f32 %v4006, %v4820
    %v4822 = vpop.f32.mrf.mxu0
    %v4823 = vpop.f32.mrf.mxu0
    %4824 = vdwg.mxu0
    %v4825 = vxor.u32 %v4778, 2147483648
    %v4826 = vmul.f32 %v4825, 1.442695
    %v4827 = vpow.pop %v4826
    %v4828 = vadd.f32 %v4827, 1.0
    %v4829 = vrcp.pop %v4828
    %v4830 = vmul.f32 1.0, %v4829
    %v4831 = vxor.u32 %v4780, 2147483648
    %v4832 = vmul.f32 %v4831, 1.442695
    %v4833 = vpow.pop %v4832
    %v4834 = vadd.f32 %v4833, 1.0
    %v4835 = vrcp.pop %v4834
    %v4836 = vmul.f32 1.0, %v4835
    %v4837 = vtanh.pop %v4819
    %v4838 = vxor.u32 %v4821, 2147483648
    %v4839 = vmul.f32 %v4838, 1.442695
    %v4840 = vpow.pop %v4839
    %v4841 = vadd.f32 %v4840, 1.0
    %v4842 = vrcp.pop %v4841
    %v4843 = vmul.f32 1.0, %v4842
    %v4844 = vmul.f32 %v4836, %v4600
    %v4845 = vmul.f32 %v4830, %v4837
    %v4846 = vadd.f32 %v4844, %v4845
    %v4847 = vtanh.pop %v4846
    %v4848 = vmul.f32 %v4843, %v4847
    %4849 = vmatprep.subr.bf16.mxu0 %v3458
    %4850 = vmatpush1.bf16.msra.mxu0 %v3457
    %4851 = vmatprep.subr.bf16.mxu0 %v3454
    %4852 = vmatpush1.bf16.msra.mxu0 %v3453
    %4853 = vmatprep.subr.bf16.mxu0 %v3450
    %4854 = vmatpush1.bf16.msra.mxu0 %v3449
    %4855 = vmatprep.subr.bf16.mxu0 %v3446
    %4856 = vmatpush1.bf16.msra.mxu0 %v3445
    %4857 = vmatprep.subr.bf16.mxu0 %v3442
    %4858 = vmatpush1.bf16.msra.mxu0 %v3441
    %4859 = vmatprep.subr.bf16.mxu0 %v3438
    %4860 = vmatpush1.bf16.msra.mxu0 %v3437
    %4861 = vmatprep.subr.bf16.mxu0 %v3434
    %4862 = vmatpush1.bf16.msra.mxu0 %v3433
    %4863 = vmatprep.subr.bf16.mxu0 %v3430
    %4864 = vmatpush1.bf16.msra.mxu0 %v3429
    %4865 = vmatprep.subr.bf16.mxu0 0
    %4866 = vmatpush2.bf16.msra.mxu0 0
    %4867 = vmatprep.subr.bf16.mxu0 0
    %4868 = vmatpush2.bf16.msra.mxu0 0
    %4869 = vmatprep.subr.bf16.mxu0 0
    %4870 = vmatpush2.bf16.msra.mxu0 0
    %4871 = vmatprep.subr.bf16.mxu0 0
    %4872 = vmatpush2.bf16.msra.mxu0 0
    %4873 = vmatprep.subr.bf16.mxu0 0
    %4874 = vmatpush2.bf16.msra.mxu0 0
    %4875 = vmatprep.subr.bf16.mxu0 0
    %4876 = vmatpush2.bf16.msra.mxu0 0
    %4877 = vmatprep.subr.bf16.mxu0 0
    %4878 = vmatpush2.bf16.msra.mxu0 0
    %4879 = vmatprep.subr.bf16.mxu0 0
    %4880 = vmatpush2.bf16.msra.mxu0 0
    %4881 = vmatprep.mubr.bf16.mxu0 0
    %4882 = vmatmul.mubr.bf16.gmra.mxu0 %v4736
    %v4883 = vpop.f32.mrf.mxu0
    %v4884 = vadd.f32 0.0, %v4883
    %v4885 = vpop.f32.mrf.mxu0
    %v4886 = vadd.f32 0.0, %v4885
    %v4887 = vpop.f32.mrf.mxu0
    %v4888 = vpop.f32.mrf.mxu0
    %4889 = vdwg.mxu0
    %4890 = vmatprep.subr.bf16.mxu0 %v3460
    %4891 = vmatpush1.bf16.msra.mxu0 %v3459
    %4892 = vmatprep.subr.bf16.mxu0 %v3456
    %4893 = vmatpush1.bf16.msra.mxu0 %v3455
    %4894 = vmatprep.subr.bf16.mxu0 %v3452
    %4895 = vmatpush1.bf16.msra.mxu0 %v3451
    %4896 = vmatprep.subr.bf16.mxu0 %v3448
    %4897 = vmatpush1.bf16.msra.mxu0 %v3447
    %4898 = vmatprep.subr.bf16.mxu0 %v3444
    %4899 = vmatpush1.bf16.msra.mxu0 %v3443
    %4900 = vmatprep.subr.bf16.mxu0 %v3440
    %4901 = vmatpush1.bf16.msra.mxu0 %v3439
    %4902 = vmatprep.subr.bf16.mxu0 %v3436
    %4903 = vmatpush1.bf16.msra.mxu0 %v3435
    %4904 = vmatprep.subr.bf16.mxu0 %v3432
    %4905 = vmatpush1.bf16.msra.mxu0 %v3431
    %4906 = vmatprep.subr.bf16.mxu0 0
    %4907 = vmatpush2.bf16.msra.mxu0 0
    %4908 = vmatprep.subr.bf16.mxu0 0
    %4909 = vmatpush2.bf16.msra.mxu0 0
    %4910 = vmatprep.subr.bf16.mxu0 0
    %4911 = vmatpush2.bf16.msra.mxu0 0
    %4912 = vmatprep.subr.bf16.mxu0 0
    %4913 = vmatpush2.bf16.msra.mxu0 0
    %4914 = vmatprep.subr.bf16.mxu0 0
    %4915 = vmatpush2.bf16.msra.mxu0 0
    %4916 = vmatprep.subr.bf16.mxu0 0
    %4917 = vmatpush2.bf16.msra.mxu0 0
    %4918 = vmatprep.subr.bf16.mxu0 0
    %4919 = vmatpush2.bf16.msra.mxu0 0
    %4920 = vmatprep.subr.bf16.mxu0 0
    %4921 = vmatpush2.bf16.msra.mxu0 0
    %4922 = vmatprep.mubr.bf16.mxu0 0
    %4923 = vmatmul.mubr.bf16.gmra.mxu0 %v4736
    %v4924 = vpop.f32.mrf.mxu0
    %v4925 = vadd.f32 0.0, %v4924
    %v4926 = vpop.f32.mrf.mxu0
    %v4927 = vadd.f32 0.0, %v4926
    %v4928 = vpop.f32.mrf.mxu0
    %v4929 = vpop.f32.mrf.mxu0
    %4930 = vdwg.mxu0
    %v4935 = vrot.slane %v4884, 4
    %v4936 = vrot.slane %v4886, 4
    %v4937 = vrot.slane %v4925, 4
    %v4938 = vrot.slane %v4927, 4
    %v4943 = vadd.f32 %v3254, %v4935
    %v4944 = vadd.f32 %v3256, %v4936
    %v4945 = vadd.f32 %v3295, %v4937
    %v4946 = vadd.f32 %v3297, %v4938
    %v4947 = vxor.u32 %v4943, 2147483648
    %v4948 = vmul.f32 %v4947, 1.442695
    %v4949 = vpow.pop %v4948
    %v4950 = vadd.f32 %v4949, 1.0
    %v4951 = vrcp.pop %v4950
    %v4952 = vmul.f32 1.0, %v4951
    %v4953 = vxor.u32 %v4944, 2147483648
    %v4954 = vmul.f32 %v4953, 1.442695
    %v4955 = vpow.pop %v4954
    %v4956 = vadd.f32 %v4955, 1.0
    %v4957 = vrcp.pop %v4956
    %v4958 = vmul.f32 1.0, %v4957
    %v4959 = vtanh.pop %v4945
    %v4960 = vxor.u32 %v4946, 2147483648
    %v4961 = vmul.f32 %v4960, 1.442695
    %v4962 = vpow.pop %v4961
    %v4963 = vadd.f32 %v4962, 1.0
    %v4964 = vrcp.pop %v4963
    %v4965 = vmul.f32 1.0, %v4964
    %v4967 = vrot.slane %v4725, 7
    %v4969 = vmul.f32 %v4958, %v4967
    %v4970 = vmul.f32 %v4952, %v4959
    %v4971 = vadd.f32 %v4969, %v4970
    %v4972 = vtanh.pop %v4971
    %v4973 = vmul.f32 %v4965, %v4972
    %v4975 = vrot.slane %v4848, 4
    %v4977 = vpack.c.bf16 %v4973, %v4973
    %v4978 = vpack.c.bf16 %v4975, %v4975
    %v4981 = vrot.slane %v4977, 2
    %v4982 = vrot.slane %v4978, 2
    %4985 = vmatprep.subr.bf16.mxu0 %v3891
    %4986 = vmatpush1.bf16.msra.mxu0 %v3890
    %4987 = vmatprep.subr.bf16.mxu0 %v3887
    %4988 = vmatpush1.bf16.msra.mxu0 %v3886
    %4989 = vmatprep.subr.bf16.mxu0 %v3883
    %4990 = vmatpush1.bf16.msra.mxu0 %v3882
    %4991 = vmatprep.subr.bf16.mxu0 %v3879
    %4992 = vmatpush1.bf16.msra.mxu0 %v3878
    %4993 = vmatprep.subr.bf16.mxu0 %v3875
    %4994 = vmatpush1.bf16.msra.mxu0 %v3874
    %4995 = vmatprep.subr.bf16.mxu0 %v3871
    %4996 = vmatpush1.bf16.msra.mxu0 %v3870
    %4997 = vmatprep.subr.bf16.mxu0 %v3867
    %4998 = vmatpush1.bf16.msra.mxu0 %v3866
    %4999 = vmatprep.subr.bf16.mxu0 %v3863
    %5000 = vmatpush1.bf16.msra.mxu0 %v3862
    %5001 = vmatprep.subr.bf16.mxu0 %v3923
    %5002 = vmatpush2.bf16.msra.mxu0 %v3922
    %5003 = vmatprep.subr.bf16.mxu0 %v3919
    %5004 = vmatpush2.bf16.msra.mxu0 %v3918
    %5005 = vmatprep.subr.bf16.mxu0 %v3915
    %5006 = vmatpush2.bf16.msra.mxu0 %v3914
    %5007 = vmatprep.subr.bf16.mxu0 %v3911
    %5008 = vmatpush2.bf16.msra.mxu0 %v3910
    %5009 = vmatprep.subr.bf16.mxu0 %v3907
    %5010 = vmatpush2.bf16.msra.mxu0 %v3906
    %5011 = vmatprep.subr.bf16.mxu0 %v3903
    %5012 = vmatpush2.bf16.msra.mxu0 %v3902
    %5013 = vmatprep.subr.bf16.mxu0 %v3899
    %5014 = vmatpush2.bf16.msra.mxu0 %v3898
    %5015 = vmatprep.subr.bf16.mxu0 %v3895
    %5016 = vmatpush2.bf16.msra.mxu0 %v3894
    %5017 = vmatprep.mubr.bf16.mxu0 %v4982
    %5018 = vmatmul.mubr.bf16.gmra.mxu0 %v4981
    %v5019 = vpop.f32.mrf.mxu0
    %v5020 = vadd.f32 %v3994, %v5019
    %v5021 = vpop.f32.mrf.mxu0
    %v5022 = vadd.f32 %v3998, %v5021
    %v5023 = vpop.f32.mrf.mxu0
    %v5024 = vpop.f32.mrf.mxu0
    %5025 = vdwg.mxu0
    %5026 = vmatprep.subr.bf16.mxu0 %v3893
    %5027 = vmatpush1.bf16.msra.mxu0 %v3892
    %5028 = vmatprep.subr.bf16.mxu0 %v3889
    %5029 = vmatpush1.bf16.msra.mxu0 %v3888
    %5030 = vmatprep.subr.bf16.mxu0 %v3885
    %5031 = vmatpush1.bf16.msra.mxu0 %v3884
    %5032 = vmatprep.subr.bf16.mxu0 %v3881
    %5033 = vmatpush1.bf16.msra.mxu0 %v3880
    %5034 = vmatprep.subr.bf16.mxu0 %v3877
    %5035 = vmatpush1.bf16.msra.mxu0 %v3876
    %5036 = vmatprep.subr.bf16.mxu0 %v3873
    %5037 = vmatpush1.bf16.msra.mxu0 %v3872
    %5038 = vmatprep.subr.bf16.mxu0 %v3869
    %5039 = vmatpush1.bf16.msra.mxu0 %v3868
    %5040 = vmatprep.subr.bf16.mxu0 %v3865
    %5041 = vmatpush1.bf16.msra.mxu0 %v3864
    %5042 = vmatprep.subr.bf16.mxu0 %v3925
    %5043 = vmatpush2.bf16.msra.mxu0 %v3924
    %5044 = vmatprep.subr.bf16.mxu0 %v3921
    %5045 = vmatpush2.bf16.msra.mxu0 %v3920
    %5046 = vmatprep.subr.bf16.mxu0 %v3917
    %5047 = vmatpush2.bf16.msra.mxu0 %v3916
    %5048 = vmatprep.subr.bf16.mxu0 %v3913
    %5049 = vmatpush2.bf16.msra.mxu0 %v3912
    %5050 = vmatprep.subr.bf16.mxu0 %v3909
    %5051 = vmatpush2.bf16.msra.mxu0 %v3908
    %5052 = vmatprep.subr.bf16.mxu0 %v3905
    %5053 = vmatpush2.bf16.msra.mxu0 %v3904
    %5054 = vmatprep.subr.bf16.mxu0 %v3901
    %5055 = vmatpush2.bf16.msra.mxu0 %v3900
    %5056 = vmatprep.subr.bf16.mxu0 %v3897
    %5057 = vmatpush2.bf16.msra.mxu0 %v3896
    %5058 = vmatprep.mubr.bf16.mxu0 %v4982
    %5059 = vmatmul.mubr.bf16.gmra.mxu0 %v4981
    %v5060 = vpop.f32.mrf.mxu0
    %v5061 = vadd.f32 %v4002, %v5060
    %v5062 = vpop.f32.mrf.mxu0
    %v5063 = vadd.f32 %v4006, %v5062
    %v5064 = vpop.f32.mrf.mxu0
    %v5065 = vpop.f32.mrf.mxu0
    %5066 = vdwg.mxu0
    %v5067 = vxor.u32 %v5020, 2147483648
    %v5068 = vmul.f32 %v5067, 1.442695
    %v5069 = vpow.pop %v5068
    %v5070 = vadd.f32 %v5069, 1.0
    %v5071 = vrcp.pop %v5070
    %v5072 = vmul.f32 1.0, %v5071
    %v5073 = vxor.u32 %v5022, 2147483648
    %v5074 = vmul.f32 %v5073, 1.442695
    %v5075 = vpow.pop %v5074
    %v5076 = vadd.f32 %v5075, 1.0
    %v5077 = vrcp.pop %v5076
    %v5078 = vmul.f32 1.0, %v5077
    %v5079 = vtanh.pop %v5061
    %v5080 = vxor.u32 %v5063, 2147483648
    %v5081 = vmul.f32 %v5080, 1.442695
    %v5082 = vpow.pop %v5081
    %v5083 = vadd.f32 %v5082, 1.0
    %v5084 = vrcp.pop %v5083
    %v5085 = vmul.f32 1.0, %v5084
    %v5086 = vmul.f32 %v5078, %v4846
    %v5087 = vmul.f32 %v5072, %v5079
    %v5088 = vadd.f32 %v5086, %v5087
    %v5089 = vtanh.pop %v5088
    %v5090 = vmul.f32 %v5085, %v5089
    %5091 = vmatprep.subr.bf16.mxu0 %v3458
    %5092 = vmatpush1.bf16.msra.mxu0 %v3457
    %5093 = vmatprep.subr.bf16.mxu0 %v3454
    %5094 = vmatpush1.bf16.msra.mxu0 %v3453
    %5095 = vmatprep.subr.bf16.mxu0 %v3450
    %5096 = vmatpush1.bf16.msra.mxu0 %v3449
    %5097 = vmatprep.subr.bf16.mxu0 %v3446
    %5098 = vmatpush1.bf16.msra.mxu0 %v3445
    %5099 = vmatprep.subr.bf16.mxu0 %v3442
    %5100 = vmatpush1.bf16.msra.mxu0 %v3441
    %5101 = vmatprep.subr.bf16.mxu0 %v3438
    %5102 = vmatpush1.bf16.msra.mxu0 %v3437
    %5103 = vmatprep.subr.bf16.mxu0 %v3434
    %5104 = vmatpush1.bf16.msra.mxu0 %v3433
    %5105 = vmatprep.subr.bf16.mxu0 %v3430
    %5106 = vmatpush1.bf16.msra.mxu0 %v3429
    %5107 = vmatprep.subr.bf16.mxu0 0
    %5108 = vmatpush2.bf16.msra.mxu0 0
    %5109 = vmatprep.subr.bf16.mxu0 0
    %5110 = vmatpush2.bf16.msra.mxu0 0
    %5111 = vmatprep.subr.bf16.mxu0 0
    %5112 = vmatpush2.bf16.msra.mxu0 0
    %5113 = vmatprep.subr.bf16.mxu0 0
    %5114 = vmatpush2.bf16.msra.mxu0 0
    %5115 = vmatprep.subr.bf16.mxu0 0
    %5116 = vmatpush2.bf16.msra.mxu0 0
    %5117 = vmatprep.subr.bf16.mxu0 0
    %5118 = vmatpush2.bf16.msra.mxu0 0
    %5119 = vmatprep.subr.bf16.mxu0 0
    %5120 = vmatpush2.bf16.msra.mxu0 0
    %5121 = vmatprep.subr.bf16.mxu0 0
    %5122 = vmatpush2.bf16.msra.mxu0 0
    %5123 = vmatprep.mubr.bf16.mxu0 0
    %5124 = vmatmul.mubr.bf16.gmra.mxu0 %v4981
    %v5125 = vpop.f32.mrf.mxu0
    %v5126 = vadd.f32 0.0, %v5125
    %v5127 = vpop.f32.mrf.mxu0
    %v5128 = vadd.f32 0.0, %v5127
    %v5129 = vpop.f32.mrf.mxu0
    %v5130 = vpop.f32.mrf.mxu0
    %5131 = vdwg.mxu0
    %5132 = vmatprep.subr.bf16.mxu0 %v3460
    %5133 = vmatpush1.bf16.msra.mxu0 %v3459
    %5134 = vmatprep.subr.bf16.mxu0 %v3456
    %5135 = vmatpush1.bf16.msra.mxu0 %v3455
    %5136 = vmatprep.subr.bf16.mxu0 %v3452
    %5137 = vmatpush1.bf16.msra.mxu0 %v3451
    %5138 = vmatprep.subr.bf16.mxu0 %v3448
    %5139 = vmatpush1.bf16.msra.mxu0 %v3447
    %5140 = vmatprep.subr.bf16.mxu0 %v3444
    %5141 = vmatpush1.bf16.msra.mxu0 %v3443
    %5142 = vmatprep.subr.bf16.mxu0 %v3440
    %5143 = vmatpush1.bf16.msra.mxu0 %v3439
    %5144 = vmatprep.subr.bf16.mxu0 %v3436
    %5145 = vmatpush1.bf16.msra.mxu0 %v3435
    %5146 = vmatprep.subr.bf16.mxu0 %v3432
    %5147 = vmatpush1.bf16.msra.mxu0 %v3431
    %5148 = vmatprep.subr.bf16.mxu0 0
    %5149 = vmatpush2.bf16.msra.mxu0 0
    %5150 = vmatprep.subr.bf16.mxu0 0
    %5151 = vmatpush2.bf16.msra.mxu0 0
    %5152 = vmatprep.subr.bf16.mxu0 0
    %5153 = vmatpush2.bf16.msra.mxu0 0
    %5154 = vmatprep.subr.bf16.mxu0 0
    %5155 = vmatpush2.bf16.msra.mxu0 0
    %5156 = vmatprep.subr.bf16.mxu0 0
    %5157 = vmatpush2.bf16.msra.mxu0 0
    %5158 = vmatprep.subr.bf16.mxu0 0
    %5159 = vmatpush2.bf16.msra.mxu0 0
    %5160 = vmatprep.subr.bf16.mxu0 0
    %5161 = vmatpush2.bf16.msra.mxu0 0
    %5162 = vmatprep.subr.bf16.mxu0 0
    %5163 = vmatpush2.bf16.msra.mxu0 0
    %5164 = vmatprep.mubr.bf16.mxu0 0
    %5165 = vmatmul.mubr.bf16.gmra.mxu0 %v4981
    %v5166 = vpop.f32.mrf.mxu0
    %v5167 = vadd.f32 0.0, %v5166
    %v5168 = vpop.f32.mrf.mxu0
    %v5169 = vadd.f32 0.0, %v5168
    %v5170 = vpop.f32.mrf.mxu0
    %v5171 = vpop.f32.mrf.mxu0
    %5172 = vdwg.mxu0
    %v5177 = vrot.slane %v5126, 3
    %v5178 = vrot.slane %v5128, 3
    %v5179 = vrot.slane %v5167, 3
    %v5180 = vrot.slane %v5169, 3
    %v5185 = vadd.f32 %v3254, %v5177
    %v5186 = vadd.f32 %v3256, %v5178
    %v5187 = vadd.f32 %v3295, %v5179
    %v5188 = vadd.f32 %v3297, %v5180
    %v5189 = vxor.u32 %v5185, 2147483648
    %v5190 = vmul.f32 %v5189, 1.442695
    %v5191 = vpow.pop %v5190
    %v5192 = vadd.f32 %v5191, 1.0
    %v5193 = vrcp.pop %v5192
    %v5194 = vmul.f32 1.0, %v5193
    %v5195 = vxor.u32 %v5186, 2147483648
    %v5196 = vmul.f32 %v5195, 1.442695
    %v5197 = vpow.pop %v5196
    %v5198 = vadd.f32 %v5197, 1.0
    %v5199 = vrcp.pop %v5198
    %v5200 = vmul.f32 1.0, %v5199
    %v5201 = vtanh.pop %v5187
    %v5202 = vxor.u32 %v5188, 2147483648
    %v5203 = vmul.f32 %v5202, 1.442695
    %v5204 = vpow.pop %v5203
    %v5205 = vadd.f32 %v5204, 1.0
    %v5206 = vrcp.pop %v5205
    %v5207 = vmul.f32 1.0, %v5206
    %v5209 = vrot.slane %v4971, 7
    %v5211 = vmul.f32 %v5200, %v5209
    %v5212 = vmul.f32 %v5194, %v5201
    %v5213 = vadd.f32 %v5211, %v5212
    %v5214 = vtanh.pop %v5213
    %v5215 = vmul.f32 %v5207, %v5214
    %v5217 = vrot.slane %v5090, 3
    %v5219 = vpack.c.bf16 %v5215, %v5215
    %v5220 = vpack.c.bf16 %v5217, %v5217
    %v5222 = vshrl.u32 %v5219, 16
    %v5224 = vrot.slane %v5222, 2
    %v5226 = vshrl.u32 %v5220, 16
    %v5228 = vrot.slane %v5226, 2
    %5231 = vmatprep.subr.bf16.mxu0 %v3891
    %5232 = vmatpush1.bf16.msra.mxu0 %v3890
    %5233 = vmatprep.subr.bf16.mxu0 %v3887
    %5234 = vmatpush1.bf16.msra.mxu0 %v3886
    %5235 = vmatprep.subr.bf16.mxu0 %v3883
    %5236 = vmatpush1.bf16.msra.mxu0 %v3882
    %5237 = vmatprep.subr.bf16.mxu0 %v3879
    %5238 = vmatpush1.bf16.msra.mxu0 %v3878
    %5239 = vmatprep.subr.bf16.mxu0 %v3875
    %5240 = vmatpush1.bf16.msra.mxu0 %v3874
    %5241 = vmatprep.subr.bf16.mxu0 %v3871
    %5242 = vmatpush1.bf16.msra.mxu0 %v3870
    %5243 = vmatprep.subr.bf16.mxu0 %v3867
    %5244 = vmatpush1.bf16.msra.mxu0 %v3866
    %5245 = vmatprep.subr.bf16.mxu0 %v3863
    %5246 = vmatpush1.bf16.msra.mxu0 %v3862
    %5247 = vmatprep.subr.bf16.mxu0 %v3923
    %5248 = vmatpush2.bf16.msra.mxu0 %v3922
    %5249 = vmatprep.subr.bf16.mxu0 %v3919
    %5250 = vmatpush2.bf16.msra.mxu0 %v3918
    %5251 = vmatprep.subr.bf16.mxu0 %v3915
    %5252 = vmatpush2.bf16.msra.mxu0 %v3914
    %5253 = vmatprep.subr.bf16.mxu0 %v3911
    %5254 = vmatpush2.bf16.msra.mxu0 %v3910
    %5255 = vmatprep.subr.bf16.mxu0 %v3907
    %5256 = vmatpush2.bf16.msra.mxu0 %v3906
    %5257 = vmatprep.subr.bf16.mxu0 %v3903
    %5258 = vmatpush2.bf16.msra.mxu0 %v3902
    %5259 = vmatprep.subr.bf16.mxu0 %v3899
    %5260 = vmatpush2.bf16.msra.mxu0 %v3898
    %5261 = vmatprep.subr.bf16.mxu0 %v3895
    %5262 = vmatpush2.bf16.msra.mxu0 %v3894
    %5263 = vmatprep.mubr.bf16.mxu0 %v5228
    %5264 = vmatmul.mubr.bf16.gmra.mxu0 %v5224
    %v5265 = vpop.f32.mrf.mxu0
    %v5266 = vadd.f32 %v3994, %v5265
    %v5267 = vpop.f32.mrf.mxu0
    %v5268 = vadd.f32 %v3998, %v5267
    %v5269 = vpop.f32.mrf.mxu0
    %v5270 = vpop.f32.mrf.mxu0
    %5271 = vdwg.mxu0
    %5272 = vmatprep.subr.bf16.mxu0 %v3893
    %5273 = vmatpush1.bf16.msra.mxu0 %v3892
    %5274 = vmatprep.subr.bf16.mxu0 %v3889
    %5275 = vmatpush1.bf16.msra.mxu0 %v3888
    %5276 = vmatprep.subr.bf16.mxu0 %v3885
    %5277 = vmatpush1.bf16.msra.mxu0 %v3884
    %5278 = vmatprep.subr.bf16.mxu0 %v3881
    %5279 = vmatpush1.bf16.msra.mxu0 %v3880
    %5280 = vmatprep.subr.bf16.mxu0 %v3877
    %5281 = vmatpush1.bf16.msra.mxu0 %v3876
    %5282 = vmatprep.subr.bf16.mxu0 %v3873
    %5283 = vmatpush1.bf16.msra.mxu0 %v3872
    %5284 = vmatprep.subr.bf16.mxu0 %v3869
    %5285 = vmatpush1.bf16.msra.mxu0 %v3868
    %5286 = vmatprep.subr.bf16.mxu0 %v3865
    %5287 = vmatpush1.bf16.msra.mxu0 %v3864
    %5288 = vmatprep.subr.bf16.mxu0 %v3925
    %5289 = vmatpush2.bf16.msra.mxu0 %v3924
    %5290 = vmatprep.subr.bf16.mxu0 %v3921
    %5291 = vmatpush2.bf16.msra.mxu0 %v3920
    %5292 = vmatprep.subr.bf16.mxu0 %v3917
    %5293 = vmatpush2.bf16.msra.mxu0 %v3916
    %5294 = vmatprep.subr.bf16.mxu0 %v3913
    %5295 = vmatpush2.bf16.msra.mxu0 %v3912
    %5296 = vmatprep.subr.bf16.mxu0 %v3909
    %5297 = vmatpush2.bf16.msra.mxu0 %v3908
    %5298 = vmatprep.subr.bf16.mxu0 %v3905
    %5299 = vmatpush2.bf16.msra.mxu0 %v3904
    %5300 = vmatprep.subr.bf16.mxu0 %v3901
    %5301 = vmatpush2.bf16.msra.mxu0 %v3900
    %5302 = vmatprep.subr.bf16.mxu0 %v3897
    %5303 = vmatpush2.bf16.msra.mxu0 %v3896
    %5304 = vmatprep.mubr.bf16.mxu0 %v5228
    %5305 = vmatmul.mubr.bf16.gmra.mxu0 %v5224
    %v5306 = vpop.f32.mrf.mxu0
    %v5307 = vadd.f32 %v4002, %v5306
    %v5308 = vpop.f32.mrf.mxu0
    %v5309 = vadd.f32 %v4006, %v5308
    %v5310 = vpop.f32.mrf.mxu0
    %v5311 = vpop.f32.mrf.mxu0
    %5312 = vdwg.mxu0
    %v5313 = vxor.u32 %v5266, 2147483648
    %v5314 = vmul.f32 %v5313, 1.442695
    %v5315 = vpow.pop %v5314
    %v5316 = vadd.f32 %v5315, 1.0
    %v5317 = vrcp.pop %v5316
    %v5318 = vmul.f32 1.0, %v5317
    %v5319 = vxor.u32 %v5268, 2147483648
    %v5320 = vmul.f32 %v5319, 1.442695
    %v5321 = vpow.pop %v5320
    %v5322 = vadd.f32 %v5321, 1.0
    %v5323 = vrcp.pop %v5322
    %v5324 = vmul.f32 1.0, %v5323
    %v5325 = vtanh.pop %v5307
    %v5326 = vxor.u32 %v5309, 2147483648
    %v5327 = vmul.f32 %v5326, 1.442695
    %v5328 = vpow.pop %v5327
    %v5329 = vadd.f32 %v5328, 1.0
    %v5330 = vrcp.pop %v5329
    %v5331 = vmul.f32 1.0, %v5330
    %v5332 = vmul.f32 %v5324, %v5088
    %v5333 = vmul.f32 %v5318, %v5325
    %v5334 = vadd.f32 %v5332, %v5333
    %v5335 = vtanh.pop %v5334
    %v5336 = vmul.f32 %v5331, %v5335
    %5337 = vmatprep.subr.bf16.mxu0 %v3458
    %5338 = vmatpush1.bf16.msra.mxu0 %v3457
    %5339 = vmatprep.subr.bf16.mxu0 %v3454
    %5340 = vmatpush1.bf16.msra.mxu0 %v3453
    %5341 = vmatprep.subr.bf16.mxu0 %v3450
    %5342 = vmatpush1.bf16.msra.mxu0 %v3449
    %5343 = vmatprep.subr.bf16.mxu0 %v3446
    %5344 = vmatpush1.bf16.msra.mxu0 %v3445
    %5345 = vmatprep.subr.bf16.mxu0 %v3442
    %5346 = vmatpush1.bf16.msra.mxu0 %v3441
    %5347 = vmatprep.subr.bf16.mxu0 %v3438
    %5348 = vmatpush1.bf16.msra.mxu0 %v3437
    %5349 = vmatprep.subr.bf16.mxu0 %v3434
    %5350 = vmatpush1.bf16.msra.mxu0 %v3433
    %5351 = vmatprep.subr.bf16.mxu0 %v3430
    %5352 = vmatpush1.bf16.msra.mxu0 %v3429
    %5353 = vmatprep.subr.bf16.mxu0 0
    %5354 = vmatpush2.bf16.msra.mxu0 0
    %5355 = vmatprep.subr.bf16.mxu0 0
    %5356 = vmatpush2.bf16.msra.mxu0 0
    %5357 = vmatprep.subr.bf16.mxu0 0
    %5358 = vmatpush2.bf16.msra.mxu0 0
    %5359 = vmatprep.subr.bf16.mxu0 0
    %5360 = vmatpush2.bf16.msra.mxu0 0
    %5361 = vmatprep.subr.bf16.mxu0 0
    %5362 = vmatpush2.bf16.msra.mxu0 0
    %5363 = vmatprep.subr.bf16.mxu0 0
    %5364 = vmatpush2.bf16.msra.mxu0 0
    %5365 = vmatprep.subr.bf16.mxu0 0
    %5366 = vmatpush2.bf16.msra.mxu0 0
    %5367 = vmatprep.subr.bf16.mxu0 0
    %5368 = vmatpush2.bf16.msra.mxu0 0
    %5369 = vmatprep.mubr.bf16.mxu0 0
    %5370 = vmatmul.mubr.bf16.gmra.mxu0 %v5224
    %v5371 = vpop.f32.mrf.mxu0
    %v5372 = vadd.f32 0.0, %v5371
    %v5373 = vpop.f32.mrf.mxu0
    %v5374 = vadd.f32 0.0, %v5373
    %v5375 = vpop.f32.mrf.mxu0
    %v5376 = vpop.f32.mrf.mxu0
    %5377 = vdwg.mxu0
    %5378 = vmatprep.subr.bf16.mxu0 %v3460
    %5379 = vmatpush1.bf16.msra.mxu0 %v3459
    %5380 = vmatprep.subr.bf16.mxu0 %v3456
    %5381 = vmatpush1.bf16.msra.mxu0 %v3455
    %5382 = vmatprep.subr.bf16.mxu0 %v3452
    %5383 = vmatpush1.bf16.msra.mxu0 %v3451
    %5384 = vmatprep.subr.bf16.mxu0 %v3448
    %5385 = vmatpush1.bf16.msra.mxu0 %v3447
    %5386 = vmatprep.subr.bf16.mxu0 %v3444
    %5387 = vmatpush1.bf16.msra.mxu0 %v3443
    %5388 = vmatprep.subr.bf16.mxu0 %v3440
    %5389 = vmatpush1.bf16.msra.mxu0 %v3439
    %5390 = vmatprep.subr.bf16.mxu0 %v3436
    %5391 = vmatpush1.bf16.msra.mxu0 %v3435
    %5392 = vmatprep.subr.bf16.mxu0 %v3432
    %5393 = vmatpush1.bf16.msra.mxu0 %v3431
    %5394 = vmatprep.subr.bf16.mxu0 0
    %5395 = vmatpush2.bf16.msra.mxu0 0
    %5396 = vmatprep.subr.bf16.mxu0 0
    %5397 = vmatpush2.bf16.msra.mxu0 0
    %5398 = vmatprep.subr.bf16.mxu0 0
    %5399 = vmatpush2.bf16.msra.mxu0 0
    %5400 = vmatprep.subr.bf16.mxu0 0
    %5401 = vmatpush2.bf16.msra.mxu0 0
    %5402 = vmatprep.subr.bf16.mxu0 0
    %5403 = vmatpush2.bf16.msra.mxu0 0
    %5404 = vmatprep.subr.bf16.mxu0 0
    %5405 = vmatpush2.bf16.msra.mxu0 0
    %5406 = vmatprep.subr.bf16.mxu0 0
    %5407 = vmatpush2.bf16.msra.mxu0 0
    %5408 = vmatprep.subr.bf16.mxu0 0
    %5409 = vmatpush2.bf16.msra.mxu0 0
    %5410 = vmatprep.mubr.bf16.mxu0 0
    %5411 = vmatmul.mubr.bf16.gmra.mxu0 %v5224
    %v5412 = vpop.f32.mrf.mxu0
    %v5413 = vadd.f32 0.0, %v5412
    %v5414 = vpop.f32.mrf.mxu0
    %v5415 = vadd.f32 0.0, %v5414
    %v5416 = vpop.f32.mrf.mxu0
    %v5417 = vpop.f32.mrf.mxu0
    %5418 = vdwg.mxu0
    %v5423 = vrot.slane %v5372, 2
    %v5424 = vrot.slane %v5374, 2
    %v5425 = vrot.slane %v5413, 2
    %v5426 = vrot.slane %v5415, 2
    %v5431 = vadd.f32 %v3254, %v5423
    %v5432 = vadd.f32 %v3256, %v5424
    %v5433 = vadd.f32 %v3295, %v5425
    %v5434 = vadd.f32 %v3297, %v5426
    %v5435 = vxor.u32 %v5431, 2147483648
    %v5436 = vmul.f32 %v5435, 1.442695
    %v5437 = vpow.pop %v5436
    %v5438 = vadd.f32 %v5437, 1.0
    %v5439 = vrcp.pop %v5438
    %v5440 = vmul.f32 1.0, %v5439
    %v5441 = vxor.u32 %v5432, 2147483648
    %v5442 = vmul.f32 %v5441, 1.442695
    %v5443 = vpow.pop %v5442
    %v5444 = vadd.f32 %v5443, 1.0
    %v5445 = vrcp.pop %v5444
    %v5446 = vmul.f32 1.0, %v5445
    %v5447 = vtanh.pop %v5433
    %v5448 = vxor.u32 %v5434, 2147483648
    %v5449 = vmul.f32 %v5448, 1.442695
    %v5450 = vpow.pop %v5449
    %v5451 = vadd.f32 %v5450, 1.0
    %v5452 = vrcp.pop %v5451
    %v5453 = vmul.f32 1.0, %v5452
    %v5455 = vrot.slane %v5213, 7
    %v5457 = vmul.f32 %v5446, %v5455
    %v5458 = vmul.f32 %v5440, %v5447
    %v5459 = vadd.f32 %v5457, %v5458
    %v5460 = vtanh.pop %v5459
    %v5461 = vmul.f32 %v5453, %v5460
    %v5463 = vrot.slane %v5336, 2
    %v5465 = vpack.c.bf16 %v5461, %v5461
    %v5466 = vpack.c.bf16 %v5463, %v5463
    %v5469 = vrot.slane %v5465, 3
    %v5470 = vrot.slane %v5466, 3
    %5473 = vmatprep.subr.bf16.mxu0 %v3891
    %5474 = vmatpush1.bf16.msra.mxu0 %v3890
    %5475 = vmatprep.subr.bf16.mxu0 %v3887
    %5476 = vmatpush1.bf16.msra.mxu0 %v3886
    %5477 = vmatprep.subr.bf16.mxu0 %v3883
    %5478 = vmatpush1.bf16.msra.mxu0 %v3882
    %5479 = vmatprep.subr.bf16.mxu0 %v3879
    %5480 = vmatpush1.bf16.msra.mxu0 %v3878
    %5481 = vmatprep.subr.bf16.mxu0 %v3875
    %5482 = vmatpush1.bf16.msra.mxu0 %v3874
    %5483 = vmatprep.subr.bf16.mxu0 %v3871
    %5484 = vmatpush1.bf16.msra.mxu0 %v3870
    %5485 = vmatprep.subr.bf16.mxu0 %v3867
    %5486 = vmatpush1.bf16.msra.mxu0 %v3866
    %5487 = vmatprep.subr.bf16.mxu0 %v3863
    %5488 = vmatpush1.bf16.msra.mxu0 %v3862
    %5489 = vmatprep.subr.bf16.mxu0 %v3923
    %5490 = vmatpush2.bf16.msra.mxu0 %v3922
    %5491 = vmatprep.subr.bf16.mxu0 %v3919
    %5492 = vmatpush2.bf16.msra.mxu0 %v3918
    %5493 = vmatprep.subr.bf16.mxu0 %v3915
    %5494 = vmatpush2.bf16.msra.mxu0 %v3914
    %5495 = vmatprep.subr.bf16.mxu0 %v3911
    %5496 = vmatpush2.bf16.msra.mxu0 %v3910
    %5497 = vmatprep.subr.bf16.mxu0 %v3907
    %5498 = vmatpush2.bf16.msra.mxu0 %v3906
    %5499 = vmatprep.subr.bf16.mxu0 %v3903
    %5500 = vmatpush2.bf16.msra.mxu0 %v3902
    %5501 = vmatprep.subr.bf16.mxu0 %v3899
    %5502 = vmatpush2.bf16.msra.mxu0 %v3898
    %5503 = vmatprep.subr.bf16.mxu0 %v3895
    %5504 = vmatpush2.bf16.msra.mxu0 %v3894
    %5505 = vmatprep.mubr.bf16.mxu0 %v5470
    %5506 = vmatmul.mubr.bf16.gmra.mxu0 %v5469
    %v5507 = vpop.f32.mrf.mxu0
    %v5508 = vadd.f32 %v3994, %v5507
    %v5509 = vpop.f32.mrf.mxu0
    %v5510 = vadd.f32 %v3998, %v5509
    %v5511 = vpop.f32.mrf.mxu0
    %v5512 = vpop.f32.mrf.mxu0
    %5513 = vdwg.mxu0
    %5514 = vmatprep.subr.bf16.mxu0 %v3893
    %5515 = vmatpush1.bf16.msra.mxu0 %v3892
    %5516 = vmatprep.subr.bf16.mxu0 %v3889
    %5517 = vmatpush1.bf16.msra.mxu0 %v3888
    %5518 = vmatprep.subr.bf16.mxu0 %v3885
    %5519 = vmatpush1.bf16.msra.mxu0 %v3884
    %5520 = vmatprep.subr.bf16.mxu0 %v3881
    %5521 = vmatpush1.bf16.msra.mxu0 %v3880
    %5522 = vmatprep.subr.bf16.mxu0 %v3877
    %5523 = vmatpush1.bf16.msra.mxu0 %v3876
    %5524 = vmatprep.subr.bf16.mxu0 %v3873
    %5525 = vmatpush1.bf16.msra.mxu0 %v3872
    %5526 = vmatprep.subr.bf16.mxu0 %v3869
    %5527 = vmatpush1.bf16.msra.mxu0 %v3868
    %5528 = vmatprep.subr.bf16.mxu0 %v3865
    %5529 = vmatpush1.bf16.msra.mxu0 %v3864
    %5530 = vmatprep.subr.bf16.mxu0 %v3925
    %5531 = vmatpush2.bf16.msra.mxu0 %v3924
    %5532 = vmatprep.subr.bf16.mxu0 %v3921
    %5533 = vmatpush2.bf16.msra.mxu0 %v3920
    %5534 = vmatprep.subr.bf16.mxu0 %v3917
    %5535 = vmatpush2.bf16.msra.mxu0 %v3916
    %5536 = vmatprep.subr.bf16.mxu0 %v3913
    %5537 = vmatpush2.bf16.msra.mxu0 %v3912
    %5538 = vmatprep.subr.bf16.mxu0 %v3909
    %5539 = vmatpush2.bf16.msra.mxu0 %v3908
    %5540 = vmatprep.subr.bf16.mxu0 %v3905
    %5541 = vmatpush2.bf16.msra.mxu0 %v3904
    %5542 = vmatprep.subr.bf16.mxu0 %v3901
    %5543 = vmatpush2.bf16.msra.mxu0 %v3900
    %5544 = vmatprep.subr.bf16.mxu0 %v3897
    %5545 = vmatpush2.bf16.msra.mxu0 %v3896
    %5546 = vmatprep.mubr.bf16.mxu0 %v5470
    %5547 = vmatmul.mubr.bf16.gmra.mxu0 %v5469
    %v5548 = vpop.f32.mrf.mxu0
    %v5549 = vadd.f32 %v4002, %v5548
    %v5550 = vpop.f32.mrf.mxu0
    %v5551 = vadd.f32 %v4006, %v5550
    %v5552 = vpop.f32.mrf.mxu0
    %v5553 = vpop.f32.mrf.mxu0
    %5554 = vdwg.mxu0
    %v5555 = vxor.u32 %v5508, 2147483648
    %v5556 = vmul.f32 %v5555, 1.442695
    %v5557 = vpow.pop %v5556
    %v5558 = vadd.f32 %v5557, 1.0
    %v5559 = vrcp.pop %v5558
    %v5560 = vmul.f32 1.0, %v5559
    %v5561 = vxor.u32 %v5510, 2147483648
    %v5562 = vmul.f32 %v5561, 1.442695
    %v5563 = vpow.pop %v5562
    %v5564 = vadd.f32 %v5563, 1.0
    %v5565 = vrcp.pop %v5564
    %v5566 = vmul.f32 1.0, %v5565
    %v5567 = vtanh.pop %v5549
    %v5568 = vxor.u32 %v5551, 2147483648
    %v5569 = vmul.f32 %v5568, 1.442695
    %v5570 = vpow.pop %v5569
    %v5571 = vadd.f32 %v5570, 1.0
    %v5572 = vrcp.pop %v5571
    %v5573 = vmul.f32 1.0, %v5572
    %v5574 = vmul.f32 %v5566, %v5334
    %v5575 = vmul.f32 %v5560, %v5567
    %v5576 = vadd.f32 %v5574, %v5575
    %v5577 = vtanh.pop %v5576
    %v5578 = vmul.f32 %v5573, %v5577
    %5579 = vmatprep.subr.bf16.mxu0 %v3458
    %5580 = vmatpush1.bf16.msra.mxu0 %v3457
    %5581 = vmatprep.subr.bf16.mxu0 %v3454
    %5582 = vmatpush1.bf16.msra.mxu0 %v3453
    %5583 = vmatprep.subr.bf16.mxu0 %v3450
    %5584 = vmatpush1.bf16.msra.mxu0 %v3449
    %5585 = vmatprep.subr.bf16.mxu0 %v3446
    %5586 = vmatpush1.bf16.msra.mxu0 %v3445
    %5587 = vmatprep.subr.bf16.mxu0 %v3442
    %5588 = vmatpush1.bf16.msra.mxu0 %v3441
    %5589 = vmatprep.subr.bf16.mxu0 %v3438
    %5590 = vmatpush1.bf16.msra.mxu0 %v3437
    %5591 = vmatprep.subr.bf16.mxu0 %v3434
    %5592 = vmatpush1.bf16.msra.mxu0 %v3433
    %5593 = vmatprep.subr.bf16.mxu0 %v3430
    %5594 = vmatpush1.bf16.msra.mxu0 %v3429
    %5595 = vmatprep.subr.bf16.mxu0 0
    %5596 = vmatpush2.bf16.msra.mxu0 0
    %5597 = vmatprep.subr.bf16.mxu0 0
    %5598 = vmatpush2.bf16.msra.mxu0 0
    %5599 = vmatprep.subr.bf16.mxu0 0
    %5600 = vmatpush2.bf16.msra.mxu0 0
    %5601 = vmatprep.subr.bf16.mxu0 0
    %5602 = vmatpush2.bf16.msra.mxu0 0
    %5603 = vmatprep.subr.bf16.mxu0 0
    %5604 = vmatpush2.bf16.msra.mxu0 0
    %5605 = vmatprep.subr.bf16.mxu0 0
    %5606 = vmatpush2.bf16.msra.mxu0 0
    %5607 = vmatprep.subr.bf16.mxu0 0
    %5608 = vmatpush2.bf16.msra.mxu0 0
    %5609 = vmatprep.subr.bf16.mxu0 0
    %5610 = vmatpush2.bf16.msra.mxu0 0
    %5611 = vmatprep.mubr.bf16.mxu0 0
    %5612 = vmatmul.mubr.bf16.gmra.mxu0 %v5469
    %v5613 = vpop.f32.mrf.mxu0
    %v5614 = vadd.f32 0.0, %v5613
    %v5615 = vpop.f32.mrf.mxu0
    %v5616 = vadd.f32 0.0, %v5615
    %v5617 = vpop.f32.mrf.mxu0
    %v5618 = vpop.f32.mrf.mxu0
    %5619 = vdwg.mxu0
    %5620 = vmatprep.subr.bf16.mxu0 %v3460
    %5621 = vmatpush1.bf16.msra.mxu0 %v3459
    %5622 = vmatprep.subr.bf16.mxu0 %v3456
    %5623 = vmatpush1.bf16.msra.mxu0 %v3455
    %5624 = vmatprep.subr.bf16.mxu0 %v3452
    %5625 = vmatpush1.bf16.msra.mxu0 %v3451
    %5626 = vmatprep.subr.bf16.mxu0 %v3448
    %5627 = vmatpush1.bf16.msra.mxu0 %v3447
    %5628 = vmatprep.subr.bf16.mxu0 %v3444
    %5629 = vmatpush1.bf16.msra.mxu0 %v3443
    %5630 = vmatprep.subr.bf16.mxu0 %v3440
    %5631 = vmatpush1.bf16.msra.mxu0 %v3439
    %5632 = vmatprep.subr.bf16.mxu0 %v3436
    %5633 = vmatpush1.bf16.msra.mxu0 %v3435
    %5634 = vmatprep.subr.bf16.mxu0 %v3432
    %5635 = vmatpush1.bf16.msra.mxu0 %v3431
    %5636 = vmatprep.subr.bf16.mxu0 0
    %5637 = vmatpush2.bf16.msra.mxu0 0
    %5638 = vmatprep.subr.bf16.mxu0 0
    %5639 = vmatpush2.bf16.msra.mxu0 0
    %5640 = vmatprep.subr.bf16.mxu0 0
    %5641 = vmatpush2.bf16.msra.mxu0 0
    %5642 = vmatprep.subr.bf16.mxu0 0
    %5643 = vmatpush2.bf16.msra.mxu0 0
    %5644 = vmatprep.subr.bf16.mxu0 0
    %5645 = vmatpush2.bf16.msra.mxu0 0
    %5646 = vmatprep.subr.bf16.mxu0 0
    %5647 = vmatpush2.bf16.msra.mxu0 0
    %5648 = vmatprep.subr.bf16.mxu0 0
    %5649 = vmatpush2.bf16.msra.mxu0 0
    %5650 = vmatprep.subr.bf16.mxu0 0
    %5651 = vmatpush2.bf16.msra.mxu0 0
    %5652 = vmatprep.mubr.bf16.mxu0 0
    %5653 = vmatmul.mubr.bf16.gmra.mxu0 %v5469
    %v5654 = vpop.f32.mrf.mxu0
    %v5655 = vadd.f32 0.0, %v5654
    %v5656 = vpop.f32.mrf.mxu0
    %v5657 = vadd.f32 0.0, %v5656
    %v5658 = vpop.f32.mrf.mxu0
    %v5659 = vpop.f32.mrf.mxu0
    %5660 = vdwg.mxu0
    %v5665 = vrot.slane %v5614, 1
    %v5666 = vrot.slane %v5616, 1
    %v5667 = vrot.slane %v5655, 1
    %v5668 = vrot.slane %v5657, 1
    %v5673 = vadd.f32 %v3254, %v5665
    %v5674 = vadd.f32 %v3256, %v5666
    %v5675 = vadd.f32 %v3295, %v5667
    %v5676 = vadd.f32 %v3297, %v5668
    %v5677 = vxor.u32 %v5673, 2147483648
    %v5678 = vmul.f32 %v5677, 1.442695
    %v5679 = vpow.pop %v5678
    %v5680 = vadd.f32 %v5679, 1.0
    %v5681 = vrcp.pop %v5680
    %v5682 = vmul.f32 1.0, %v5681
    %v5683 = vxor.u32 %v5674, 2147483648
    %v5684 = vmul.f32 %v5683, 1.442695
    %v5685 = vpow.pop %v5684
    %v5686 = vadd.f32 %v5685, 1.0
    %v5687 = vrcp.pop %v5686
    %v5688 = vmul.f32 1.0, %v5687
    %v5689 = vtanh.pop %v5675
    %v5690 = vxor.u32 %v5676, 2147483648
    %v5691 = vmul.f32 %v5690, 1.442695
    %v5692 = vpow.pop %v5691
    %v5693 = vadd.f32 %v5692, 1.0
    %v5694 = vrcp.pop %v5693
    %v5695 = vmul.f32 1.0, %v5694
    %v5697 = vrot.slane %v5459, 7
    %v5699 = vmul.f32 %v5688, %v5697
    %v5700 = vmul.f32 %v5682, %v5689
    %v5701 = vadd.f32 %v5699, %v5700
    %v5702 = vtanh.pop %v5701
    %v5703 = vmul.f32 %v5695, %v5702
    %v5705 = vrot.slane %v5578, 1
    %v5707 = vpack.c.bf16 %v5703, %v5703
    %v5708 = vpack.c.bf16 %v5705, %v5705
    %v5710 = vshrl.u32 %v5707, 16
    %v5712 = vrot.slane %v5710, 3
    %v5714 = vshrl.u32 %v5708, 16
    %v5716 = vrot.slane %v5714, 3
    %5719 = vmatprep.subr.bf16.mxu0 %v3891
    %5720 = vmatpush1.bf16.msra.mxu0 %v3890
    %5721 = vmatprep.subr.bf16.mxu0 %v3887
    %5722 = vmatpush1.bf16.msra.mxu0 %v3886
    %5723 = vmatprep.subr.bf16.mxu0 %v3883
    %5724 = vmatpush1.bf16.msra.mxu0 %v3882
    %5725 = vmatprep.subr.bf16.mxu0 %v3879
    %5726 = vmatpush1.bf16.msra.mxu0 %v3878
    %5727 = vmatprep.subr.bf16.mxu0 %v3875
    %5728 = vmatpush1.bf16.msra.mxu0 %v3874
    %5729 = vmatprep.subr.bf16.mxu0 %v3871
    %5730 = vmatpush1.bf16.msra.mxu0 %v3870
    %5731 = vmatprep.subr.bf16.mxu0 %v3867
    %5732 = vmatpush1.bf16.msra.mxu0 %v3866
    %5733 = vmatprep.subr.bf16.mxu0 %v3863
    %5734 = vmatpush1.bf16.msra.mxu0 %v3862
    %5735 = vmatprep.subr.bf16.mxu0 %v3923
    %5736 = vmatpush2.bf16.msra.mxu0 %v3922
    %5737 = vmatprep.subr.bf16.mxu0 %v3919
    %5738 = vmatpush2.bf16.msra.mxu0 %v3918
    %5739 = vmatprep.subr.bf16.mxu0 %v3915
    %5740 = vmatpush2.bf16.msra.mxu0 %v3914
    %5741 = vmatprep.subr.bf16.mxu0 %v3911
    %5742 = vmatpush2.bf16.msra.mxu0 %v3910
    %5743 = vmatprep.subr.bf16.mxu0 %v3907
    %5744 = vmatpush2.bf16.msra.mxu0 %v3906
    %5745 = vmatprep.subr.bf16.mxu0 %v3903
    %5746 = vmatpush2.bf16.msra.mxu0 %v3902
    %5747 = vmatprep.subr.bf16.mxu0 %v3899
    %5748 = vmatpush2.bf16.msra.mxu0 %v3898
    %5749 = vmatprep.subr.bf16.mxu0 %v3895
    %5750 = vmatpush2.bf16.msra.mxu0 %v3894
    %5751 = vmatprep.mubr.bf16.mxu0 %v5716
    %5752 = vmatmul.mubr.bf16.gmra.mxu0 %v5712
    %v5753 = vpop.f32.mrf.mxu0
    %v5754 = vadd.f32 %v3994, %v5753
    %v5755 = vpop.f32.mrf.mxu0
    %v5756 = vadd.f32 %v3998, %v5755
    %v5757 = vpop.f32.mrf.mxu0
    %v5758 = vpop.f32.mrf.mxu0
    %5759 = vdwg.mxu0
    %5760 = vmatprep.subr.bf16.mxu0 %v3893
    %5761 = vmatpush1.bf16.msra.mxu0 %v3892
    %5762 = vmatprep.subr.bf16.mxu0 %v3889
    %5763 = vmatpush1.bf16.msra.mxu0 %v3888
    %5764 = vmatprep.subr.bf16.mxu0 %v3885
    %5765 = vmatpush1.bf16.msra.mxu0 %v3884
    %5766 = vmatprep.subr.bf16.mxu0 %v3881
    %5767 = vmatpush1.bf16.msra.mxu0 %v3880
    %5768 = vmatprep.subr.bf16.mxu0 %v3877
    %5769 = vmatpush1.bf16.msra.mxu0 %v3876
    %5770 = vmatprep.subr.bf16.mxu0 %v3873
    %5771 = vmatpush1.bf16.msra.mxu0 %v3872
    %5772 = vmatprep.subr.bf16.mxu0 %v3869
    %5773 = vmatpush1.bf16.msra.mxu0 %v3868
    %5774 = vmatprep.subr.bf16.mxu0 %v3865
    %5775 = vmatpush1.bf16.msra.mxu0 %v3864
    %5776 = vmatprep.subr.bf16.mxu0 %v3925
    %5777 = vmatpush2.bf16.msra.mxu0 %v3924
    %5778 = vmatprep.subr.bf16.mxu0 %v3921
    %5779 = vmatpush2.bf16.msra.mxu0 %v3920
    %5780 = vmatprep.subr.bf16.mxu0 %v3917
    %5781 = vmatpush2.bf16.msra.mxu0 %v3916
    %5782 = vmatprep.subr.bf16.mxu0 %v3913
    %5783 = vmatpush2.bf16.msra.mxu0 %v3912
    %5784 = vmatprep.subr.bf16.mxu0 %v3909
    %5785 = vmatpush2.bf16.msra.mxu0 %v3908
    %5786 = vmatprep.subr.bf16.mxu0 %v3905
    %5787 = vmatpush2.bf16.msra.mxu0 %v3904
    %5788 = vmatprep.subr.bf16.mxu0 %v3901
    %5789 = vmatpush2.bf16.msra.mxu0 %v3900
    %5790 = vmatprep.subr.bf16.mxu0 %v3897
    %5791 = vmatpush2.bf16.msra.mxu0 %v3896
    %5792 = vmatprep.mubr.bf16.mxu0 %v5716
    %5793 = vmatmul.mubr.bf16.gmra.mxu0 %v5712
    %v5794 = vpop.f32.mrf.mxu0
    %v5795 = vadd.f32 %v4002, %v5794
    %v5796 = vpop.f32.mrf.mxu0
    %v5797 = vadd.f32 %v4006, %v5796
    %v5798 = vpop.f32.mrf.mxu0
    %v5799 = vpop.f32.mrf.mxu0
    %5800 = vdwg.mxu0
    %v5801 = vxor.u32 %v5754, 2147483648
    %v5802 = vmul.f32 %v5801, 1.442695
    %v5803 = vpow.pop %v5802
    %v5804 = vadd.f32 %v5803, 1.0
    %v5805 = vrcp.pop %v5804
    %v5806 = vmul.f32 1.0, %v5805
    %v5807 = vxor.u32 %v5756, 2147483648
    %v5808 = vmul.f32 %v5807, 1.442695
    %v5809 = vpow.pop %v5808
    %v5810 = vadd.f32 %v5809, 1.0
    %v5811 = vrcp.pop %v5810
    %v5812 = vmul.f32 1.0, %v5811
    %v5813 = vtanh.pop %v5795
    %v5814 = vxor.u32 %v5797, 2147483648
    %v5815 = vmul.f32 %v5814, 1.442695
    %v5816 = vpow.pop %v5815
    %v5817 = vadd.f32 %v5816, 1.0
    %v5818 = vrcp.pop %v5817
    %v5819 = vmul.f32 1.0, %v5818
    %v5820 = vmul.f32 %v5812, %v5576
    %v5821 = vmul.f32 %v5806, %v5813
    %v5822 = vadd.f32 %v5820, %v5821
    %v5823 = vtanh.pop %v5822
    %v5824 = vmul.f32 %v5819, %v5823
    %v5826 = vrot.slane %v5824, 7
    %vm5828 = vcmask 1040384
    %v5829 = vsel %vm5828, %v5578, %v5826
    %v5830 = vpack.c.bf16 %v5829, %v5829
    %v5831 = vld [vmem:[%s8] sm:$0xf]
    %v5832 = vld [vmem:[%s8 + $0x4] sm:$0xf]
    %v5833 = vld [vmem:[%s8 + $0x8] sm:$0xf]
    %v5834 = vld [vmem:[%s8 + $0xc] sm:$0xf]
    %v5835 = vld [vmem:[%s8 + $0x10] sm:$0xf]
    %v5836 = vld [vmem:[%s8 + $0x14] sm:$0xf]
    %v5837 = vld [vmem:[%s8 + $0x18] sm:$0xf]
    %v5838 = vld [vmem:[%s8 + $0x1c] sm:$0xf]
    %v5839 = vld [vmem:[%s8 + $0x20] sm:$0xf]
    %v5840 = vld [vmem:[%s8 + $0x24] sm:$0xf]
    %v5841 = vld [vmem:[%s8 + $0x28] sm:$0xf]
    %v5842 = vld [vmem:[%s8 + $0x2c] sm:$0xf]
    %v5843 = vld [vmem:[%s8 + $0x30] sm:$0xf]
    %v5844 = vld [vmem:[%s8 + $0x34] sm:$0xf]
    %v5845 = vld [vmem:[%s8 + $0x38] sm:$0xf]
    %v5846 = vld [vmem:[%s8 + $0x3c] sm:$0xf]
    %v5847 = vld [vmem:[%s9] sm:$0x1]
    %v5849 = vlaneseq
    %v5850 = vshrl.u32 %v5849, 7
    %v5851 = vsub.s32 0, %v5850
    %v5852 = vrot.slane %v5847, %v5851
    %v5870 = vunpack.c.l.b16 %v5831
    %v5871 = vunpack.c.l.b16 %v5832
    %v5872 = vunpack.c.l.b16 %v5833
    %v5873 = vunpack.c.l.b16 %v5834
    %v5874 = vunpack.c.l.b16 %v5835
    %v5875 = vunpack.c.l.b16 %v5836
    %v5876 = vunpack.c.l.b16 %v5837
    %v5877 = vunpack.c.l.b16 %v5838
    %v5878 = vunpack.c.l.b16 %v5839
    %v5879 = vunpack.c.l.b16 %v5840
    %v5880 = vunpack.c.l.b16 %v5841
    %v5881 = vunpack.c.l.b16 %v5842
    %v5882 = vunpack.c.l.b16 %v5843
    %v5883 = vunpack.c.l.b16 %v5844
    %v5884 = vunpack.c.l.b16 %v5845
    %v5885 = vunpack.c.l.b16 %v5846
    %v5886 = vpack.c.b16 %v5871, %v5870
    %v5887 = vpack.c.b16 %v5873, %v5872
    %v5888 = vpack.c.b16 %v5875, %v5874
    %v5889 = vpack.c.b16 %v5877, %v5876
    %v5890 = vpack.c.b16 %v5879, %v5878
    %v5891 = vpack.c.b16 %v5881, %v5880
    %v5892 = vpack.c.b16 %v5883, %v5882
    %v5893 = vpack.c.b16 %v5885, %v5884
    %5902 = vmatprep.subr.bf16.mxu0 0
    %5903 = vmatpush1.bf16.msra.mxu0 %v5893
    %5904 = vmatprep.subr.bf16.mxu0 0
    %5905 = vmatpush1.bf16.msra.mxu0 %v5892
    %5906 = vmatprep.subr.bf16.mxu0 0
    %5907 = vmatpush1.bf16.msra.mxu0 %v5891
    %5908 = vmatprep.subr.bf16.mxu0 0
    %5909 = vmatpush1.bf16.msra.mxu0 %v5890
    %5910 = vmatprep.subr.bf16.mxu0 0
    %5911 = vmatpush1.bf16.msra.mxu0 %v5889
    %5912 = vmatprep.subr.bf16.mxu0 0
    %5913 = vmatpush1.bf16.msra.mxu0 %v5888
    %5914 = vmatprep.subr.bf16.mxu0 0
    %5915 = vmatpush1.bf16.msra.mxu0 %v5887
    %5916 = vmatprep.subr.bf16.mxu0 0
    %5917 = vmatpush1.bf16.msra.mxu0 %v5886
    %5918 = vmatprep.subr.bf16.mxu0 0
    %5919 = vmatpush2.bf16.msra.mxu0 0
    %5920 = vmatprep.subr.bf16.mxu0 0
    %5921 = vmatpush2.bf16.msra.mxu0 0
    %5922 = vmatprep.subr.bf16.mxu0 0
    %5923 = vmatpush2.bf16.msra.mxu0 0
    %5924 = vmatprep.subr.bf16.mxu0 0
    %5925 = vmatpush2.bf16.msra.mxu0 0
    %5926 = vmatprep.subr.bf16.mxu0 0
    %5927 = vmatpush2.bf16.msra.mxu0 0
    %5928 = vmatprep.subr.bf16.mxu0 0
    %5929 = vmatpush2.bf16.msra.mxu0 0
    %5930 = vmatprep.subr.bf16.mxu0 0
    %5931 = vmatpush2.bf16.msra.mxu0 0
    %5932 = vmatprep.subr.bf16.mxu0 0
    %5933 = vmatpush2.bf16.msra.mxu0 0
    %5934 = vmatprep.mubr.bf16.mxu0 0
    %5935 = vmatmul.mubr.bf16.gmra.mxu0 %v5830
    %v5936 = vpop.f32.mrf.mxu0
    %v5937 = vadd.f32 %v5852, %v5936
    %v5938 = vpop.f32.mrf.mxu0
    %v5939 = vpop.f32.mrf.mxu0
    %v5940 = vpop.f32.mrf.mxu0
    %5941 = vdwg.mxu0
    %5942 = vst [vmem:[#allocation2] sm:$0x3] %v5937
    // Predicated region
    $region42: #{har_forward.1} parent=1 // pred_check
      _
    $region43: #{har_forward.1} parent=1 // pred_check_branch
      %5944 = sbr.rel (0) target = $region45
    $region44: #{har_forward.1} parent=1 // pred_region
      %s5946 = ssub.s32 32, 32
      %5947 = vsyncadd [#allocation3], %s5946
      %s5949 = sshll.u32 [#allocation2], 4
      %s5950 = int_to_ptr.vmem [resolvable:$true] %s5949
      %5952 = dma.vmem_to_hbm [thread:$0]  %s5950, 32, %s10, [#allocation3]
    $region45: #{har_forward.1} parent=1 // pred_fallthru
      _
    // Predicated region
    $region46: #{har_forward.1} parent=1 // pred_check
      _
    $region47: #{har_forward.1} parent=1 // pred_check_branch
      %5954 = sbr.rel (0) target = $region49
    $region48: #{har_forward.1} parent=1 // pred_region
      %5955 = dma.done [#allocation3], 32
    $region49: #{har_forward.1} parent=1 // pred_fallthru
      _
    %5956 = vsyncpa [#allocation3], 1

</llo_original>
